<compile_context>
chip_gen: v7x
topology: tpu7x:2x2x1
jax: 0.10.0
libtpu: 0.0.40
codegen_flags: <defaults>
</compile_context>

<pallas_src>
from functools import partial

import jax
import jax.numpy as jnp
from jax import lax
from jax.experimental import pallas as pl
from jax.experimental.pallas import tpu as pltpu


def _pick_band_rows(H, W, max_band_lanes=4096):
    """Rows per band: divides H, lane-aligned (TH*W % 128 == 0), modest VMEM.

    Falls back to the full image height (a full-extent block is always a
    legal BlockSpec) when no aligned proper divisor exists.
    """
    cands = [th for th in range(1, H)
             if H % th == 0 and (th * W) % 128 == 0 and th * W <= max_band_lanes]
    return max(cands) if cands else H


def upscale_band_kernel(x_ref, halo_ref, w_ref, o_ref, *, neg_slope):
    # x_ref   : (1, Cin, L)        one row band (channel-planar), L = TH*W lanes
    # halo_ref: (1, 1, 2*Cin, W)   row above / row below the band (image borders = 0)
    # w_ref   : (9, Cout, Cin)     conv taps, tap index t = dy*3 + dx
    # o_ref   : (1, Cout, L)       conv + LeakyReLU output, transposed (lane-dense)
    cin = x_ref.shape[1]
    L = x_ref.shape[2]
    cout = o_ref.shape[1]
    W = halo_ref.shape[-1]

    band = x_ref[0]                    # (Cin, L), lanes = TH*W (multiple of 128)
    halo = halo_ref[0, 0]              # (2*Cin, W)
    top = halo[:cin, :]                # row hl = -1 (zeros at the image top)
    bot = halo[cin:, :]                # row hl = TH (zeros at the image bottom)

    # dy-shifted row sets, built once (lane concat with the 1-row halo).
    rows = (
        jnp.concatenate([top, band[:, :L - W]], axis=1),   # dy = 0 -> row hl-1
        band,                                              # dy = 1 -> row hl
        jnp.concatenate([band[:, W:], bot], axis=1),       # dy = 2 -> row hl+1
    )

    # Column-border masks for the dx lane shifts (left/right zero padding).
    col = lax.broadcasted_iota(jnp.int32, (1, L), 1) % W
    not_first = col > 0          # valid source column for dx = 0 (w-1 >= 0)
    not_last = col < (W - 1)     # valid source column for dx = 2 (w+1 <  W)

    acc = jnp.zeros((cout, L), jnp.float32)
    for dy in range(3):
        r = rows[dy]
        for dx in range(3):
            if dx == 0:
                a = jnp.where(not_first, jnp.roll(r, 1, axis=1), 0.0)
            elif dx == 2:
                a = jnp.where(not_last, jnp.roll(r, -1, axis=1), 0.0)
            else:
                a = r
            # Transposed matmul: (Cout, Cin) @ (Cin, L) -> (Cout, L); lanes of
            # both the RHS and the result carry the spatial dim (dense stores).
            # HIGHEST keeps the 1e-4 f32 check exact; switch to HIGH / bf16 on
            # v5e at production sizes if the accuracy budget allows.
            acc = acc + jnp.dot(w_ref[dy * 3 + dx], a,
                                preferred_element_type=jnp.float32,
                                precision=lax.Precision.HIGHEST)

    # Fused LeakyReLU (commutes with the pixel-shuffle permutation).
    y = jnp.where(acc >= 0, acc, neg_slope * acc)
    o_ref[0, :, :] = y.astype(o_ref.dtype)


@partial(jax.jit, static_argnums=(2, 3))
def upscale_block(x_nchw, weight_oihw, neg_slope=0.2, upscale=2):
    """UpscaleBlock.forward: conv3x3(pad=1, no bias) -> PixelShuffle(2) -> LeakyReLU."""
    N, Cin, H, W = x_nchw.shape
    Cout = weight_oihw.shape[0]
    r = upscale
    C_ps = Cout // (r * r)

    TH = _pick_band_rows(H, W)
    nb = H // TH
    L = TH * W

    # Channel-planar, lane-dense input view (metadata-only reshape, no transpose).
    x3 = x_nchw.reshape(N, Cin, H * W)

    # Halo side-array: the row above / below each band (2 rows per band);
    # true image borders are zeroed here so the kernel uses them unconditionally.
    rows_idx = jnp.arange(nb) * TH
    tidx = jnp.clip(rows_idx - 1, 0, H - 1)
    bidx = jnp.clip(rows_idx + TH, 0, H - 1)
    top = jnp.transpose(x_nchw[:, :, tidx, :], (0, 2, 1, 3))      # (N, nb, Cin, W)
    bot = jnp.transpose(x_nchw[:, :, bidx, :], (0, 2, 1, 3))
    top = jnp.where((rows_idx > 0)[None, :, None, None], top, 0.0)
    bot = jnp.where((rows_idx + TH < H)[None, :, None, None], bot, 0.0)
    halo = jnp.concatenate([top, bot], axis=2)                    # (N, nb, 2*Cin, W)

    # OIHW -> (9, Cout, Cin), tap index t = dy*3 + dx.
    w3 = jnp.transpose(weight_oihw, (2, 3, 0, 1)).reshape(9, Cout, Cin)
    w3 = w3.astype(x_nchw.dtype)

    kernel = partial(upscale_band_kernel, neg_slope=neg_slope)

    conv_t = pl.pallas_call(
        kernel,
        out_shape=jax.ShapeDtypeStruct((N, Cout, H * W), x_nchw.dtype),
        grid_spec=pltpu.PrefetchScalarGridSpec(
            num_scalar_prefetch=0,
            grid=(N, nb),
            in_specs=[
                pl.BlockSpec((1, Cin, L), lambda n, b: (n, 0, b)),
                pl.BlockSpec((1, 1, 2 * Cin, W), lambda n, b: (n, b, 0, 0)),
                pl.BlockSpec((9, Cout, Cin), lambda n, b: (0, 0, 0)),
            ],
            out_specs=pl.BlockSpec((1, Cout, L), lambda n, b: (n, 0, b)),
        ),
        compiler_params=pltpu.CompilerParams(
            dimension_semantics=("parallel", "parallel"),   # v7x: shard across 2 TCs
            vmem_limit_bytes=32 * 1024 * 1024,              # explicit, safe on v5e/v6e/v7x
        ),
    )(x3, halo, w3)

    # PixelShuffle(r): a real HBM relayout, done by XLA on the lane-dense
    # conv output.  Reshapes are metadata; only the transpose moves data.
    y = conv_t.reshape(N, C_ps, r, r, H, W)
    y = jnp.transpose(y, (0, 1, 4, 2, 5, 3))                      # N, C, H, r, W, r
    return y.reshape(N, C_ps, H * r, W * r)


def reference_upscale_block(x_nchw, weight_oihw, neg_slope=0.2, upscale=2):
    """Pure-JAX reference matching PyTorch semantics (NCHW)."""
    N, Cin, H, W = x_nchw.shape
    Cout = weight_oihw.shape[0]
    r = upscale
    C_ps = Cout // (r * r)
    y = lax.conv_general_dilated(
        x_nchw, weight_oihw, window_strides=(1, 1),
        padding=((1, 1), (1, 1)),
        dimension_numbers=("NCHW", "OIHW", "NCHW"),
        precision=lax.Precision.HIGHEST,
    )
    y = y.reshape(N, C_ps, r, r, H, W)
    y = jnp.transpose(y, (0, 1, 4, 2, 5, 3))                      # N, C, H, r, W, r
    y = y.reshape(N, C_ps, H * r, W * r)
    return jnp.where(y >= 0, y, neg_slope * y)


if __name__ == "__main__":
    # Small shapes consistent with the module: in_channels=8, channels=32
    # (channels divisible by 4 for PixelShuffle(2)); H picks TH=8 -> 2 bands,
    # so the inter-band halo path is exercised.
    N, Cin, H, W = 2, 8, 16, 16
    Cout = 32

    key = jax.random.PRNGKey(0)
    kx, kw = jax.random.split(key)
    x = jax.random.normal(kx, (N, Cin, H, W), dtype=jnp.float32)
    weight = 0.1 * jax.random.normal(kw, (Cout, Cin, 3, 3), dtype=jnp.float32)

    out = jax.block_until_ready(upscale_block(x, weight))
    ref = jax.block_until_ready(reference_upscale_block(x, weight))

    assert out.shape == (N, Cout // 4, H * 2, W * 2), out.shape
    assert jnp.allclose(out, ref, atol=1e-4, rtol=1e-4), float(
        jnp.max(jnp.abs(out - ref)))

    print("KERNEL_OK")
</pallas_src>

<mosaic_0001>
module attributes {stable_mosaic.version = 11 : i64} {
  func.func @upscale_band_kernel(%arg0: i32, %arg1: i32, %arg2: memref<1x8x128xf32, #tpu.memory_space<vmem>>, %arg3: memref<1x1x16x16xf32, #tpu.memory_space<vmem>>, %arg4: memref<9x32x8xf32, #tpu.memory_space<vmem>>, %arg5: memref<1x32x128xf32, #tpu.memory_space<vmem>>) attributes {dimension_semantics = [#tpu.dimension_semantics<parallel>, #tpu.dimension_semantics<parallel>], iteration_bounds = array<i64: 2, 2>, scalar_prefetch = 0 : i64, scratch_operands = 0 : i64, tpu.core_type = #tpu.core_type<tc>, window_params = [{transform_indices = @transform_0, window_bounds = array<i64: 1, 8, 128>}, {transform_indices = @transform_1, window_bounds = array<i64: 1, 1, 16, 16>}, {pipeline_mode = #tpu.pipeline_mode<synchronous>, transform_indices = @transform_2, window_bounds = array<i64: 9, 32, 8>}, {transform_indices = @transform_3, window_bounds = array<i64: 1, 32, 128>}]} {
    %c0 = arith.constant 0 : index
    %c0_0 = arith.constant 0 : index
    %c0_1 = arith.constant 0 : index
    %0 = vector.load %arg2[%c0, %c0_0, %c0_1] : memref<1x8x128xf32, #tpu.memory_space<vmem>>, vector<1x8x128xf32>
    %1 = vector.shape_cast %0 : vector<1x8x128xf32> to vector<8x128xf32>
    %c0_2 = arith.constant 0 : index
    %c0_3 = arith.constant 0 : index
    %c0_4 = arith.constant 0 : index
    %c0_5 = arith.constant 0 : index
    %2 = vector.load %arg3[%c0_2, %c0_3, %c0_4, %c0_5] : memref<1x1x16x16xf32, #tpu.memory_space<vmem>>, vector<1x1x16x16xf32>
    %3 = vector.shape_cast %2 : vector<1x1x16x16xf32> to vector<16x16xf32>
    %4 = vector.extract_strided_slice %3 {offsets = [0, 0], sizes = [8, 16], strides = [1, 1]} : vector<16x16xf32> to vector<8x16xf32>
    %5 = vector.extract_strided_slice %3 {offsets = [8, 0], sizes = [8, 16], strides = [1, 1]} : vector<16x16xf32> to vector<8x16xf32>
    %6 = vector.extract_strided_slice %1 {offsets = [0, 0], sizes = [8, 112], strides = [1, 1]} : vector<8x128xf32> to vector<8x112xf32>
    %7 = tpu.concatenate %4, %6 in 1 : vector<8x16xf32>, vector<8x112xf32> -> vector<8x128xf32>
    %8 = vector.extract_strided_slice %1 {offsets = [0, 16], sizes = [8, 112], strides = [1, 1]} : vector<8x128xf32> to vector<8x112xf32>
    %9 = tpu.concatenate %8, %5 in 1 : vector<8x112xf32>, vector<8x16xf32> -> vector<8x128xf32>
    %10 = tpu.iota {dimensions = array<i32: 1>} : vector<1x128xi32>
    %c16_i32 = arith.constant 16 : i32
    %c0_i32 = arith.constant 0 : i32
    %11 = arith.cmpi eq, %c16_i32, %c0_i32 : i32
    %c1_i32 = arith.constant 1 : i32
    %12 = arith.select %11, %c1_i32, %c16_i32 : i32
    %13 = vector.broadcast %12 : i32 to vector<1x128xi32>
    %14 = arith.remsi %10, %13 : vector<1x128xi32>
    %c0_i32_6 = arith.constant 0 : i32
    %15 = vector.broadcast %c0_i32_6 : i32 to vector<1x128xi32>
    %16 = arith.cmpi ne, %14, %15 : vector<1x128xi32>
    %c0_i32_7 = arith.constant 0 : i32
    %17 = vector.broadcast %c0_i32_7 : i32 to vector<1x128xi32>
    %18 = arith.cmpi slt, %14, %17 : vector<1x128xi32>
    %c0_i32_8 = arith.constant 0 : i32
    %19 = arith.cmpi slt, %12, %c0_i32_8 : i32
    %20 = vector.broadcast %19 : i1 to vector<1x128xi1>
    %21 = vector.broadcast %20 : vector<1x128xi1> to vector<1x128xi1>
    %22 = arith.xori %18, %21 : vector<1x128xi1>
    %23 = arith.andi %22, %16 : vector<1x128xi1>
    %24 = vector.broadcast %12 : i32 to vector<1x128xi32>
    %25 = arith.addi %14, %24 : vector<1x128xi32>
    %26 = arith.select %23, %25, %14 : vector<1x128xi1>, vector<1x128xi32>
    %c0_i32_9 = arith.constant 0 : i32
    %27 = vector.broadcast %c0_i32_9 : i32 to vector<1x128xi32>
    %28 = arith.cmpi sgt, %26, %27 : vector<1x128xi32>
    %c15_i32 = arith.constant 15 : i32
    %29 = vector.broadcast %c15_i32 : i32 to vector<1x128xi32>
    %30 = arith.cmpi slt, %26, %29 : vector<1x128xi32>
    %cst = arith.constant 0.000000e+00 : f32
    %31 = vector.broadcast %cst : f32 to vector<32x128xf32>
    %32 = vector.extract_strided_slice %7 {offsets = [0, 127], sizes = [8, 1], strides = [1, 1]} : vector<8x128xf32> to vector<8x1xf32>
    %33 = vector.extract_strided_slice %7 {offsets = [0, 0], sizes = [8, 127], strides = [1, 1]} : vector<8x128xf32> to vector<8x127xf32>
    %34 = tpu.concatenate %32, %33 in 1 : vector<8x1xf32>, vector<8x127xf32> -> vector<8x128xf32>
    %cst_10 = arith.constant 0.000000e+00 : f32
    %35 = vector.shape_cast %28 : vector<1x128xi1> to vector<1x128xi1>
    %36 = vector.broadcast %35 : vector<1x128xi1> to vector<8x128xi1>
    %37 = vector.broadcast %cst_10 : f32 to vector<8x128xf32>
    %38 = arith.select %36, %34, %37 : vector<8x128xi1>, vector<8x128xf32>
    %c0_11 = arith.constant 0 : index
    %c0_12 = arith.constant 0 : index
    %c0_13 = arith.constant 0 : index
    %39 = vector.load %arg4[%c0_11, %c0_12, %c0_13] : memref<9x32x8xf32, #tpu.memory_space<vmem>>, vector<1x32x8xf32>
    %40 = vector.shape_cast %39 : vector<1x32x8xf32> to vector<32x8xf32>
    %cst_14 = arith.constant dense<0.000000e+00> : vector<32x128xf32>
    %41 = tpu.matmul %40, %38, %cst_14 {dimension_numbers = #tpu.dot_dimension_numbers<[1], [0], [0], [1], [0, 0, 1, 1], [], []>, precision = #tpu.contract_precision<fp32>} : vector<32x8xf32>, vector<8x128xf32>, vector<32x128xf32> -> vector<32x128xf32>
    %42 = arith.addf %31, %41 : vector<32x128xf32>
    %c1 = arith.constant 1 : index
    %c0_15 = arith.constant 0 : index
    %c0_16 = arith.constant 0 : index
    %43 = vector.load %arg4[%c1, %c0_15, %c0_16] : memref<9x32x8xf32, #tpu.memory_space<vmem>>, vector<1x32x8xf32>
    %44 = vector.shape_cast %43 : vector<1x32x8xf32> to vector<32x8xf32>
    %cst_17 = arith.constant dense<0.000000e+00> : vector<32x128xf32>
    %45 = tpu.matmul %44, %7, %cst_17 {dimension_numbers = #tpu.dot_dimension_numbers<[1], [0], [0], [1], [0, 0, 1, 1], [], []>, precision = #tpu.contract_precision<fp32>} : vector<32x8xf32>, vector<8x128xf32>, vector<32x128xf32> -> vector<32x128xf32>
    %46 = arith.addf %42, %45 : vector<32x128xf32>
    %47 = vector.extract_strided_slice %7 {offsets = [0, 1], sizes = [8, 127], strides = [1, 1]} : vector<8x128xf32> to vector<8x127xf32>
    %48 = vector.extract_strided_slice %7 {offsets = [0, 0], sizes = [8, 1], strides = [1, 1]} : vector<8x128xf32> to vector<8x1xf32>
    %49 = tpu.concatenate %47, %48 in 1 : vector<8x127xf32>, vector<8x1xf32> -> vector<8x128xf32>
    %cst_18 = arith.constant 0.000000e+00 : f32
    %50 = vector.shape_cast %30 : vector<1x128xi1> to vector<1x128xi1>
    %51 = vector.broadcast %50 : vector<1x128xi1> to vector<8x128xi1>
    %52 = vector.broadcast %cst_18 : f32 to vector<8x128xf32>
    %53 = arith.select %51, %49, %52 : vector<8x128xi1>, vector<8x128xf32>
    %c2 = arith.constant 2 : index
    %c0_19 = arith.constant 0 : index
    %c0_20 = arith.constant 0 : index
    %54 = vector.load %arg4[%c2, %c0_19, %c0_20] : memref<9x32x8xf32, #tpu.memory_space<vmem>>, vector<1x32x8xf32>
    %55 = vector.shape_cast %54 : vector<1x32x8xf32> to vector<32x8xf32>
    %cst_21 = arith.constant dense<0.000000e+00> : vector<32x128xf32>
    %56 = tpu.matmul %55, %53, %cst_21 {dimension_numbers = #tpu.dot_dimension_numbers<[1], [0], [0], [1], [0, 0, 1, 1], [], []>, precision = #tpu.contract_precision<fp32>} : vector<32x8xf32>, vector<8x128xf32>, vector<32x128xf32> -> vector<32x128xf32>
    %57 = arith.addf %46, %56 : vector<32x128xf32>
    %58 = vector.extract_strided_slice %1 {offsets = [0, 127], sizes = [8, 1], strides = [1, 1]} : vector<8x128xf32> to vector<8x1xf32>
    %59 = vector.extract_strided_slice %1 {offsets = [0, 0], sizes = [8, 127], strides = [1, 1]} : vector<8x128xf32> to vector<8x127xf32>
    %60 = tpu.concatenate %58, %59 in 1 : vector<8x1xf32>, vector<8x127xf32> -> vector<8x128xf32>
    %cst_22 = arith.constant 0.000000e+00 : f32
    %61 = vector.shape_cast %28 : vector<1x128xi1> to vector<1x128xi1>
    %62 = vector.broadcast %61 : vector<1x128xi1> to vector<8x128xi1>
    %63 = vector.broadcast %cst_22 : f32 to vector<8x128xf32>
    %64 = arith.select %62, %60, %63 : vector<8x128xi1>, vector<8x128xf32>
    %c3 = arith.constant 3 : index
    %c0_23 = arith.constant 0 : index
    %c0_24 = arith.constant 0 : index
    %65 = vector.load %arg4[%c3, %c0_23, %c0_24] : memref<9x32x8xf32, #tpu.memory_space<vmem>>, vector<1x32x8xf32>
    %66 = vector.shape_cast %65 : vector<1x32x8xf32> to vector<32x8xf32>
    %cst_25 = arith.constant dense<0.000000e+00> : vector<32x128xf32>
    %67 = tpu.matmul %66, %64, %cst_25 {dimension_numbers = #tpu.dot_dimension_numbers<[1], [0], [0], [1], [0, 0, 1, 1], [], []>, precision = #tpu.contract_precision<fp32>} : vector<32x8xf32>, vector<8x128xf32>, vector<32x128xf32> -> vector<32x128xf32>
    %68 = arith.addf %57, %67 : vector<32x128xf32>
    %c4 = arith.constant 4 : index
    %c0_26 = arith.constant 0 : index
    %c0_27 = arith.constant 0 : index
    %69 = vector.load %arg4[%c4, %c0_26, %c0_27] : memref<9x32x8xf32, #tpu.memory_space<vmem>>, vector<1x32x8xf32>
    %70 = vector.shape_cast %69 : vector<1x32x8xf32> to vector<32x8xf32>
    %cst_28 = arith.constant dense<0.000000e+00> : vector<32x128xf32>
    %71 = tpu.matmul %70, %1, %cst_28 {dimension_numbers = #tpu.dot_dimension_numbers<[1], [0], [0], [1], [0, 0, 1, 1], [], []>, precision = #tpu.contract_precision<fp32>} : vector<32x8xf32>, vector<8x128xf32>, vector<32x128xf32> -> vector<32x128xf32>
    %72 = arith.addf %68, %71 : vector<32x128xf32>
    %73 = vector.extract_strided_slice %1 {offsets = [0, 1], sizes = [8, 127], strides = [1, 1]} : vector<8x128xf32> to vector<8x127xf32>
    %74 = vector.extract_strided_slice %1 {offsets = [0, 0], sizes = [8, 1], strides = [1, 1]} : vector<8x128xf32> to vector<8x1xf32>
    %75 = tpu.concatenate %73, %74 in 1 : vector<8x127xf32>, vector<8x1xf32> -> vector<8x128xf32>
    %cst_29 = arith.constant 0.000000e+00 : f32
    %76 = vector.shape_cast %30 : vector<1x128xi1> to vector<1x128xi1>
    %77 = vector.broadcast %76 : vector<1x128xi1> to vector<8x128xi1>
    %78 = vector.broadcast %cst_29 : f32 to vector<8x128xf32>
    %79 = arith.select %77, %75, %78 : vector<8x128xi1>, vector<8x128xf32>
    %c5 = arith.constant 5 : index
    %c0_30 = arith.constant 0 : index
    %c0_31 = arith.constant 0 : index
    %80 = vector.load %arg4[%c5, %c0_30, %c0_31] : memref<9x32x8xf32, #tpu.memory_space<vmem>>, vector<1x32x8xf32>
    %81 = vector.shape_cast %80 : vector<1x32x8xf32> to vector<32x8xf32>
    %cst_32 = arith.constant dense<0.000000e+00> : vector<32x128xf32>
    %82 = tpu.matmul %81, %79, %cst_32 {dimension_numbers = #tpu.dot_dimension_numbers<[1], [0], [0], [1], [0, 0, 1, 1], [], []>, precision = #tpu.contract_precision<fp32>} : vector<32x8xf32>, vector<8x128xf32>, vector<32x128xf32> -> vector<32x128xf32>
    %83 = arith.addf %72, %82 : vector<32x128xf32>
    %84 = vector.extract_strided_slice %9 {offsets = [0, 127], sizes = [8, 1], strides = [1, 1]} : vector<8x128xf32> to vector<8x1xf32>
    %85 = vector.extract_strided_slice %9 {offsets = [0, 0], sizes = [8, 127], strides = [1, 1]} : vector<8x128xf32> to vector<8x127xf32>
    %86 = tpu.concatenate %84, %85 in 1 : vector<8x1xf32>, vector<8x127xf32> -> vector<8x128xf32>
    %cst_33 = arith.constant 0.000000e+00 : f32
    %87 = vector.shape_cast %28 : vector<1x128xi1> to vector<1x128xi1>
    %88 = vector.broadcast %87 : vector<1x128xi1> to vector<8x128xi1>
    %89 = vector.broadcast %cst_33 : f32 to vector<8x128xf32>
    %90 = arith.select %88, %86, %89 : vector<8x128xi1>, vector<8x128xf32>
    %c6 = arith.constant 6 : index
    %c0_34 = arith.constant 0 : index
    %c0_35 = arith.constant 0 : index
    %91 = vector.load %arg4[%c6, %c0_34, %c0_35] : memref<9x32x8xf32, #tpu.memory_space<vmem>>, vector<1x32x8xf32>
    %92 = vector.shape_cast %91 : vector<1x32x8xf32> to vector<32x8xf32>
    %cst_36 = arith.constant dense<0.000000e+00> : vector<32x128xf32>
    %93 = tpu.matmul %92, %90, %cst_36 {dimension_numbers = #tpu.dot_dimension_numbers<[1], [0], [0], [1], [0, 0, 1, 1], [], []>, precision = #tpu.contract_precision<fp32>} : vector<32x8xf32>, vector<8x128xf32>, vector<32x128xf32> -> vector<32x128xf32>
    %94 = arith.addf %83, %93 : vector<32x128xf32>
    %c7 = arith.constant 7 : index
    %c0_37 = arith.constant 0 : index
    %c0_38 = arith.constant 0 : index
    %95 = vector.load %arg4[%c7, %c0_37, %c0_38] : memref<9x32x8xf32, #tpu.memory_space<vmem>>, vector<1x32x8xf32>
    %96 = vector.shape_cast %95 : vector<1x32x8xf32> to vector<32x8xf32>
    %cst_39 = arith.constant dense<0.000000e+00> : vector<32x128xf32>
    %97 = tpu.matmul %96, %9, %cst_39 {dimension_numbers = #tpu.dot_dimension_numbers<[1], [0], [0], [1], [0, 0, 1, 1], [], []>, precision = #tpu.contract_precision<fp32>} : vector<32x8xf32>, vector<8x128xf32>, vector<32x128xf32> -> vector<32x128xf32>
    %98 = arith.addf %94, %97 : vector<32x128xf32>
    %99 = vector.extract_strided_slice %9 {offsets = [0, 1], sizes = [8, 127], strides = [1, 1]} : vector<8x128xf32> to vector<8x127xf32>
    %100 = vector.extract_strided_slice %9 {offsets = [0, 0], sizes = [8, 1], strides = [1, 1]} : vector<8x128xf32> to vector<8x1xf32>
    %101 = tpu.concatenate %99, %100 in 1 : vector<8x127xf32>, vector<8x1xf32> -> vector<8x128xf32>
    %cst_40 = arith.constant 0.000000e+00 : f32
    %102 = vector.shape_cast %30 : vector<1x128xi1> to vector<1x128xi1>
    %103 = vector.broadcast %102 : vector<1x128xi1> to vector<8x128xi1>
    %104 = vector.broadcast %cst_40 : f32 to vector<8x128xf32>
    %105 = arith.select %103, %101, %104 : vector<8x128xi1>, vector<8x128xf32>
    %c8 = arith.constant 8 : index
    %c0_41 = arith.constant 0 : index
    %c0_42 = arith.constant 0 : index
    %106 = vector.load %arg4[%c8, %c0_41, %c0_42] : memref<9x32x8xf32, #tpu.memory_space<vmem>>, vector<1x32x8xf32>
    %107 = vector.shape_cast %106 : vector<1x32x8xf32> to vector<32x8xf32>
    %cst_43 = arith.constant dense<0.000000e+00> : vector<32x128xf32>
    %108 = tpu.matmul %107, %105, %cst_43 {dimension_numbers = #tpu.dot_dimension_numbers<[1], [0], [0], [1], [0, 0, 1, 1], [], []>, precision = #tpu.contract_precision<fp32>} : vector<32x8xf32>, vector<8x128xf32>, vector<32x128xf32> -> vector<32x128xf32>
    %109 = arith.addf %98, %108 : vector<32x128xf32>
    %cst_44 = arith.constant 0.000000e+00 : f32
    %110 = vector.broadcast %cst_44 : f32 to vector<32x128xf32>
    %111 = arith.cmpf oge, %109, %110 : vector<32x128xf32>
    %cst_45 = arith.constant 2.000000e-01 : f32
    %112 = vector.broadcast %cst_45 : f32 to vector<32x128xf32>
    %113 = arith.mulf %112, %109 : vector<32x128xf32>
    %114 = arith.select %111, %109, %113 : vector<32x128xi1>, vector<32x128xf32>
    %c0_46 = arith.constant 0 : index
    %c0_47 = arith.constant 0 : index
    %c0_48 = arith.constant 0 : index
    %115 = vector.load %arg5[%c0_46, %c0_47, %c0_48] : memref<1x32x128xf32, #tpu.memory_space<vmem>>, vector<1x32x128xf32>
    %116 = vector.shape_cast %115 : vector<1x32x128xf32> to vector<32x128xf32>
    %117 = vector.shape_cast %114 : vector<32x128xf32> to vector<1x32x128xf32>
    tpu.vector_store %arg5[%c0_46, %c0_47, %c0_48], %117 {strides = array<i32>} : memref<1x32x128xf32, #tpu.memory_space<vmem>>, vector<1x32x128xf32>,
    return
  }
  func.func @transform_0(%arg0: i32, %arg1: i32) -> (i32, i32, i32) {
    %c0_i32 = arith.constant 0 : i32
    %c0_i32_0 = arith.constant 0 : i32
    return %arg0, %c0_i32, %arg1 : i32, i32, i32
  }
  func.func @transform_1(%arg0: i32, %arg1: i32) -> (i32, i32, i32, i32) {
    %c0_i32 = arith.constant 0 : i32
    %c0_i32_0 = arith.constant 0 : i32
    %c0_i32_1 = arith.constant 0 : i32
    return %arg0, %arg1, %c0_i32, %c0_i32_0 : i32, i32, i32, i32
  }
  func.func @transform_2(%arg0: i32, %arg1: i32) -> (i32, i32, i32) {
    %c0_i32 = arith.constant 0 : i32
    %c0_i32_0 = arith.constant 0 : i32
    %c0_i32_1 = arith.constant 0 : i32
    %c0_i32_2 = arith.constant 0 : i32
    return %c0_i32, %c0_i32_0, %c0_i32_1 : i32, i32, i32
  }
  func.func @transform_3(%arg0: i32, %arg1: i32) -> (i32, i32, i32) {
    %c0_i32 = arith.constant 0 : i32
    %c0_i32_0 = arith.constant 0 : i32
    return %arg0, %c0_i32, %arg1 : i32, i32, i32
  }
}

</mosaic_0001>

<llo_original>
// kernel: upscale_block.1
$region0: #{upscale_block.1}
  #allocation0 [shape = 'u32[]', space=smem, size = 0x4, offset = 0x4, fixed_abs, tag = 'smem constant byte address 0x4 - core index']
  #allocation1 [shape = 'u32[144,128]{1,0:T(1,128)}', space=vmem, size = 0x12000, scoped, tag = 'internal scratch']
  %s0 = inlined_call_operand.vmem [shape: f32[2,8,256], index: 0, kind: input, shape index: {}]
  %s1 = inlined_call_operand.vmem [shape: f32[2,2,16,16], index: 1, kind: input, shape index: {}]
  %s2 = inlined_call_operand.vmem [shape: f32[9,32,8], index: 2, kind: input, shape index: {}]
  %s3 = inlined_call_operand.vmem [shape: f32[2,32,256], index: 3, kind: output, shape index: {}]
  %s4 = sld [smem:[#allocation0]]
  $region79: #{upscale_block.1} parent=0
    _
  %s6 = ssub.s32 1, %s4
  %s7 = scalar_select 0, %s6, %s4
  $region1: #{upscale_block.1} parent=0
    #allocation2 [shape = 'u8[32768]{0}', space=vmem, size = 0x8000, scoped, tag = 'output window, operand 0']
    loop: start=0, step=1, limit=6
    $region2: #{upscale_block.1} parent=1 // loop_pre_header
      _
    $region3: #{upscale_block.1} parent=1 // loop_header
      %s9 = sphi 0, %s13
      %p10 = scmp.ge.s32.totalorder %s9, 6
      %s16 = sphi 0, %s28
      %s17 = sphi 0, %s24
      %s18 = sphi 0, %s16
      %s19 = sphi 0, %s17
      %s20 = sphi 0, %s18
      %s21 = sphi 0, %s19
      %s33 = sphi 0, %s35
      %s36 = sphi 0, %s33
      %s37 = sphi 0, %s36
      %s53 = sphi 0, %s37
      %s61 = sphi 0, %s63
      %s64 = sphi 0, %s61
      %s65 = sphi 0, %s64
      %s81 = sphi 0, %s65
      %s85 = sphi 0, %s85
      %s87 = sphi 0, %s85
      %s88 = sphi 0, %s87
      %s102 = sphi 0, %s88
      %s110 = sphi 0, %s112
      %s113 = sphi 0, %s110
      %s114 = sphi 0, %s113
      %s130 = sphi 0, %s114
    $region4: #{upscale_block.1} parent=1 // loop_header_branch
      %12 = sbr.rel (%p10) target = $region8
    $region5: #{upscale_block.1} parent=1 // loop_body
      %s14 = ssub.s32 %s9, 1
      %s15 = ssub.s32 %s9, 2
      %s22 = sadd.s32 1, %s17
      %p23 = scmp.ge.s32.totalorder %s22, 2
      %s24 = scalar_select %p23, 0, %s22
      %s25 = sadd.s32 1, %s16
      %s26 = scalar_select %p23, %s25, %s16
      %p27 = scmp.ge.s32.totalorder %s26, 2
      %s28 = scalar_select %p27, 0, %s26
      %s29 = ssub.s32 %s16, %s28
      %s30 = ssub.s32 %s17, %s24
      %s31 = sor.u32 %s29, %s30
      %p32 = scmp.eq.s32.totalorder %s31, 0
      %s34 = sadd.s32 %s33, 1
      %s35 = scalar_select %p32, %s33, %s34
      %p38 = pneg %p32
      %p39 = scmp.eq.s32.totalorder %s9, 3
      %p40 = por %p38, %p39
      %p41 = scmp.ne.s32.totalorder %s33, %s36
      %p42 = scmp.eq.s32.totalorder %s9, 0
      %p43 = por %p41, %p42
      %p44 = scmp.ne.s32.totalorder %s33, %s36
      %p45 = scmp.eq.s32.totalorder %s14, 3
      %p46 = por %p44, %p45
      %p47 = scmp.ne.s32.totalorder %s36, %s37
      %p48 = scmp.eq.s32.totalorder %s14, 0
      %p49 = por %p47, %p48
      %p50 = scmp.ne.s32.totalorder %s36, %s37
      %p51 = scmp.eq.s32.totalorder %s15, 3
      %p52 = por %p50, %p51
      %p54 = scmp.ne.s32.totalorder %s37, %s53
      %p55 = scmp.eq.s32.totalorder %s15, 0
      %p56 = por %p54, %p55
      %s57 = ssub.s32 %s16, %s28
      %s58 = ssub.s32 %s17, %s24
      %s59 = sor.u32 %s57, %s58
      %p60 = scmp.eq.s32.totalorder %s59, 0
      %s62 = sadd.s32 %s61, 1
      %s63 = scalar_select %p60, %s61, %s62
      %p66 = pneg %p60
      %p67 = scmp.eq.s32.totalorder %s9, 3
      %p68 = por %p66, %p67
      %p69 = scmp.ne.s32.totalorder %s61, %s64
      %p70 = scmp.eq.s32.totalorder %s9, 0
      %p71 = por %p69, %p70
      %p72 = scmp.ne.s32.totalorder %s61, %s64
      %p73 = scmp.eq.s32.totalorder %s14, 3
      %p74 = por %p72, %p73
      %p75 = scmp.ne.s32.totalorder %s64, %s65
      %p76 = scmp.eq.s32.totalorder %s14, 0
      %p77 = por %p75, %p76
      %p78 = scmp.ne.s32.totalorder %s64, %s65
      %p79 = scmp.eq.s32.totalorder %s15, 3
      %p80 = por %p78, %p79
      %p82 = scmp.ne.s32.totalorder %s65, %s81
      %p83 = scmp.eq.s32.totalorder %s15, 0
      %p84 = por %p82, %p83
      %s86 = sadd.s32 %s85, 1
      %p89 = scmp.eq.s32.totalorder %s9, 3
      %p90 = scmp.ne.s32.totalorder %s85, %s87
      %p91 = scmp.eq.s32.totalorder %s9, 0
      %p92 = por %p90, %p91
      %p93 = scmp.ne.s32.totalorder %s85, %s87
      %p94 = scmp.eq.s32.totalorder %s14, 3
      %p95 = por %p93, %p94
      %p96 = scmp.ne.s32.totalorder %s87, %s88
      %p97 = scmp.eq.s32.totalorder %s14, 0
      %p98 = por %p96, %p97
      %p99 = scmp.ne.s32.totalorder %s87, %s88
      %p100 = scmp.eq.s32.totalorder %s15, 3
      %p101 = por %p99, %p100
      %p103 = scmp.ne.s32.totalorder %s88, %s102
      %p104 = scmp.eq.s32.totalorder %s15, 0
      %p105 = por %p103, %p104
      %s106 = ssub.s32 %s16, %s28
      %s107 = ssub.s32 %s17, %s24
      %s108 = sor.u32 %s106, %s107
      %p109 = scmp.eq.s32.totalorder %s108, 0
      %s111 = sadd.s32 %s110, 1
      %s112 = scalar_select %p109, %s110, %s111
      %p115 = pneg %p109
      %p116 = scmp.eq.s32.totalorder %s9, 3
      %p117 = por %p115, %p116
      %p118 = scmp.ne.s32.totalorder %s110, %s113
      %p119 = scmp.eq.s32.totalorder %s9, 0
      %p120 = por %p118, %p119
      %p121 = scmp.ne.s32.totalorder %s110, %s113
      %p122 = scmp.eq.s32.totalorder %s14, 3
      %p123 = por %p121, %p122
      %p124 = scmp.ne.s32.totalorder %s113, %s114
      %p125 = scmp.eq.s32.totalorder %s14, 0
      %p126 = por %p124, %p125
      %p127 = scmp.ne.s32.totalorder %s113, %s114
      %p128 = scmp.eq.s32.totalorder %s15, 3
      %p129 = por %p127, %p128
      %p131 = scmp.ne.s32.totalorder %s114, %s130
      %p132 = scmp.eq.s32.totalorder %s15, 0
      %p133 = por %p131, %p132
      %p134 = scmp.le.s32.totalorder 1, %s9
      %p135 = scmp.lt.s32.totalorder %s9, 5
      %p136 = pnand %p134, %p135
      %p137 = pneg %p136
      // Predicated region
      $region9: #{upscale_block.1} parent=5 // pred_check
        _
      $region10: #{upscale_block.1} parent=5 // pred_check_branch
        %139 = sbr.rel (%p136) target = $region12
      $region11: #{upscale_block.1} parent=5 // pred_region
        %s140 = ssub.s32 %s9, 1
        // Predicated region
        $region13: #{upscale_block.1} parent=11 // pred_check
          %p141 = pneg %p98
        $region14: #{upscale_block.1} parent=11 // pred_check_branch
          %143 = sbr.rel (%p141) target = $region16
        $region15: #{upscale_block.1} parent=11 // pred_region
          _
        $region16: #{upscale_block.1} parent=11 // pred_fallthru
          _
      $region12: #{upscale_block.1} parent=5 // pred_fallthru
        _
      %p144 = scmp.lt.s32.totalorder %s9, 4
      // Predicated region
      $region17: #{upscale_block.1} parent=5 // pred_check
        %p145 = pneg %p144
      $region18: #{upscale_block.1} parent=5 // pred_check_branch
        %147 = sbr.rel (%p145) target = $region20
      $region19: #{upscale_block.1} parent=5 // pred_region
        // Predicated region
        $region21: #{upscale_block.1} parent=19 // pred_check
          %p148 = pneg %p43
        $region22: #{upscale_block.1} parent=19 // pred_check_branch
          %150 = sbr.rel (%p148) target = $region24
        $region23: #{upscale_block.1} parent=19 // pred_region
          %p151 = scmp.lt.s32.totalorder %s16, 1
          %s152 = scalar_select %p151, %s16, 1
          %p153 = scmp.lt.s32.totalorder %s17, 1
          %s154 = scalar_select %p153, %s17, 1
          %s155 = smul.addr %s152, 2
          %s156 = sadd.s32 %s154, %s155
          %s157 = smul.addr %s156, 8
          %s158 = scalar_lea.vmem %s0, %s157
        $region24: #{upscale_block.1} parent=19 // pred_fallthru
          _
        // Predicated region
        $region25: #{upscale_block.1} parent=19 // pred_check
          %p159 = pneg %p71
        $region26: #{upscale_block.1} parent=19 // pred_check_branch
          %161 = sbr.rel (%p159) target = $region28
        $region27: #{upscale_block.1} parent=19 // pred_region
          %p162 = scmp.lt.s32.totalorder %s16, 1
          %s163 = scalar_select %p162, %s16, 1
          %p164 = scmp.lt.s32.totalorder %s17, 1
          %s165 = scalar_select %p164, %s17, 1
          %s166 = smul.addr %s165, 2
          %s167 = smul.addr %s163, 4
          %s168 = sadd.s32 %s166, %s167
          %s169 = smul.addr %s168, 8
          %s170 = scalar_lea.vmem %s1, %s169
        $region28: #{upscale_block.1} parent=19 // pred_fallthru
          _
      $region20: #{upscale_block.1} parent=5 // pred_fallthru
        _
      %p171 = scmp.le.s32.totalorder 1, %s9
      %p172 = scmp.lt.s32.totalorder %s9, 5
      %p173 = pnand %p171, %p172
      %p174 = pneg %p173
      // Predicated region
      $region29: #{upscale_block.1} parent=5 // pred_check
        _
      $region30: #{upscale_block.1} parent=5 // pred_check_branch
        %176 = sbr.rel (%p173) target = $region32
      $region31: #{upscale_block.1} parent=5 // pred_region
        %s177 = ssub.s32 %s9, 1
        %p178 = scmp.lt.s32.totalorder %s18, 1
        %s179 = scalar_select %p178, %s18, 1
        %p180 = scmp.lt.s32.totalorder %s19, 1
        %s181 = scalar_select %p180, %s19, 1
        %s182 = smul.addr %s179, 2
        %s183 = sadd.s32 %s181, %s182
        %s184 = smul.addr %s183, 8
        %s185 = scalar_lea.vmem %s0, %s184
        %p186 = pneg %p49
        %p187 = pneg %p46
        %p188 = scmp.lt.s32.totalorder %s18, 1
        %s189 = scalar_select %p188, %s18, 1
        %p190 = scmp.lt.s32.totalorder %s19, 1
        %s191 = scalar_select %p190, %s19, 1
        %s192 = smul.addr %s191, 2
        %s193 = smul.addr %s189, 4
        %s194 = sadd.s32 %s192, %s193
        %s195 = smul.addr %s194, 8
        %s196 = scalar_lea.vmem %s1, %s195
        %p197 = pneg %p77
        %p198 = pneg %p74
        %p199 = pneg %p98
        %p200 = pneg %p95
        %p201 = pneg %p126
        %p202 = pneg %p123
        %s203 = sand.u32 %s113, 1
        %s204 = sand.u32 %s113, 1
        %s205 = smul.addr %s204, 32
        %s206 = scalar_lea.vmem [#allocation2], %s205
        %p207 = scmp.lt.s32.totalorder %s18, 1
        %s208 = scalar_select %p207, %s18, 1
        %p209 = scmp.lt.s32.totalorder %s19, 1
        %s210 = scalar_select %p209, %s19, 1
        %s211 = smul.addr %s208, 2
        %s212 = sadd.s32 %s210, %s211
        %s213 = smul.addr %s212, 8
        %s214 = scalar_lea.vmem %s0, %s213
        %p215 = scmp.lt.s32.totalorder %s18, 1
        %s216 = scalar_select %p215, %s18, 1
        %p217 = scmp.lt.s32.totalorder %s19, 1
        %s218 = scalar_select %p217, %s19, 1
        %s219 = smul.addr %s218, 2
        %s220 = smul.addr %s216, 4
        %s221 = sadd.s32 %s219, %s220
        %s222 = smul.addr %s221, 8
        %s223 = scalar_lea.vmem %s1, %s222
        %v224 = vld [vmem:[%s214] sm:$0xff]
        %v225 = vld [vmem:[%s223] sm:$0xff]
        %v226 = vld [vmem:[%s223 + $0x8] sm:$0xff]
        %228 = vrot.lane.b32.xlu0 %v224, 16
        %v229 = vpop.permute.xlu0 %228
        %vm231 = vcmask 130048
        %v232 = vsel %vm231, %v225, %v229
        %233 = vrot.lane.b32.xlu0 %v224, 112
        %v234 = vpop.permute.xlu0 %233
        %237 = vrot.lane.b32.xlu0 %v226, 112
        %v238 = vpop.permute.xlu0 %237
        %vm240 = vcmask 916480
        %v241 = vsel %vm240, %v234, %v238
        %v242 = vlaneseq
        %v243 = vand.u32 %v242, 127
        %vm244 = vcmp.lt.s32.totalorder %v243, 0
        %v245 = vsub.s32 0, %v243
        %v246 = vsel %vm244, %v245, %v243
        %v247 = vshrl.u32 %v246, 4
        %v248 = vand.u32 %v246, 15
        %v249 = vsub.s32 0, %v248
        %v250 = vsel %vm244, %v249, %v248
        %vm251 = vcmp.ne.s32.totalorder %v250, 0
        %vm252 = vcmp.lt.s32.totalorder %v250, 0
        %vm253 = vmand %vm252, %vm251
        %v254 = vadd.s32 %v250, 16
        %v255 = vsel %vm253, %v254, %v250
        %vm256 = vcmp.gt.s32.totalorder %v255, 0
        %vm257 = vcmp.lt.s32.totalorder %v255, 15
        %259 = vrot.lane.b32.xlu0 %v232, 1
        %v260 = vpop.permute.xlu0 %259
        %v262 = vsel %vm256, 1, 0
        %vm263 = vcmp.eq.s32.totalorder %v262, 1
        %v264 = vsel %vm263, %v260, 0.0
        %v265 = vld [vmem:[%s2] sm:$0xff]
        %v266 = vld [vmem:[%s2 + $0x8] sm:$0xff]
        %v267 = vld [vmem:[%s2 + $0x10] sm:$0xff]
        %v268 = vld [vmem:[%s2 + $0x18] sm:$0xff]
        %s269 = scalar_lea.vmem %s2, 32
        %v270 = vld [vmem:[%s269] sm:$0xff]
        %v271 = vld [vmem:[%s269 + $0x8] sm:$0xff]
        %v272 = vld [vmem:[%s269 + $0x10] sm:$0xff]
        %v273 = vld [vmem:[%s269 + $0x18] sm:$0xff]
        %vm274 = vcmask 64512
        %v276 = vsel %vm274, %v270, 0
        %v279 = vsel %vm274, %v271, 0
        %v282 = vsel %vm274, %v272, 0
        %v285 = vsel %vm274, %v273, 0
        %287 = vmatprep.subr.mxu0 0.0
        %v288 = vand.u32 %v232, 4294901760
        %289 = vmatpush1.msra.mxu0 %v288
        %290 = vmatprep.subr.mxu0 0.0
        %291 = vmatpush1.msra.mxu0 0.0
        %292 = vmatprep.subr.mxu0 0.0
        %293 = vmatpush1.msra.mxu0 0.0
        %294 = vmatprep.subr.mxu0 0.0
        %295 = vmatpush1.msra.mxu0 0.0
        %296 = vmatprep.subr.mxu0 0.0
        %297 = vmatpush1.msra.mxu0 0.0
        %298 = vmatprep.subr.mxu0 0.0
        %299 = vmatpush1.msra.mxu0 0.0
        %300 = vmatprep.subr.mxu0 0.0
        %301 = vmatpush1.msra.mxu0 0.0
        %302 = vmatprep.subr.mxu0 0.0
        %303 = vmatpush1.msra.mxu0 0.0
        %304 = vmatprep.subr.mxu0 0.0
        %305 = vmatpush1.msra.mxu0 0.0
        %306 = vmatprep.subr.mxu0 0.0
        %307 = vmatpush1.msra.mxu0 0.0
        %308 = vmatprep.subr.mxu0 0.0
        %309 = vmatpush1.msra.mxu0 0.0
        %310 = vmatprep.subr.mxu0 0.0
        %311 = vmatpush1.msra.mxu0 0.0
        %312 = vmatprep.subr.mxu0 0.0
        %313 = vmatpush1.msra.mxu0 0.0
        %314 = vmatprep.subr.mxu0 0.0
        %315 = vmatpush1.msra.mxu0 0.0
        %316 = vmatprep.subr.mxu0 0.0
        %317 = vmatpush1.msra.mxu0 0.0
        %318 = vmatprep.subr.mxu0 0.0
        %319 = vmatpush1.msra.mxu0 0.0
        %320 = vmatprep.subr.mxu0 0.0
        %321 = vmatpush1.msra.mxu0 0.0
        %322 = vmatprep.subr.mxu0 0.0
        %323 = vmatpush1.msra.mxu0 0.0
        %324 = vmatprep.subr.mxu0 0.0
        %325 = vmatpush1.msra.mxu0 0.0
        %326 = vmatprep.subr.mxu0 0.0
        %327 = vmatpush1.msra.mxu0 0.0
        %328 = vmatprep.subr.mxu0 0.0
        %329 = vmatpush1.msra.mxu0 0.0
        %330 = vmatprep.subr.mxu0 0.0
        %331 = vmatpush1.msra.mxu0 0.0
        %332 = vmatprep.subr.mxu0 0.0
        %333 = vmatpush1.msra.mxu0 0.0
        %334 = vmatprep.subr.mxu0 0.0
        %335 = vmatpush1.msra.mxu0 0.0
        %336 = vmatprep.subr.mxu0 0.0
        %337 = vmatpush1.msra.mxu0 0.0
        %338 = vmatprep.subr.mxu0 0.0
        %339 = vmatpush1.msra.mxu0 0.0
        %340 = vmatprep.subr.mxu0 0.0
        %341 = vmatpush1.msra.mxu0 0.0
        %342 = vmatprep.subr.mxu0 0.0
        %343 = vmatpush1.msra.mxu0 0.0
        %344 = vmatprep.subr.mxu0 0.0
        %345 = vmatpush1.msra.mxu0 0.0
        %346 = vmatprep.subr.mxu0 0.0
        %347 = vmatpush1.msra.mxu0 0.0
        %348 = vmatprep.subr.mxu0 0.0
        %349 = vmatpush1.msra.mxu0 0.0
        %350 = vmatprep.subr.mxu0 0.0
        %351 = vmatpush1.msra.mxu0 0.0
        %352 = vmatprep.mubr.f32.mxu0 0.0
        %v353 = vand.u32 %v276, 4294901760
        %v354 = vsub.f32 %v276, %v353
        %v355 = vand.u32 %v354, 4294901760
        %v356 = vsub.f32 %v354, %v355
        %v357 = vand.u32 %v356, 4294901760
        %358 = vmatmul.mubr.f32.gmra.mrb[0].mxu0 %v357
        %v359 = vpop.f32.mrb[0].mxu0
        %v360 = vadd.f32 0.0, %v359
        %v361 = vpop.f32.mrb[0].mxu0
        %362 = vmatprep.mubr.f32.mxu0 0.0
        %v363 = vand.u32 %v279, 4294901760
        %v364 = vsub.f32 %v279, %v363
        %v365 = vand.u32 %v364, 4294901760
        %v366 = vsub.f32 %v364, %v365
        %v367 = vand.u32 %v366, 4294901760
        %368 = vmatmul.mubr.f32.gmra.mrb[0].mxu0 %v367
        %v369 = vpop.f32.mrb[0].mxu0
        %v370 = vadd.f32 0.0, %v369
        %v371 = vpop.f32.mrb[0].mxu0
        %372 = vmatprep.mubr.f32.mxu0 0.0
        %v373 = vand.u32 %v282, 4294901760
        %v374 = vsub.f32 %v282, %v373
        %v375 = vand.u32 %v374, 4294901760
        %v376 = vsub.f32 %v374, %v375
        %v377 = vand.u32 %v376, 4294901760
        %378 = vmatmul.mubr.f32.gmra.mrb[0].mxu0 %v377
        %v379 = vpop.f32.mrb[0].mxu0
        %v380 = vadd.f32 0.0, %v379
        %v381 = vpop.f32.mrb[0].mxu0
        %382 = vmatprep.mubr.f32.mxu0 0.0
        %v383 = vand.u32 %v285, 4294901760
        %v384 = vsub.f32 %v285, %v383
        %v385 = vand.u32 %v384, 4294901760
        %v386 = vsub.f32 %v384, %v385
        %v387 = vand.u32 %v386, 4294901760
        %388 = vmatmul.mubr.f32.gmra.mrb[0].mxu0 %v387
        %v389 = vpop.f32.mrb[0].mxu0
        %v390 = vadd.f32 0.0, %v389
        %v391 = vpop.f32.mrb[0].mxu0
        %392 = vdwg.mxu0
        %393 = vmatprep.subr.mxu0 0.0
        %v394 = vand.u32 %v232, 4294901760
        %v395 = vsub.f32 %v232, %v394
        %v396 = vand.u32 %v395, 4294901760
        %v397 = vsub.f32 %v395, %v396
        %v398 = vand.u32 %v397, 4294901760
        %399 = vmatpush1.msra.mxu0 %v398
        %400 = vmatprep.subr.mxu0 0.0
        %401 = vmatpush1.msra.mxu0 0.0
        %402 = vmatprep.subr.mxu0 0.0
        %403 = vmatpush1.msra.mxu0 0.0
        %404 = vmatprep.subr.mxu0 0.0
        %405 = vmatpush1.msra.mxu0 0.0
        %406 = vmatprep.subr.mxu0 0.0
        %407 = vmatpush1.msra.mxu0 0.0
        %408 = vmatprep.subr.mxu0 0.0
        %409 = vmatpush1.msra.mxu0 0.0
        %410 = vmatprep.subr.mxu0 0.0
        %411 = vmatpush1.msra.mxu0 0.0
        %412 = vmatprep.subr.mxu0 0.0
        %413 = vmatpush1.msra.mxu0 0.0
        %414 = vmatprep.subr.mxu0 0.0
        %415 = vmatpush1.msra.mxu0 0.0
        %416 = vmatprep.subr.mxu0 0.0
        %417 = vmatpush1.msra.mxu0 0.0
        %418 = vmatprep.subr.mxu0 0.0
        %419 = vmatpush1.msra.mxu0 0.0
        %420 = vmatprep.subr.mxu0 0.0
        %421 = vmatpush1.msra.mxu0 0.0
        %422 = vmatprep.subr.mxu0 0.0
        %423 = vmatpush1.msra.mxu0 0.0
        %424 = vmatprep.subr.mxu0 0.0
        %425 = vmatpush1.msra.mxu0 0.0
        %426 = vmatprep.subr.mxu0 0.0
        %427 = vmatpush1.msra.mxu0 0.0
        %428 = vmatprep.subr.mxu0 0.0
        %429 = vmatpush1.msra.mxu0 0.0
        %430 = vmatprep.subr.mxu0 0.0
        %431 = vmatpush1.msra.mxu0 0.0
        %432 = vmatprep.subr.mxu0 0.0
        %433 = vmatpush1.msra.mxu0 0.0
        %434 = vmatprep.subr.mxu0 0.0
        %435 = vmatpush1.msra.mxu0 0.0
        %436 = vmatprep.subr.mxu0 0.0
        %437 = vmatpush1.msra.mxu0 0.0
        %438 = vmatprep.subr.mxu0 0.0
        %439 = vmatpush1.msra.mxu0 0.0
        %440 = vmatprep.subr.mxu0 0.0
        %441 = vmatpush1.msra.mxu0 0.0
        %442 = vmatprep.subr.mxu0 0.0
        %443 = vmatpush1.msra.mxu0 0.0
        %444 = vmatprep.subr.mxu0 0.0
        %445 = vmatpush1.msra.mxu0 0.0
        %446 = vmatprep.subr.mxu0 0.0
        %447 = vmatpush1.msra.mxu0 0.0
        %448 = vmatprep.subr.mxu0 0.0
        %449 = vmatpush1.msra.mxu0 0.0
        %450 = vmatprep.subr.mxu0 0.0
        %451 = vmatpush1.msra.mxu0 0.0
        %452 = vmatprep.subr.mxu0 0.0
        %453 = vmatpush1.msra.mxu0 0.0
        %454 = vmatprep.subr.mxu0 0.0
        %455 = vmatpush1.msra.mxu0 0.0
        %456 = vmatprep.subr.mxu0 0.0
        %457 = vmatpush1.msra.mxu0 0.0
        %458 = vmatprep.subr.mxu0 0.0
        %459 = vmatpush1.msra.mxu0 0.0
        %460 = vmatprep.subr.mxu0 0.0
        %461 = vmatpush1.msra.mxu0 0.0
        %462 = vmatprep.mubr.f32.mxu0 0.0
        %v463 = vand.u32 %v276, 4294901760
        %464 = vmatmul.mubr.f32.gmra.mrb[0].mxu0 %v463
        %v465 = vpop.f32.mrb[0].mxu0
        %v466 = vadd.f32 %v360, %v465
        %v467 = vpop.f32.mrb[0].mxu0
        %468 = vmatprep.mubr.f32.mxu0 0.0
        %v469 = vand.u32 %v279, 4294901760
        %470 = vmatmul.mubr.f32.gmra.mrb[0].mxu0 %v469
        %v471 = vpop.f32.mrb[0].mxu0
        %v472 = vadd.f32 %v370, %v471
        %v473 = vpop.f32.mrb[0].mxu0
        %474 = vmatprep.mubr.f32.mxu0 0.0
        %v475 = vand.u32 %v282, 4294901760
        %476 = vmatmul.mubr.f32.gmra.mrb[0].mxu0 %v475
        %v477 = vpop.f32.mrb[0].mxu0
        %v478 = vadd.f32 %v380, %v477
        %v479 = vpop.f32.mrb[0].mxu0
        %480 = vmatprep.mubr.f32.mxu0 0.0
        %v481 = vand.u32 %v285, 4294901760
        %482 = vmatmul.mubr.f32.gmra.mrb[0].mxu0 %v481
        %v483 = vpop.f32.mrb[0].mxu0
        %v484 = vadd.f32 %v390, %v483
        %v485 = vpop.f32.mrb[0].mxu0
        %486 = vdwg.mxu0
        %487 = vmatprep.subr.mxu0 0.0
        %v488 = vand.u32 %v232, 4294901760
        %v489 = vsub.f32 %v232, %v488
        %490 = vmatpush1.msra.mxu0 %v489
        %491 = vmatprep.subr.mxu0 0.0
        %492 = vmatpush1.msra.mxu0 0.0
        %493 = vmatprep.subr.mxu0 0.0
        %494 = vmatpush1.msra.mxu0 0.0
        %495 = vmatprep.subr.mxu0 0.0
        %496 = vmatpush1.msra.mxu0 0.0
        %497 = vmatprep.subr.mxu0 0.0
        %498 = vmatpush1.msra.mxu0 0.0
        %499 = vmatprep.subr.mxu0 0.0
        %500 = vmatpush1.msra.mxu0 0.0
        %501 = vmatprep.subr.mxu0 0.0
        %502 = vmatpush1.msra.mxu0 0.0
        %503 = vmatprep.subr.mxu0 0.0
        %504 = vmatpush1.msra.mxu0 0.0
        %505 = vmatprep.subr.mxu0 0.0
        %506 = vmatpush1.msra.mxu0 0.0
        %507 = vmatprep.subr.mxu0 0.0
        %508 = vmatpush1.msra.mxu0 0.0
        %509 = vmatprep.subr.mxu0 0.0
        %510 = vmatpush1.msra.mxu0 0.0
        %511 = vmatprep.subr.mxu0 0.0
        %512 = vmatpush1.msra.mxu0 0.0
        %513 = vmatprep.subr.mxu0 0.0
        %514 = vmatpush1.msra.mxu0 0.0
        %515 = vmatprep.subr.mxu0 0.0
        %516 = vmatpush1.msra.mxu0 0.0
        %517 = vmatprep.subr.mxu0 0.0
        %518 = vmatpush1.msra.mxu0 0.0
        %519 = vmatprep.subr.mxu0 0.0
        %520 = vmatpush1.msra.mxu0 0.0
        %521 = vmatprep.subr.mxu0 0.0
        %522 = vmatpush1.msra.mxu0 0.0
        %523 = vmatprep.subr.mxu0 0.0
        %524 = vmatpush1.msra.mxu0 0.0
        %525 = vmatprep.subr.mxu0 0.0
        %526 = vmatpush1.msra.mxu0 0.0
        %527 = vmatprep.subr.mxu0 0.0
        %528 = vmatpush1.msra.mxu0 0.0
        %529 = vmatprep.subr.mxu0 0.0
        %530 = vmatpush1.msra.mxu0 0.0
        %531 = vmatprep.subr.mxu0 0.0
        %532 = vmatpush1.msra.mxu0 0.0
        %533 = vmatprep.subr.mxu0 0.0
        %534 = vmatpush1.msra.mxu0 0.0
        %535 = vmatprep.subr.mxu0 0.0
        %536 = vmatpush1.msra.mxu0 0.0
        %537 = vmatprep.subr.mxu0 0.0
        %538 = vmatpush1.msra.mxu0 0.0
        %539 = vmatprep.subr.mxu0 0.0
        %540 = vmatpush1.msra.mxu0 0.0
        %541 = vmatprep.subr.mxu0 0.0
        %542 = vmatpush1.msra.mxu0 0.0
        %543 = vmatprep.subr.mxu0 0.0
        %544 = vmatpush1.msra.mxu0 0.0
        %545 = vmatprep.subr.mxu0 0.0
        %546 = vmatpush1.msra.mxu0 0.0
        %547 = vmatprep.subr.mxu0 0.0
        %548 = vmatpush1.msra.mxu0 0.0
        %549 = vmatprep.subr.mxu0 0.0
        %550 = vmatpush1.msra.mxu0 0.0
        %551 = vmatprep.subr.mxu0 0.0
        %552 = vmatpush1.msra.mxu0 0.0
        %553 = vmatprep.mubr.f32.mxu0 0.0
        %v554 = vand.u32 %v276, 4294901760
        %v555 = vsub.f32 %v276, %v554
        %556 = vmatmul.mubr.f32.gmra.mrb[0].mxu0 %v555
        %v557 = vpop.f32.mrb[0].mxu0
        %v558 = vadd.f32 %v466, %v557
        %v559 = vpop.f32.mrb[0].mxu0
        %560 = vmatprep.mubr.f32.mxu0 0.0
        %v561 = vand.u32 %v279, 4294901760
        %v562 = vsub.f32 %v279, %v561
        %563 = vmatmul.mubr.f32.gmra.mrb[0].mxu0 %v562
        %v564 = vpop.f32.mrb[0].mxu0
        %v565 = vadd.f32 %v472, %v564
        %v566 = vpop.f32.mrb[0].mxu0
        %567 = vmatprep.mubr.f32.mxu0 0.0
        %v568 = vand.u32 %v282, 4294901760
        %v569 = vsub.f32 %v282, %v568
        %570 = vmatmul.mubr.f32.gmra.mrb[0].mxu0 %v569
        %v571 = vpop.f32.mrb[0].mxu0
        %v572 = vadd.f32 %v478, %v571
        %v573 = vpop.f32.mrb[0].mxu0
        %574 = vmatprep.mubr.f32.mxu0 0.0
        %v575 = vand.u32 %v285, 4294901760
        %v576 = vsub.f32 %v285, %v575
        %577 = vmatmul.mubr.f32.gmra.mrb[0].mxu0 %v576
        %v578 = vpop.f32.mrb[0].mxu0
        %v579 = vadd.f32 %v484, %v578
        %v580 = vpop.f32.mrb[0].mxu0
        %581 = vdwg.mxu0
        %582 = vmatprep.subr.mxu0 0.0
        %v583 = vand.u32 %v232, 4294901760
        %584 = vmatpush1.msra.mxu0 %v583
        %585 = vmatprep.subr.mxu0 0.0
        %586 = vmatpush1.msra.mxu0 0.0
        %587 = vmatprep.subr.mxu0 0.0
        %588 = vmatpush1.msra.mxu0 0.0
        %589 = vmatprep.subr.mxu0 0.0
        %590 = vmatpush1.msra.mxu0 0.0
        %591 = vmatprep.subr.mxu0 0.0
        %592 = vmatpush1.msra.mxu0 0.0
        %593 = vmatprep.subr.mxu0 0.0
        %594 = vmatpush1.msra.mxu0 0.0
        %595 = vmatprep.subr.mxu0 0.0
        %596 = vmatpush1.msra.mxu0 0.0
        %597 = vmatprep.subr.mxu0 0.0
        %598 = vmatpush1.msra.mxu0 0.0
        %599 = vmatprep.subr.mxu0 0.0
        %600 = vmatpush1.msra.mxu0 0.0
        %601 = vmatprep.subr.mxu0 0.0
        %602 = vmatpush1.msra.mxu0 0.0
        %603 = vmatprep.subr.mxu0 0.0
        %604 = vmatpush1.msra.mxu0 0.0
        %605 = vmatprep.subr.mxu0 0.0
        %606 = vmatpush1.msra.mxu0 0.0
        %607 = vmatprep.subr.mxu0 0.0
        %608 = vmatpush1.msra.mxu0 0.0
        %609 = vmatprep.subr.mxu0 0.0
        %610 = vmatpush1.msra.mxu0 0.0
        %611 = vmatprep.subr.mxu0 0.0
        %612 = vmatpush1.msra.mxu0 0.0
        %613 = vmatprep.subr.mxu0 0.0
        %614 = vmatpush1.msra.mxu0 0.0
        %615 = vmatprep.subr.mxu0 0.0
        %616 = vmatpush1.msra.mxu0 0.0
        %617 = vmatprep.subr.mxu0 0.0
        %618 = vmatpush1.msra.mxu0 0.0
        %619 = vmatprep.subr.mxu0 0.0
        %620 = vmatpush1.msra.mxu0 0.0
        %621 = vmatprep.subr.mxu0 0.0
        %622 = vmatpush1.msra.mxu0 0.0
        %623 = vmatprep.subr.mxu0 0.0
        %624 = vmatpush1.msra.mxu0 0.0
        %625 = vmatprep.subr.mxu0 0.0
        %626 = vmatpush1.msra.mxu0 0.0
        %627 = vmatprep.subr.mxu0 0.0
        %628 = vmatpush1.msra.mxu0 0.0
        %629 = vmatprep.subr.mxu0 0.0
        %630 = vmatpush1.msra.mxu0 0.0
        %631 = vmatprep.subr.mxu0 0.0
        %632 = vmatpush1.msra.mxu0 0.0
        %633 = vmatprep.subr.mxu0 0.0
        %634 = vmatpush1.msra.mxu0 0.0
        %635 = vmatprep.subr.mxu0 0.0
        %636 = vmatpush1.msra.mxu0 0.0
        %637 = vmatprep.subr.mxu0 0.0
        %638 = vmatpush1.msra.mxu0 0.0
        %639 = vmatprep.subr.mxu0 0.0
        %640 = vmatpush1.msra.mxu0 0.0
        %641 = vmatprep.subr.mxu0 0.0
        %642 = vmatpush1.msra.mxu0 0.0
        %643 = vmatprep.subr.mxu0 0.0
        %644 = vmatpush1.msra.mxu0 0.0
        %645 = vmatprep.subr.mxu0 0.0
        %646 = vmatpush1.msra.mxu0 0.0
        %647 = vmatprep.mubr.f32.mxu0 0.0
        %v648 = vand.u32 %v276, 4294901760
        %v649 = vsub.f32 %v276, %v648
        %v650 = vand.u32 %v649, 4294901760
        %651 = vmatmul.mubr.f32.gmra.mrb[0].mxu0 %v650
        %v652 = vpop.f32.mrb[0].mxu0
        %v653 = vadd.f32 %v558, %v652
        %v654 = vpop.f32.mrb[0].mxu0
        %655 = vmatprep.mubr.f32.mxu0 0.0
        %v656 = vand.u32 %v279, 4294901760
        %v657 = vsub.f32 %v279, %v656
        %v658 = vand.u32 %v657, 4294901760
        %659 = vmatmul.mubr.f32.gmra.mrb[0].mxu0 %v658
        %v660 = vpop.f32.mrb[0].mxu0
        %v661 = vadd.f32 %v565, %v660
        %v662 = vpop.f32.mrb[0].mxu0
        %663 = vmatprep.mubr.f32.mxu0 0.0
        %v664 = vand.u32 %v282, 4294901760
        %v665 = vsub.f32 %v282, %v664
        %v666 = vand.u32 %v665, 4294901760
        %667 = vmatmul.mubr.f32.gmra.mrb[0].mxu0 %v666
        %v668 = vpop.f32.mrb[0].mxu0
        %v669 = vadd.f32 %v572, %v668
        %v670 = vpop.f32.mrb[0].mxu0
        %671 = vmatprep.mubr.f32.mxu0 0.0
        %v672 = vand.u32 %v285, 4294901760
        %v673 = vsub.f32 %v285, %v672
        %v674 = vand.u32 %v673, 4294901760
        %675 = vmatmul.mubr.f32.gmra.mrb[0].mxu0 %v674
        %v676 = vpop.f32.mrb[0].mxu0
        %v677 = vadd.f32 %v579, %v676
        %v678 = vpop.f32.mrb[0].mxu0
        %679 = vdwg.mxu0
        %680 = vmatprep.subr.mxu0 0.0
        %v681 = vand.u32 %v232, 4294901760
        %v682 = vsub.f32 %v232, %v681
        %v683 = vand.u32 %v682, 4294901760
        %684 = vmatpush1.msra.mxu0 %v683
        %685 = vmatprep.subr.mxu0 0.0
        %686 = vmatpush1.msra.mxu0 0.0
        %687 = vmatprep.subr.mxu0 0.0
        %688 = vmatpush1.msra.mxu0 0.0
        %689 = vmatprep.subr.mxu0 0.0
        %690 = vmatpush1.msra.mxu0 0.0
        %691 = vmatprep.subr.mxu0 0.0
        %692 = vmatpush1.msra.mxu0 0.0
        %693 = vmatprep.subr.mxu0 0.0
        %694 = vmatpush1.msra.mxu0 0.0
        %695 = vmatprep.subr.mxu0 0.0
        %696 = vmatpush1.msra.mxu0 0.0
        %697 = vmatprep.subr.mxu0 0.0
        %698 = vmatpush1.msra.mxu0 0.0
        %699 = vmatprep.subr.mxu0 0.0
        %700 = vmatpush1.msra.mxu0 0.0
        %701 = vmatprep.subr.mxu0 0.0
        %702 = vmatpush1.msra.mxu0 0.0
        %703 = vmatprep.subr.mxu0 0.0
        %704 = vmatpush1.msra.mxu0 0.0
        %705 = vmatprep.subr.mxu0 0.0
        %706 = vmatpush1.msra.mxu0 0.0
        %707 = vmatprep.subr.mxu0 0.0
        %708 = vmatpush1.msra.mxu0 0.0
        %709 = vmatprep.subr.mxu0 0.0
        %710 = vmatpush1.msra.mxu0 0.0
        %711 = vmatprep.subr.mxu0 0.0
        %712 = vmatpush1.msra.mxu0 0.0
        %713 = vmatprep.subr.mxu0 0.0
        %714 = vmatpush1.msra.mxu0 0.0
        %715 = vmatprep.subr.mxu0 0.0
        %716 = vmatpush1.msra.mxu0 0.0
        %717 = vmatprep.subr.mxu0 0.0
        %718 = vmatpush1.msra.mxu0 0.0
        %719 = vmatprep.subr.mxu0 0.0
        %720 = vmatpush1.msra.mxu0 0.0
        %721 = vmatprep.subr.mxu0 0.0
        %722 = vmatpush1.msra.mxu0 0.0
        %723 = vmatprep.subr.mxu0 0.0
        %724 = vmatpush1.msra.mxu0 0.0
        %725 = vmatprep.subr.mxu0 0.0
        %726 = vmatpush1.msra.mxu0 0.0
        %727 = vmatprep.subr.mxu0 0.0
        %728 = vmatpush1.msra.mxu0 0.0
        %729 = vmatprep.subr.mxu0 0.0
        %730 = vmatpush1.msra.mxu0 0.0
        %731 = vmatprep.subr.mxu0 0.0
        %732 = vmatpush1.msra.mxu0 0.0
        %733 = vmatprep.subr.mxu0 0.0
        %734 = vmatpush1.msra.mxu0 0.0
        %735 = vmatprep.subr.mxu0 0.0
        %736 = vmatpush1.msra.mxu0 0.0
        %737 = vmatprep.subr.mxu0 0.0
        %738 = vmatpush1.msra.mxu0 0.0
        %739 = vmatprep.subr.mxu0 0.0
        %740 = vmatpush1.msra.mxu0 0.0
        %741 = vmatprep.subr.mxu0 0.0
        %742 = vmatpush1.msra.mxu0 0.0
        %743 = vmatprep.subr.mxu0 0.0
        %744 = vmatpush1.msra.mxu0 0.0
        %745 = vmatprep.subr.mxu0 0.0
        %746 = vmatpush1.msra.mxu0 0.0
        %747 = vmatprep.mubr.f32.mxu0 0.0
        %v748 = vand.u32 %v276, 4294901760
        %749 = vmatmul.mubr.f32.gmra.mrb[0].mxu0 %v748
        %v750 = vpop.f32.mrb[0].mxu0
        %v751 = vadd.f32 %v653, %v750
        %v752 = vpop.f32.mrb[0].mxu0
        %753 = vmatprep.mubr.f32.mxu0 0.0
        %v754 = vand.u32 %v279, 4294901760
        %755 = vmatmul.mubr.f32.gmra.mrb[0].mxu0 %v754
        %v756 = vpop.f32.mrb[0].mxu0
        %v757 = vadd.f32 %v661, %v756
        %v758 = vpop.f32.mrb[0].mxu0
        %759 = vmatprep.mubr.f32.mxu0 0.0
        %v760 = vand.u32 %v282, 4294901760
        %761 = vmatmul.mubr.f32.gmra.mrb[0].mxu0 %v760
        %v762 = vpop.f32.mrb[0].mxu0
        %v763 = vadd.f32 %v669, %v762
        %v764 = vpop.f32.mrb[0].mxu0
        %765 = vmatprep.mubr.f32.mxu0 0.0
        %v766 = vand.u32 %v285, 4294901760
        %767 = vmatmul.mubr.f32.gmra.mrb[0].mxu0 %v766
        %v768 = vpop.f32.mrb[0].mxu0
        %v769 = vadd.f32 %v677, %v768
        %v770 = vpop.f32.mrb[0].mxu0
        %771 = vdwg.mxu0
        %772 = vmatprep.subr.mxu0 0.0
        %v773 = vand.u32 %v232, 4294901760
        %774 = vmatpush1.msra.mxu0 %v773
        %775 = vmatprep.subr.mxu0 0.0
        %776 = vmatpush1.msra.mxu0 0.0
        %777 = vmatprep.subr.mxu0 0.0
        %778 = vmatpush1.msra.mxu0 0.0
        %779 = vmatprep.subr.mxu0 0.0
        %780 = vmatpush1.msra.mxu0 0.0
        %781 = vmatprep.subr.mxu0 0.0
        %782 = vmatpush1.msra.mxu0 0.0
        %783 = vmatprep.subr.mxu0 0.0
        %784 = vmatpush1.msra.mxu0 0.0
        %785 = vmatprep.subr.mxu0 0.0
        %786 = vmatpush1.msra.mxu0 0.0
        %787 = vmatprep.subr.mxu0 0.0
        %788 = vmatpush1.msra.mxu0 0.0
        %789 = vmatprep.subr.mxu0 0.0
        %790 = vmatpush1.msra.mxu0 0.0
        %791 = vmatprep.subr.mxu0 0.0
        %792 = vmatpush1.msra.mxu0 0.0
        %793 = vmatprep.subr.mxu0 0.0
        %794 = vmatpush1.msra.mxu0 0.0
        %795 = vmatprep.subr.mxu0 0.0
        %796 = vmatpush1.msra.mxu0 0.0
        %797 = vmatprep.subr.mxu0 0.0
        %798 = vmatpush1.msra.mxu0 0.0
        %799 = vmatprep.subr.mxu0 0.0
        %800 = vmatpush1.msra.mxu0 0.0
        %801 = vmatprep.subr.mxu0 0.0
        %802 = vmatpush1.msra.mxu0 0.0
        %803 = vmatprep.subr.mxu0 0.0
        %804 = vmatpush1.msra.mxu0 0.0
        %805 = vmatprep.subr.mxu0 0.0
        %806 = vmatpush1.msra.mxu0 0.0
        %807 = vmatprep.subr.mxu0 0.0
        %808 = vmatpush1.msra.mxu0 0.0
        %809 = vmatprep.subr.mxu0 0.0
        %810 = vmatpush1.msra.mxu0 0.0
        %811 = vmatprep.subr.mxu0 0.0
        %812 = vmatpush1.msra.mxu0 0.0
        %813 = vmatprep.subr.mxu0 0.0
        %814 = vmatpush1.msra.mxu0 0.0
        %815 = vmatprep.subr.mxu0 0.0
        %816 = vmatpush1.msra.mxu0 0.0
        %817 = vmatprep.subr.mxu0 0.0
        %818 = vmatpush1.msra.mxu0 0.0
        %819 = vmatprep.subr.mxu0 0.0
        %820 = vmatpush1.msra.mxu0 0.0
        %821 = vmatprep.subr.mxu0 0.0
        %822 = vmatpush1.msra.mxu0 0.0
        %823 = vmatprep.subr.mxu0 0.0
        %824 = vmatpush1.msra.mxu0 0.0
        %825 = vmatprep.subr.mxu0 0.0
        %826 = vmatpush1.msra.mxu0 0.0
        %827 = vmatprep.subr.mxu0 0.0
        %828 = vmatpush1.msra.mxu0 0.0
        %829 = vmatprep.subr.mxu0 0.0
        %830 = vmatpush1.msra.mxu0 0.0
        %831 = vmatprep.subr.mxu0 0.0
        %832 = vmatpush1.msra.mxu0 0.0
        %833 = vmatprep.subr.mxu0 0.0
        %834 = vmatpush1.msra.mxu0 0.0
        %835 = vmatprep.subr.mxu0 0.0
        %836 = vmatpush1.msra.mxu0 0.0
        %837 = vmatprep.mubr.f32.mxu0 0.0
        %v838 = vand.u32 %v276, 4294901760
        %839 = vmatmul.mubr.f32.gmra.mrb[0].mxu0 %v838
        %v840 = vpop.f32.mrb[0].mxu0
        %v841 = vadd.f32 %v751, %v840
        %v842 = vpop.f32.mrb[0].mxu0
        %843 = vmatprep.mubr.f32.mxu0 0.0
        %v844 = vand.u32 %v279, 4294901760
        %845 = vmatmul.mubr.f32.gmra.mrb[0].mxu0 %v844
        %v846 = vpop.f32.mrb[0].mxu0
        %v847 = vadd.f32 %v757, %v846
        %v848 = vpop.f32.mrb[0].mxu0
        %849 = vmatprep.mubr.f32.mxu0 0.0
        %v850 = vand.u32 %v282, 4294901760
        %851 = vmatmul.mubr.f32.gmra.mrb[0].mxu0 %v850
        %v852 = vpop.f32.mrb[0].mxu0
        %v853 = vadd.f32 %v763, %v852
        %v854 = vpop.f32.mrb[0].mxu0
        %855 = vmatprep.mubr.f32.mxu0 0.0
        %v856 = vand.u32 %v285, 4294901760
        %857 = vmatmul.mubr.f32.gmra.mrb[0].mxu0 %v856
        %v858 = vpop.f32.mrb[0].mxu0
        %v859 = vadd.f32 %v769, %v858
        %v860 = vpop.f32.mrb[0].mxu0
        %861 = vdwg.mxu0
        %v863 = vsel %vm274, %v265, 0
        %v866 = vsel %vm274, %v266, 0
        %v869 = vsel %vm274, %v267, 0
        %v872 = vsel %vm274, %v268, 0
        %874 = vmatprep.subr.mxu0 0.0
        %v875 = vand.u32 %v264, 4294901760
        %876 = vmatpush1.msra.mxu0 %v875
        %877 = vmatprep.subr.mxu0 0.0
        %878 = vmatpush1.msra.mxu0 0.0
        %879 = vmatprep.subr.mxu0 0.0
        %880 = vmatpush1.msra.mxu0 0.0
        %881 = vmatprep.subr.mxu0 0.0
        %882 = vmatpush1.msra.mxu0 0.0
        %883 = vmatprep.subr.mxu0 0.0
        %884 = vmatpush1.msra.mxu0 0.0
        %885 = vmatprep.subr.mxu0 0.0
        %886 = vmatpush1.msra.mxu0 0.0
        %887 = vmatprep.subr.mxu0 0.0
        %888 = vmatpush1.msra.mxu0 0.0
        %889 = vmatprep.subr.mxu0 0.0
        %890 = vmatpush1.msra.mxu0 0.0
        %891 = vmatprep.subr.mxu0 0.0
        %892 = vmatpush1.msra.mxu0 0.0
        %893 = vmatprep.subr.mxu0 0.0
        %894 = vmatpush1.msra.mxu0 0.0
        %895 = vmatprep.subr.mxu0 0.0
        %896 = vmatpush1.msra.mxu0 0.0
        %897 = vmatprep.subr.mxu0 0.0
        %898 = vmatpush1.msra.mxu0 0.0
        %899 = vmatprep.subr.mxu0 0.0
        %900 = vmatpush1.msra.mxu0 0.0
        %901 = vmatprep.subr.mxu0 0.0
        %902 = vmatpush1.msra.mxu0 0.0
        %903 = vmatprep.subr.mxu0 0.0
        %904 = vmatpush1.msra.mxu0 0.0
        %905 = vmatprep.subr.mxu0 0.0
        %906 = vmatpush1.msra.mxu0 0.0
        %907 = vmatprep.subr.mxu0 0.0
        %908 = vmatpush1.msra.mxu0 0.0
        %909 = vmatprep.subr.mxu0 0.0
        %910 = vmatpush1.msra.mxu0 0.0
        %911 = vmatprep.subr.mxu0 0.0
        %912 = vmatpush1.msra.mxu0 0.0
        %913 = vmatprep.subr.mxu0 0.0
        %914 = vmatpush1.msra.mxu0 0.0
        %915 = vmatprep.subr.mxu0 0.0
        %916 = vmatpush1.msra.mxu0 0.0
        %917 = vmatprep.subr.mxu0 0.0
        %918 = vmatpush1.msra.mxu0 0.0
        %919 = vmatprep.subr.mxu0 0.0
        %920 = vmatpush1.msra.mxu0 0.0
        %921 = vmatprep.subr.mxu0 0.0
        %922 = vmatpush1.msra.mxu0 0.0
        %923 = vmatprep.subr.mxu0 0.0
        %924 = vmatpush1.msra.mxu0 0.0
        %925 = vmatprep.subr.mxu0 0.0
        %926 = vmatpush1.msra.mxu0 0.0
        %927 = vmatprep.subr.mxu0 0.0
        %928 = vmatpush1.msra.mxu0 0.0
        %929 = vmatprep.subr.mxu0 0.0
        %930 = vmatpush1.msra.mxu0 0.0
        %931 = vmatprep.subr.mxu0 0.0
        %932 = vmatpush1.msra.mxu0 0.0
        %933 = vmatprep.subr.mxu0 0.0
        %934 = vmatpush1.msra.mxu0 0.0
        %935 = vmatprep.subr.mxu0 0.0
        %936 = vmatpush1.msra.mxu0 0.0
        %937 = vmatprep.subr.mxu0 0.0
        %938 = vmatpush1.msra.mxu0 0.0
        %939 = vmatprep.mubr.f32.mxu0 0.0
        %v940 = vand.u32 %v863, 4294901760
        %v941 = vsub.f32 %v863, %v940
        %v942 = vand.u32 %v941, 4294901760
        %v943 = vsub.f32 %v941, %v942
        %v944 = vand.u32 %v943, 4294901760
        %945 = vmatmul.mubr.f32.gmra.mrb[0].mxu0 %v944
        %v946 = vpop.f32.mrb[0].mxu0
        %v947 = vadd.f32 %v841, %v946
        %v948 = vpop.f32.mrb[0].mxu0
        %949 = vmatprep.mubr.f32.mxu0 0.0
        %v950 = vand.u32 %v866, 4294901760
        %v951 = vsub.f32 %v866, %v950
        %v952 = vand.u32 %v951, 4294901760
        %v953 = vsub.f32 %v951, %v952
        %v954 = vand.u32 %v953, 4294901760
        %955 = vmatmul.mubr.f32.gmra.mrb[0].mxu0 %v954
        %v956 = vpop.f32.mrb[0].mxu0
        %v957 = vadd.f32 %v847, %v956
        %v958 = vpop.f32.mrb[0].mxu0
        %959 = vmatprep.mubr.f32.mxu0 0.0
        %v960 = vand.u32 %v869, 4294901760
        %v961 = vsub.f32 %v869, %v960
        %v962 = vand.u32 %v961, 4294901760
        %v963 = vsub.f32 %v961, %v962
        %v964 = vand.u32 %v963, 4294901760
        %965 = vmatmul.mubr.f32.gmra.mrb[0].mxu0 %v964
        %v966 = vpop.f32.mrb[0].mxu0
        %v967 = vadd.f32 %v853, %v966
        %v968 = vpop.f32.mrb[0].mxu0
        %969 = vmatprep.mubr.f32.mxu0 0.0
        %v970 = vand.u32 %v872, 4294901760
        %v971 = vsub.f32 %v872, %v970
        %v972 = vand.u32 %v971, 4294901760
        %v973 = vsub.f32 %v971, %v972
        %v974 = vand.u32 %v973, 4294901760
        %975 = vmatmul.mubr.f32.gmra.mrb[0].mxu0 %v974
        %v976 = vpop.f32.mrb[0].mxu0
        %v977 = vadd.f32 %v859, %v976
        %v978 = vpop.f32.mrb[0].mxu0
        %979 = vdwg.mxu0
        %980 = vmatprep.subr.mxu0 0.0
        %v981 = vand.u32 %v264, 4294901760
        %v982 = vsub.f32 %v264, %v981
        %v983 = vand.u32 %v982, 4294901760
        %v984 = vsub.f32 %v982, %v983
        %v985 = vand.u32 %v984, 4294901760
        %986 = vmatpush1.msra.mxu0 %v985
        %987 = vmatprep.subr.mxu0 0.0
        %988 = vmatpush1.msra.mxu0 0.0
        %989 = vmatprep.subr.mxu0 0.0
        %990 = vmatpush1.msra.mxu0 0.0
        %991 = vmatprep.subr.mxu0 0.0
        %992 = vmatpush1.msra.mxu0 0.0
        %993 = vmatprep.subr.mxu0 0.0
        %994 = vmatpush1.msra.mxu0 0.0
        %995 = vmatprep.subr.mxu0 0.0
        %996 = vmatpush1.msra.mxu0 0.0
        %997 = vmatprep.subr.mxu0 0.0
        %998 = vmatpush1.msra.mxu0 0.0
        %999 = vmatprep.subr.mxu0 0.0
        %1000 = vmatpush1.msra.mxu0 0.0
        %1001 = vmatprep.subr.mxu0 0.0
        %1002 = vmatpush1.msra.mxu0 0.0
        %1003 = vmatprep.subr.mxu0 0.0
        %1004 = vmatpush1.msra.mxu0 0.0
        %1005 = vmatprep.subr.mxu0 0.0
        %1006 = vmatpush1.msra.mxu0 0.0
        %1007 = vmatprep.subr.mxu0 0.0
        %1008 = vmatpush1.msra.mxu0 0.0
        %1009 = vmatprep.subr.mxu0 0.0
        %1010 = vmatpush1.msra.mxu0 0.0
        %1011 = vmatprep.subr.mxu0 0.0
        %1012 = vmatpush1.msra.mxu0 0.0
        %1013 = vmatprep.subr.mxu0 0.0
        %1014 = vmatpush1.msra.mxu0 0.0
        %1015 = vmatprep.subr.mxu0 0.0
        %1016 = vmatpush1.msra.mxu0 0.0
        %1017 = vmatprep.subr.mxu0 0.0
        %1018 = vmatpush1.msra.mxu0 0.0
        %1019 = vmatprep.subr.mxu0 0.0
        %1020 = vmatpush1.msra.mxu0 0.0
        %1021 = vmatprep.subr.mxu0 0.0
        %1022 = vmatpush1.msra.mxu0 0.0
        %1023 = vmatprep.subr.mxu0 0.0
        %1024 = vmatpush1.msra.mxu0 0.0
        %1025 = vmatprep.subr.mxu0 0.0
        %1026 = vmatpush1.msra.mxu0 0.0
        %1027 = vmatprep.subr.mxu0 0.0
        %1028 = vmatpush1.msra.mxu0 0.0
        %1029 = vmatprep.subr.mxu0 0.0
        %1030 = vmatpush1.msra.mxu0 0.0
        %1031 = vmatprep.subr.mxu0 0.0
        %1032 = vmatpush1.msra.mxu0 0.0
        %1033 = vmatprep.subr.mxu0 0.0
        %1034 = vmatpush1.msra.mxu0 0.0
        %1035 = vmatprep.subr.mxu0 0.0
        %1036 = vmatpush1.msra.mxu0 0.0
        %1037 = vmatprep.subr.mxu0 0.0
        %1038 = vmatpush1.msra.mxu0 0.0
        %1039 = vmatprep.subr.mxu0 0.0
        %1040 = vmatpush1.msra.mxu0 0.0
        %1041 = vmatprep.subr.mxu0 0.0
        %1042 = vmatpush1.msra.mxu0 0.0
        %1043 = vmatprep.subr.mxu0 0.0
        %1044 = vmatpush1.msra.mxu0 0.0
        %1045 = vmatprep.subr.mxu0 0.0
        %1046 = vmatpush1.msra.mxu0 0.0
        %1047 = vmatprep.subr.mxu0 0.0
        %1048 = vmatpush1.msra.mxu0 0.0
        %1049 = vmatprep.mubr.f32.mxu0 0.0
        %v1050 = vand.u32 %v863, 4294901760
        %1051 = vmatmul.mubr.f32.gmra.mrb[0].mxu0 %v1050
        %v1052 = vpop.f32.mrb[0].mxu0
        %v1053 = vadd.f32 %v947, %v1052
        %v1054 = vpop.f32.mrb[0].mxu0
        %1055 = vmatprep.mubr.f32.mxu0 0.0
        %v1056 = vand.u32 %v866, 4294901760
        %1057 = vmatmul.mubr.f32.gmra.mrb[0].mxu0 %v1056
        %v1058 = vpop.f32.mrb[0].mxu0
        %v1059 = vadd.f32 %v957, %v1058
        %v1060 = vpop.f32.mrb[0].mxu0
        %1061 = vmatprep.mubr.f32.mxu0 0.0
        %v1062 = vand.u32 %v869, 4294901760
        %1063 = vmatmul.mubr.f32.gmra.mrb[0].mxu0 %v1062
        %v1064 = vpop.f32.mrb[0].mxu0
        %v1065 = vadd.f32 %v967, %v1064
        %v1066 = vpop.f32.mrb[0].mxu0
        %1067 = vmatprep.mubr.f32.mxu0 0.0
        %v1068 = vand.u32 %v872, 4294901760
        %1069 = vmatmul.mubr.f32.gmra.mrb[0].mxu0 %v1068
        %v1070 = vpop.f32.mrb[0].mxu0
        %v1071 = vadd.f32 %v977, %v1070
        %v1072 = vpop.f32.mrb[0].mxu0
        %1073 = vdwg.mxu0
        %1074 = vmatprep.subr.mxu0 0.0
        %v1075 = vand.u32 %v264, 4294901760
        %v1076 = vsub.f32 %v264, %v1075
        %1077 = vmatpush1.msra.mxu0 %v1076
        %1078 = vmatprep.subr.mxu0 0.0
        %1079 = vmatpush1.msra.mxu0 0.0
        %1080 = vmatprep.subr.mxu0 0.0
        %1081 = vmatpush1.msra.mxu0 0.0
        %1082 = vmatprep.subr.mxu0 0.0
        %1083 = vmatpush1.msra.mxu0 0.0
        %1084 = vmatprep.subr.mxu0 0.0
        %1085 = vmatpush1.msra.mxu0 0.0
        %1086 = vmatprep.subr.mxu0 0.0
        %1087 = vmatpush1.msra.mxu0 0.0
        %1088 = vmatprep.subr.mxu0 0.0
        %1089 = vmatpush1.msra.mxu0 0.0
        %1090 = vmatprep.subr.mxu0 0.0
        %1091 = vmatpush1.msra.mxu0 0.0
        %1092 = vmatprep.subr.mxu0 0.0
        %1093 = vmatpush1.msra.mxu0 0.0
        %1094 = vmatprep.subr.mxu0 0.0
        %1095 = vmatpush1.msra.mxu0 0.0
        %1096 = vmatprep.subr.mxu0 0.0
        %1097 = vmatpush1.msra.mxu0 0.0
        %1098 = vmatprep.subr.mxu0 0.0
        %1099 = vmatpush1.msra.mxu0 0.0
        %1100 = vmatprep.subr.mxu0 0.0
        %1101 = vmatpush1.msra.mxu0 0.0
        %1102 = vmatprep.subr.mxu0 0.0
        %1103 = vmatpush1.msra.mxu0 0.0
        %1104 = vmatprep.subr.mxu0 0.0
        %1105 = vmatpush1.msra.mxu0 0.0
        %1106 = vmatprep.subr.mxu0 0.0
        %1107 = vmatpush1.msra.mxu0 0.0
        %1108 = vmatprep.subr.mxu0 0.0
        %1109 = vmatpush1.msra.mxu0 0.0
        %1110 = vmatprep.subr.mxu0 0.0
        %1111 = vmatpush1.msra.mxu0 0.0
        %1112 = vmatprep.subr.mxu0 0.0
        %1113 = vmatpush1.msra.mxu0 0.0
        %1114 = vmatprep.subr.mxu0 0.0
        %1115 = vmatpush1.msra.mxu0 0.0
        %1116 = vmatprep.subr.mxu0 0.0
        %1117 = vmatpush1.msra.mxu0 0.0
        %1118 = vmatprep.subr.mxu0 0.0
        %1119 = vmatpush1.msra.mxu0 0.0
        %1120 = vmatprep.subr.mxu0 0.0
        %1121 = vmatpush1.msra.mxu0 0.0
        %1122 = vmatprep.subr.mxu0 0.0
        %1123 = vmatpush1.msra.mxu0 0.0
        %1124 = vmatprep.subr.mxu0 0.0
        %1125 = vmatpush1.msra.mxu0 0.0
        %1126 = vmatprep.subr.mxu0 0.0
        %1127 = vmatpush1.msra.mxu0 0.0
        %1128 = vmatprep.subr.mxu0 0.0
        %1129 = vmatpush1.msra.mxu0 0.0
        %1130 = vmatprep.subr.mxu0 0.0
        %1131 = vmatpush1.msra.mxu0 0.0
        %1132 = vmatprep.subr.mxu0 0.0
        %1133 = vmatpush1.msra.mxu0 0.0
        %1134 = vmatprep.subr.mxu0 0.0
        %1135 = vmatpush1.msra.mxu0 0.0
        %1136 = vmatprep.subr.mxu0 0.0
        %1137 = vmatpush1.msra.mxu0 0.0
        %1138 = vmatprep.subr.mxu0 0.0
        %1139 = vmatpush1.msra.mxu0 0.0
        %1140 = vmatprep.mubr.f32.mxu0 0.0
        %v1141 = vand.u32 %v863, 4294901760
        %v1142 = vsub.f32 %v863, %v1141
        %1143 = vmatmul.mubr.f32.gmra.mrb[0].mxu0 %v1142
        %v1144 = vpop.f32.mrb[0].mxu0
        %v1145 = vadd.f32 %v1053, %v1144
        %v1146 = vpop.f32.mrb[0].mxu0
        %1147 = vmatprep.mubr.f32.mxu0 0.0
        %v1148 = vand.u32 %v866, 4294901760
        %v1149 = vsub.f32 %v866, %v1148
        %1150 = vmatmul.mubr.f32.gmra.mrb[0].mxu0 %v1149
        %v1151 = vpop.f32.mrb[0].mxu0
        %v1152 = vadd.f32 %v1059, %v1151
        %v1153 = vpop.f32.mrb[0].mxu0
        %1154 = vmatprep.mubr.f32.mxu0 0.0
        %v1155 = vand.u32 %v869, 4294901760
        %v1156 = vsub.f32 %v869, %v1155
        %1157 = vmatmul.mubr.f32.gmra.mrb[0].mxu0 %v1156
        %v1158 = vpop.f32.mrb[0].mxu0
        %v1159 = vadd.f32 %v1065, %v1158
        %v1160 = vpop.f32.mrb[0].mxu0
        %1161 = vmatprep.mubr.f32.mxu0 0.0
        %v1162 = vand.u32 %v872, 4294901760
        %v1163 = vsub.f32 %v872, %v1162
        %1164 = vmatmul.mubr.f32.gmra.mrb[0].mxu0 %v1163
        %v1165 = vpop.f32.mrb[0].mxu0
        %v1166 = vadd.f32 %v1071, %v1165
        %v1167 = vpop.f32.mrb[0].mxu0
        %1168 = vdwg.mxu0
        %1169 = vmatprep.subr.mxu0 0.0
        %v1170 = vand.u32 %v264, 4294901760
        %1171 = vmatpush1.msra.mxu0 %v1170
        %1172 = vmatprep.subr.mxu0 0.0
        %1173 = vmatpush1.msra.mxu0 0.0
        %1174 = vmatprep.subr.mxu0 0.0
        %1175 = vmatpush1.msra.mxu0 0.0
        %1176 = vmatprep.subr.mxu0 0.0
        %1177 = vmatpush1.msra.mxu0 0.0
        %1178 = vmatprep.subr.mxu0 0.0
        %1179 = vmatpush1.msra.mxu0 0.0
        %1180 = vmatprep.subr.mxu0 0.0
        %1181 = vmatpush1.msra.mxu0 0.0
        %1182 = vmatprep.subr.mxu0 0.0
        %1183 = vmatpush1.msra.mxu0 0.0
        %1184 = vmatprep.subr.mxu0 0.0
        %1185 = vmatpush1.msra.mxu0 0.0
        %1186 = vmatprep.subr.mxu0 0.0
        %1187 = vmatpush1.msra.mxu0 0.0
        %1188 = vmatprep.subr.mxu0 0.0
        %1189 = vmatpush1.msra.mxu0 0.0
        %1190 = vmatprep.subr.mxu0 0.0
        %1191 = vmatpush1.msra.mxu0 0.0
        %1192 = vmatprep.subr.mxu0 0.0
        %1193 = vmatpush1.msra.mxu0 0.0
        %1194 = vmatprep.subr.mxu0 0.0
        %1195 = vmatpush1.msra.mxu0 0.0
        %1196 = vmatprep.subr.mxu0 0.0
        %1197 = vmatpush1.msra.mxu0 0.0
        %1198 = vmatprep.subr.mxu0 0.0
        %1199 = vmatpush1.msra.mxu0 0.0
        %1200 = vmatprep.subr.mxu0 0.0
        %1201 = vmatpush1.msra.mxu0 0.0
        %1202 = vmatprep.subr.mxu0 0.0
        %1203 = vmatpush1.msra.mxu0 0.0
        %1204 = vmatprep.subr.mxu0 0.0
        %1205 = vmatpush1.msra.mxu0 0.0
        %1206 = vmatprep.subr.mxu0 0.0
        %1207 = vmatpush1.msra.mxu0 0.0
        %1208 = vmatprep.subr.mxu0 0.0
        %1209 = vmatpush1.msra.mxu0 0.0
        %1210 = vmatprep.subr.mxu0 0.0
        %1211 = vmatpush1.msra.mxu0 0.0
        %1212 = vmatprep.subr.mxu0 0.0
        %1213 = vmatpush1.msra.mxu0 0.0
        %1214 = vmatprep.subr.mxu0 0.0
        %1215 = vmatpush1.msra.mxu0 0.0
        %1216 = vmatprep.subr.mxu0 0.0
        %1217 = vmatpush1.msra.mxu0 0.0
        %1218 = vmatprep.subr.mxu0 0.0
        %1219 = vmatpush1.msra.mxu0 0.0
        %1220 = vmatprep.subr.mxu0 0.0
        %1221 = vmatpush1.msra.mxu0 0.0
        %1222 = vmatprep.subr.mxu0 0.0
        %1223 = vmatpush1.msra.mxu0 0.0
        %1224 = vmatprep.subr.mxu0 0.0
        %1225 = vmatpush1.msra.mxu0 0.0
        %1226 = vmatprep.subr.mxu0 0.0
        %1227 = vmatpush1.msra.mxu0 0.0
        %1228 = vmatprep.subr.mxu0 0.0
        %1229 = vmatpush1.msra.mxu0 0.0
        %1230 = vmatprep.subr.mxu0 0.0
        %1231 = vmatpush1.msra.mxu0 0.0
        %1232 = vmatprep.subr.mxu0 0.0
        %1233 = vmatpush1.msra.mxu0 0.0
        %1234 = vmatprep.mubr.f32.mxu0 0.0
        %v1235 = vand.u32 %v863, 4294901760
        %v1236 = vsub.f32 %v863, %v1235
        %v1237 = vand.u32 %v1236, 4294901760
        %1238 = vmatmul.mubr.f32.gmra.mrb[0].mxu0 %v1237
        %v1239 = vpop.f32.mrb[0].mxu0
        %v1240 = vadd.f32 %v1145, %v1239
        %v1241 = vpop.f32.mrb[0].mxu0
        %1242 = vmatprep.mubr.f32.mxu0 0.0
        %v1243 = vand.u32 %v866, 4294901760
        %v1244 = vsub.f32 %v866, %v1243
        %v1245 = vand.u32 %v1244, 4294901760
        %1246 = vmatmul.mubr.f32.gmra.mrb[0].mxu0 %v1245
        %v1247 = vpop.f32.mrb[0].mxu0
        %v1248 = vadd.f32 %v1152, %v1247
        %v1249 = vpop.f32.mrb[0].mxu0
        %1250 = vmatprep.mubr.f32.mxu0 0.0
        %v1251 = vand.u32 %v869, 4294901760
        %v1252 = vsub.f32 %v869, %v1251
        %v1253 = vand.u32 %v1252, 4294901760
        %1254 = vmatmul.mubr.f32.gmra.mrb[0].mxu0 %v1253
        %v1255 = vpop.f32.mrb[0].mxu0
        %v1256 = vadd.f32 %v1159, %v1255
        %v1257 = vpop.f32.mrb[0].mxu0
        %1258 = vmatprep.mubr.f32.mxu0 0.0
        %v1259 = vand.u32 %v872, 4294901760
        %v1260 = vsub.f32 %v872, %v1259
        %v1261 = vand.u32 %v1260, 4294901760
        %1262 = vmatmul.mubr.f32.gmra.mrb[0].mxu0 %v1261
        %v1263 = vpop.f32.mrb[0].mxu0
        %v1264 = vadd.f32 %v1166, %v1263
        %v1265 = vpop.f32.mrb[0].mxu0
        %1266 = vdwg.mxu0
        %1267 = vmatprep.subr.mxu0 0.0
        %v1268 = vand.u32 %v264, 4294901760
        %v1269 = vsub.f32 %v264, %v1268
        %v1270 = vand.u32 %v1269, 4294901760
        %1271 = vmatpush1.msra.mxu0 %v1270
        %1272 = vmatprep.subr.mxu0 0.0
        %1273 = vmatpush1.msra.mxu0 0.0
        %1274 = vmatprep.subr.mxu0 0.0
        %1275 = vmatpush1.msra.mxu0 0.0
        %1276 = vmatprep.subr.mxu0 0.0
        %1277 = vmatpush1.msra.mxu0 0.0
        %1278 = vmatprep.subr.mxu0 0.0
        %1279 = vmatpush1.msra.mxu0 0.0
        %1280 = vmatprep.subr.mxu0 0.0
        %1281 = vmatpush1.msra.mxu0 0.0
        %1282 = vmatprep.subr.mxu0 0.0
        %1283 = vmatpush1.msra.mxu0 0.0
        %1284 = vmatprep.subr.mxu0 0.0
        %1285 = vmatpush1.msra.mxu0 0.0
        %1286 = vmatprep.subr.mxu0 0.0
        %1287 = vmatpush1.msra.mxu0 0.0
        %1288 = vmatprep.subr.mxu0 0.0
        %1289 = vmatpush1.msra.mxu0 0.0
        %1290 = vmatprep.subr.mxu0 0.0
        %1291 = vmatpush1.msra.mxu0 0.0
        %1292 = vmatprep.subr.mxu0 0.0
        %1293 = vmatpush1.msra.mxu0 0.0
        %1294 = vmatprep.subr.mxu0 0.0
        %1295 = vmatpush1.msra.mxu0 0.0
        %1296 = vmatprep.subr.mxu0 0.0
        %1297 = vmatpush1.msra.mxu0 0.0
        %1298 = vmatprep.subr.mxu0 0.0
        %1299 = vmatpush1.msra.mxu0 0.0
        %1300 = vmatprep.subr.mxu0 0.0
        %1301 = vmatpush1.msra.mxu0 0.0
        %1302 = vmatprep.subr.mxu0 0.0
        %1303 = vmatpush1.msra.mxu0 0.0
        %1304 = vmatprep.subr.mxu0 0.0
        %1305 = vmatpush1.msra.mxu0 0.0
        %1306 = vmatprep.subr.mxu0 0.0
        %1307 = vmatpush1.msra.mxu0 0.0
        %1308 = vmatprep.subr.mxu0 0.0
        %1309 = vmatpush1.msra.mxu0 0.0
        %1310 = vmatprep.subr.mxu0 0.0
        %1311 = vmatpush1.msra.mxu0 0.0
        %1312 = vmatprep.subr.mxu0 0.0
        %1313 = vmatpush1.msra.mxu0 0.0
        %1314 = vmatprep.subr.mxu0 0.0
        %1315 = vmatpush1.msra.mxu0 0.0
        %1316 = vmatprep.subr.mxu0 0.0
        %1317 = vmatpush1.msra.mxu0 0.0
        %1318 = vmatprep.subr.mxu0 0.0
        %1319 = vmatpush1.msra.mxu0 0.0
        %1320 = vmatprep.subr.mxu0 0.0
        %1321 = vmatpush1.msra.mxu0 0.0
        %1322 = vmatprep.subr.mxu0 0.0
        %1323 = vmatpush1.msra.mxu0 0.0
        %1324 = vmatprep.subr.mxu0 0.0
        %1325 = vmatpush1.msra.mxu0 0.0
        %1326 = vmatprep.subr.mxu0 0.0
        %1327 = vmatpush1.msra.mxu0 0.0
        %1328 = vmatprep.subr.mxu0 0.0
        %1329 = vmatpush1.msra.mxu0 0.0
        %1330 = vmatprep.subr.mxu0 0.0
        %1331 = vmatpush1.msra.mxu0 0.0
        %1332 = vmatprep.subr.mxu0 0.0
        %1333 = vmatpush1.msra.mxu0 0.0
        %1334 = vmatprep.mubr.f32.mxu0 0.0
        %v1335 = vand.u32 %v863, 4294901760
        %1336 = vmatmul.mubr.f32.gmra.mrb[0].mxu0 %v1335
        %v1337 = vpop.f32.mrb[0].mxu0
        %v1338 = vadd.f32 %v1240, %v1337
        %v1339 = vpop.f32.mrb[0].mxu0
        %1340 = vmatprep.mubr.f32.mxu0 0.0
        %v1341 = vand.u32 %v866, 4294901760
        %1342 = vmatmul.mubr.f32.gmra.mrb[0].mxu0 %v1341
        %v1343 = vpop.f32.mrb[0].mxu0
        %v1344 = vadd.f32 %v1248, %v1343
        %v1345 = vpop.f32.mrb[0].mxu0
        %1346 = vmatprep.mubr.f32.mxu0 0.0
        %v1347 = vand.u32 %v869, 4294901760
        %1348 = vmatmul.mubr.f32.gmra.mrb[0].mxu0 %v1347
        %v1349 = vpop.f32.mrb[0].mxu0
        %v1350 = vadd.f32 %v1256, %v1349
        %v1351 = vpop.f32.mrb[0].mxu0
        %1352 = vmatprep.mubr.f32.mxu0 0.0
        %v1353 = vand.u32 %v872, 4294901760
        %1354 = vmatmul.mubr.f32.gmra.mrb[0].mxu0 %v1353
        %v1355 = vpop.f32.mrb[0].mxu0
        %v1356 = vadd.f32 %v1264, %v1355
        %v1357 = vpop.f32.mrb[0].mxu0
        %1358 = vdwg.mxu0
        %1359 = vmatprep.subr.mxu0 0.0
        %v1360 = vand.u32 %v264, 4294901760
        %1361 = vmatpush1.msra.mxu0 %v1360
        %1362 = vmatprep.subr.mxu0 0.0
        %1363 = vmatpush1.msra.mxu0 0.0
        %1364 = vmatprep.subr.mxu0 0.0
        %1365 = vmatpush1.msra.mxu0 0.0
        %1366 = vmatprep.subr.mxu0 0.0
        %1367 = vmatpush1.msra.mxu0 0.0
        %1368 = vmatprep.subr.mxu0 0.0
        %1369 = vmatpush1.msra.mxu0 0.0
        %1370 = vmatprep.subr.mxu0 0.0
        %1371 = vmatpush1.msra.mxu0 0.0
        %1372 = vmatprep.subr.mxu0 0.0
        %1373 = vmatpush1.msra.mxu0 0.0
        %1374 = vmatprep.subr.mxu0 0.0
        %1375 = vmatpush1.msra.mxu0 0.0
        %1376 = vmatprep.subr.mxu0 0.0
        %1377 = vmatpush1.msra.mxu0 0.0
        %1378 = vmatprep.subr.mxu0 0.0
        %1379 = vmatpush1.msra.mxu0 0.0
        %1380 = vmatprep.subr.mxu0 0.0
        %1381 = vmatpush1.msra.mxu0 0.0
        %1382 = vmatprep.subr.mxu0 0.0
        %1383 = vmatpush1.msra.mxu0 0.0
        %1384 = vmatprep.subr.mxu0 0.0
        %1385 = vmatpush1.msra.mxu0 0.0
        %1386 = vmatprep.subr.mxu0 0.0
        %1387 = vmatpush1.msra.mxu0 0.0
        %1388 = vmatprep.subr.mxu0 0.0
        %1389 = vmatpush1.msra.mxu0 0.0
        %1390 = vmatprep.subr.mxu0 0.0
        %1391 = vmatpush1.msra.mxu0 0.0
        %1392 = vmatprep.subr.mxu0 0.0
        %1393 = vmatpush1.msra.mxu0 0.0
        %1394 = vmatprep.subr.mxu0 0.0
        %1395 = vmatpush1.msra.mxu0 0.0
        %1396 = vmatprep.subr.mxu0 0.0
        %1397 = vmatpush1.msra.mxu0 0.0
        %1398 = vmatprep.subr.mxu0 0.0
        %1399 = vmatpush1.msra.mxu0 0.0
        %1400 = vmatprep.subr.mxu0 0.0
        %1401 = vmatpush1.msra.mxu0 0.0
        %1402 = vmatprep.subr.mxu0 0.0
        %1403 = vmatpush1.msra.mxu0 0.0
        %1404 = vmatprep.subr.mxu0 0.0
        %1405 = vmatpush1.msra.mxu0 0.0
        %1406 = vmatprep.subr.mxu0 0.0
        %1407 = vmatpush1.msra.mxu0 0.0
        %1408 = vmatprep.subr.mxu0 0.0
        %1409 = vmatpush1.msra.mxu0 0.0
        %1410 = vmatprep.subr.mxu0 0.0
        %1411 = vmatpush1.msra.mxu0 0.0
        %1412 = vmatprep.subr.mxu0 0.0
        %1413 = vmatpush1.msra.mxu0 0.0
        %1414 = vmatprep.subr.mxu0 0.0
        %1415 = vmatpush1.msra.mxu0 0.0
        %1416 = vmatprep.subr.mxu0 0.0
        %1417 = vmatpush1.msra.mxu0 0.0
        %1418 = vmatprep.subr.mxu0 0.0
        %1419 = vmatpush1.msra.mxu0 0.0
        %1420 = vmatprep.subr.mxu0 0.0
        %1421 = vmatpush1.msra.mxu0 0.0
        %1422 = vmatprep.subr.mxu0 0.0
        %1423 = vmatpush1.msra.mxu0 0.0
        %1424 = vmatprep.mubr.f32.mxu0 0.0
        %v1425 = vand.u32 %v863, 4294901760
        %1426 = vmatmul.mubr.f32.gmra.mrb[0].mxu0 %v1425
        %v1427 = vpop.f32.mrb[0].mxu0
        %v1428 = vadd.f32 %v1338, %v1427
        %v1429 = vpop.f32.mrb[0].mxu0
        %1430 = vmatprep.mubr.f32.mxu0 0.0
        %v1431 = vand.u32 %v866, 4294901760
        %1432 = vmatmul.mubr.f32.gmra.mrb[0].mxu0 %v1431
        %v1433 = vpop.f32.mrb[0].mxu0
        %v1434 = vadd.f32 %v1344, %v1433
        %v1435 = vpop.f32.mrb[0].mxu0
        %1436 = vmatprep.mubr.f32.mxu0 0.0
        %v1437 = vand.u32 %v869, 4294901760
        %1438 = vmatmul.mubr.f32.gmra.mrb[0].mxu0 %v1437
        %v1439 = vpop.f32.mrb[0].mxu0
        %v1440 = vadd.f32 %v1350, %v1439
        %v1441 = vpop.f32.mrb[0].mxu0
        %1442 = vmatprep.mubr.f32.mxu0 0.0
        %v1443 = vand.u32 %v872, 4294901760
        %1444 = vmatmul.mubr.f32.gmra.mrb[0].mxu0 %v1443
        %v1445 = vpop.f32.mrb[0].mxu0
        %v1446 = vadd.f32 %v1356, %v1445
        %v1447 = vpop.f32.mrb[0].mxu0
        %1448 = vdwg.mxu0
        %1449 = vrot.lane.b32.xlu0 %v232, 127
        %v1450 = vpop.permute.xlu0 %1449
        %v1452 = vsel %vm257, 1, 0
        %vm1453 = vcmp.eq.s32.totalorder %v1452, 1
        %v1454 = vsel %vm1453, %v1450, 0.0
        %s1455 = scalar_lea.vmem %s2, 64
        %v1456 = vld [vmem:[%s1455] sm:$0xff]
        %v1457 = vld [vmem:[%s1455 + $0x8] sm:$0xff]
        %v1458 = vld [vmem:[%s1455 + $0x10] sm:$0xff]
        %v1459 = vld [vmem:[%s1455 + $0x18] sm:$0xff]
        %v1461 = vsel %vm274, %v1456, 0
        %v1464 = vsel %vm274, %v1457, 0
        %v1467 = vsel %vm274, %v1458, 0
        %v1470 = vsel %vm274, %v1459, 0
        %1472 = vmatprep.subr.mxu0 0.0
        %v1473 = vand.u32 %v1454, 4294901760
        %1474 = vmatpush1.msra.mxu0 %v1473
        %1475 = vmatprep.subr.mxu0 0.0
        %1476 = vmatpush1.msra.mxu0 0.0
        %1477 = vmatprep.subr.mxu0 0.0
        %1478 = vmatpush1.msra.mxu0 0.0
        %1479 = vmatprep.subr.mxu0 0.0
        %1480 = vmatpush1.msra.mxu0 0.0
        %1481 = vmatprep.subr.mxu0 0.0
        %1482 = vmatpush1.msra.mxu0 0.0
        %1483 = vmatprep.subr.mxu0 0.0
        %1484 = vmatpush1.msra.mxu0 0.0
        %1485 = vmatprep.subr.mxu0 0.0
        %1486 = vmatpush1.msra.mxu0 0.0
        %1487 = vmatprep.subr.mxu0 0.0
        %1488 = vmatpush1.msra.mxu0 0.0
        %1489 = vmatprep.subr.mxu0 0.0
        %1490 = vmatpush1.msra.mxu0 0.0
        %1491 = vmatprep.subr.mxu0 0.0
        %1492 = vmatpush1.msra.mxu0 0.0
        %1493 = vmatprep.subr.mxu0 0.0
        %1494 = vmatpush1.msra.mxu0 0.0
        %1495 = vmatprep.subr.mxu0 0.0
        %1496 = vmatpush1.msra.mxu0 0.0
        %1497 = vmatprep.subr.mxu0 0.0
        %1498 = vmatpush1.msra.mxu0 0.0
        %1499 = vmatprep.subr.mxu0 0.0
        %1500 = vmatpush1.msra.mxu0 0.0
        %1501 = vmatprep.subr.mxu0 0.0
        %1502 = vmatpush1.msra.mxu0 0.0
        %1503 = vmatprep.subr.mxu0 0.0
        %1504 = vmatpush1.msra.mxu0 0.0
        %1505 = vmatprep.subr.mxu0 0.0
        %1506 = vmatpush1.msra.mxu0 0.0
        %1507 = vmatprep.subr.mxu0 0.0
        %1508 = vmatpush1.msra.mxu0 0.0
        %1509 = vmatprep.subr.mxu0 0.0
        %1510 = vmatpush1.msra.mxu0 0.0
        %1511 = vmatprep.subr.mxu0 0.0
        %1512 = vmatpush1.msra.mxu0 0.0
        %1513 = vmatprep.subr.mxu0 0.0
        %1514 = vmatpush1.msra.mxu0 0.0
        %1515 = vmatprep.subr.mxu0 0.0
        %1516 = vmatpush1.msra.mxu0 0.0
        %1517 = vmatprep.subr.mxu0 0.0
        %1518 = vmatpush1.msra.mxu0 0.0
        %1519 = vmatprep.subr.mxu0 0.0
        %1520 = vmatpush1.msra.mxu0 0.0
        %1521 = vmatprep.subr.mxu0 0.0
        %1522 = vmatpush1.msra.mxu0 0.0
        %1523 = vmatprep.subr.mxu0 0.0
        %1524 = vmatpush1.msra.mxu0 0.0
        %1525 = vmatprep.subr.mxu0 0.0
        %1526 = vmatpush1.msra.mxu0 0.0
        %1527 = vmatprep.subr.mxu0 0.0
        %1528 = vmatpush1.msra.mxu0 0.0
        %1529 = vmatprep.subr.mxu0 0.0
        %1530 = vmatpush1.msra.mxu0 0.0
        %1531 = vmatprep.subr.mxu0 0.0
        %1532 = vmatpush1.msra.mxu0 0.0
        %1533 = vmatprep.subr.mxu0 0.0
        %1534 = vmatpush1.msra.mxu0 0.0
        %1535 = vmatprep.subr.mxu0 0.0
        %1536 = vmatpush1.msra.mxu0 0.0
        %1537 = vmatprep.mubr.f32.mxu0 0.0
        %v1538 = vand.u32 %v1461, 4294901760
        %v1539 = vsub.f32 %v1461, %v1538
        %v1540 = vand.u32 %v1539, 4294901760
        %v1541 = vsub.f32 %v1539, %v1540
        %v1542 = vand.u32 %v1541, 4294901760
        %1543 = vmatmul.mubr.f32.gmra.mrb[0].mxu0 %v1542
        %v1544 = vpop.f32.mrb[0].mxu0
        %v1545 = vadd.f32 0.0, %v1544
        %v1546 = vpop.f32.mrb[0].mxu0
        %1547 = vmatprep.mubr.f32.mxu0 0.0
        %v1548 = vand.u32 %v1464, 4294901760
        %v1549 = vsub.f32 %v1464, %v1548
        %v1550 = vand.u32 %v1549, 4294901760
        %v1551 = vsub.f32 %v1549, %v1550
        %v1552 = vand.u32 %v1551, 4294901760
        %1553 = vmatmul.mubr.f32.gmra.mrb[0].mxu0 %v1552
        %v1554 = vpop.f32.mrb[0].mxu0
        %v1555 = vadd.f32 0.0, %v1554
        %v1556 = vpop.f32.mrb[0].mxu0
        %1557 = vmatprep.mubr.f32.mxu0 0.0
        %v1558 = vand.u32 %v1467, 4294901760
        %v1559 = vsub.f32 %v1467, %v1558
        %v1560 = vand.u32 %v1559, 4294901760
        %v1561 = vsub.f32 %v1559, %v1560
        %v1562 = vand.u32 %v1561, 4294901760
        %1563 = vmatmul.mubr.f32.gmra.mrb[0].mxu0 %v1562
        %v1564 = vpop.f32.mrb[0].mxu0
        %v1565 = vadd.f32 0.0, %v1564
        %v1566 = vpop.f32.mrb[0].mxu0
        %1567 = vmatprep.mubr.f32.mxu0 0.0
        %v1568 = vand.u32 %v1470, 4294901760
        %v1569 = vsub.f32 %v1470, %v1568
        %v1570 = vand.u32 %v1569, 4294901760
        %v1571 = vsub.f32 %v1569, %v1570
        %v1572 = vand.u32 %v1571, 4294901760
        %1573 = vmatmul.mubr.f32.gmra.mrb[0].mxu0 %v1572
        %v1574 = vpop.f32.mrb[0].mxu0
        %v1575 = vadd.f32 0.0, %v1574
        %v1576 = vpop.f32.mrb[0].mxu0
        %1577 = vdwg.mxu0
        %1578 = vmatprep.subr.mxu0 0.0
        %v1579 = vand.u32 %v1454, 4294901760
        %v1580 = vsub.f32 %v1454, %v1579
        %v1581 = vand.u32 %v1580, 4294901760
        %v1582 = vsub.f32 %v1580, %v1581
        %v1583 = vand.u32 %v1582, 4294901760
        %1584 = vmatpush1.msra.mxu0 %v1583
        %1585 = vmatprep.subr.mxu0 0.0
        %1586 = vmatpush1.msra.mxu0 0.0
        %1587 = vmatprep.subr.mxu0 0.0
        %1588 = vmatpush1.msra.mxu0 0.0
        %1589 = vmatprep.subr.mxu0 0.0
        %1590 = vmatpush1.msra.mxu0 0.0
        %1591 = vmatprep.subr.mxu0 0.0
        %1592 = vmatpush1.msra.mxu0 0.0
        %1593 = vmatprep.subr.mxu0 0.0
        %1594 = vmatpush1.msra.mxu0 0.0
        %1595 = vmatprep.subr.mxu0 0.0
        %1596 = vmatpush1.msra.mxu0 0.0
        %1597 = vmatprep.subr.mxu0 0.0
        %1598 = vmatpush1.msra.mxu0 0.0
        %1599 = vmatprep.subr.mxu0 0.0
        %1600 = vmatpush1.msra.mxu0 0.0
        %1601 = vmatprep.subr.mxu0 0.0
        %1602 = vmatpush1.msra.mxu0 0.0
        %1603 = vmatprep.subr.mxu0 0.0
        %1604 = vmatpush1.msra.mxu0 0.0
        %1605 = vmatprep.subr.mxu0 0.0
        %1606 = vmatpush1.msra.mxu0 0.0
        %1607 = vmatprep.subr.mxu0 0.0
        %1608 = vmatpush1.msra.mxu0 0.0
        %1609 = vmatprep.subr.mxu0 0.0
        %1610 = vmatpush1.msra.mxu0 0.0
        %1611 = vmatprep.subr.mxu0 0.0
        %1612 = vmatpush1.msra.mxu0 0.0
        %1613 = vmatprep.subr.mxu0 0.0
        %1614 = vmatpush1.msra.mxu0 0.0
        %1615 = vmatprep.subr.mxu0 0.0
        %1616 = vmatpush1.msra.mxu0 0.0
        %1617 = vmatprep.subr.mxu0 0.0
        %1618 = vmatpush1.msra.mxu0 0.0
        %1619 = vmatprep.subr.mxu0 0.0
        %1620 = vmatpush1.msra.mxu0 0.0
        %1621 = vmatprep.subr.mxu0 0.0
        %1622 = vmatpush1.msra.mxu0 0.0
        %1623 = vmatprep.subr.mxu0 0.0
        %1624 = vmatpush1.msra.mxu0 0.0
        %1625 = vmatprep.subr.mxu0 0.0
        %1626 = vmatpush1.msra.mxu0 0.0
        %1627 = vmatprep.subr.mxu0 0.0
        %1628 = vmatpush1.msra.mxu0 0.0
        %1629 = vmatprep.subr.mxu0 0.0
        %1630 = vmatpush1.msra.mxu0 0.0
        %1631 = vmatprep.subr.mxu0 0.0
        %1632 = vmatpush1.msra.mxu0 0.0
        %1633 = vmatprep.subr.mxu0 0.0
        %1634 = vmatpush1.msra.mxu0 0.0
        %1635 = vmatprep.subr.mxu0 0.0
        %1636 = vmatpush1.msra.mxu0 0.0
        %1637 = vmatprep.subr.mxu0 0.0
        %1638 = vmatpush1.msra.mxu0 0.0
        %1639 = vmatprep.subr.mxu0 0.0
        %1640 = vmatpush1.msra.mxu0 0.0
        %1641 = vmatprep.subr.mxu0 0.0
        %1642 = vmatpush1.msra.mxu0 0.0
        %1643 = vmatprep.subr.mxu0 0.0
        %1644 = vmatpush1.msra.mxu0 0.0
        %1645 = vmatprep.subr.mxu0 0.0
        %1646 = vmatpush1.msra.mxu0 0.0
        %1647 = vmatprep.mubr.f32.mxu0 0.0
        %v1648 = vand.u32 %v1461, 4294901760
        %1649 = vmatmul.mubr.f32.gmra.mrb[0].mxu0 %v1648
        %v1650 = vpop.f32.mrb[0].mxu0
        %v1651 = vadd.f32 %v1545, %v1650
        %v1652 = vpop.f32.mrb[0].mxu0
        %1653 = vmatprep.mubr.f32.mxu0 0.0
        %v1654 = vand.u32 %v1464, 4294901760
        %1655 = vmatmul.mubr.f32.gmra.mrb[0].mxu0 %v1654
        %v1656 = vpop.f32.mrb[0].mxu0
        %v1657 = vadd.f32 %v1555, %v1656
        %v1658 = vpop.f32.mrb[0].mxu0
        %1659 = vmatprep.mubr.f32.mxu0 0.0
        %v1660 = vand.u32 %v1467, 4294901760
        %1661 = vmatmul.mubr.f32.gmra.mrb[0].mxu0 %v1660
        %v1662 = vpop.f32.mrb[0].mxu0
        %v1663 = vadd.f32 %v1565, %v1662
        %v1664 = vpop.f32.mrb[0].mxu0
        %1665 = vmatprep.mubr.f32.mxu0 0.0
        %v1666 = vand.u32 %v1470, 4294901760
        %1667 = vmatmul.mubr.f32.gmra.mrb[0].mxu0 %v1666
        %v1668 = vpop.f32.mrb[0].mxu0
        %v1669 = vadd.f32 %v1575, %v1668
        %v1670 = vpop.f32.mrb[0].mxu0
        %1671 = vdwg.mxu0
        %1672 = vmatprep.subr.mxu0 0.0
        %v1673 = vand.u32 %v1454, 4294901760
        %v1674 = vsub.f32 %v1454, %v1673
        %1675 = vmatpush1.msra.mxu0 %v1674
        %1676 = vmatprep.subr.mxu0 0.0
        %1677 = vmatpush1.msra.mxu0 0.0
        %1678 = vmatprep.subr.mxu0 0.0
        %1679 = vmatpush1.msra.mxu0 0.0
        %1680 = vmatprep.subr.mxu0 0.0
        %1681 = vmatpush1.msra.mxu0 0.0
        %1682 = vmatprep.subr.mxu0 0.0
        %1683 = vmatpush1.msra.mxu0 0.0
        %1684 = vmatprep.subr.mxu0 0.0
        %1685 = vmatpush1.msra.mxu0 0.0
        %1686 = vmatprep.subr.mxu0 0.0
        %1687 = vmatpush1.msra.mxu0 0.0
        %1688 = vmatprep.subr.mxu0 0.0
        %1689 = vmatpush1.msra.mxu0 0.0
        %1690 = vmatprep.subr.mxu0 0.0
        %1691 = vmatpush1.msra.mxu0 0.0
        %1692 = vmatprep.subr.mxu0 0.0
        %1693 = vmatpush1.msra.mxu0 0.0
        %1694 = vmatprep.subr.mxu0 0.0
        %1695 = vmatpush1.msra.mxu0 0.0
        %1696 = vmatprep.subr.mxu0 0.0
        %1697 = vmatpush1.msra.mxu0 0.0
        %1698 = vmatprep.subr.mxu0 0.0
        %1699 = vmatpush1.msra.mxu0 0.0
        %1700 = vmatprep.subr.mxu0 0.0
        %1701 = vmatpush1.msra.mxu0 0.0
        %1702 = vmatprep.subr.mxu0 0.0
        %1703 = vmatpush1.msra.mxu0 0.0
        %1704 = vmatprep.subr.mxu0 0.0
        %1705 = vmatpush1.msra.mxu0 0.0
        %1706 = vmatprep.subr.mxu0 0.0
        %1707 = vmatpush1.msra.mxu0 0.0
        %1708 = vmatprep.subr.mxu0 0.0
        %1709 = vmatpush1.msra.mxu0 0.0
        %1710 = vmatprep.subr.mxu0 0.0
        %1711 = vmatpush1.msra.mxu0 0.0
        %1712 = vmatprep.subr.mxu0 0.0
        %1713 = vmatpush1.msra.mxu0 0.0
        %1714 = vmatprep.subr.mxu0 0.0
        %1715 = vmatpush1.msra.mxu0 0.0
        %1716 = vmatprep.subr.mxu0 0.0
        %1717 = vmatpush1.msra.mxu0 0.0
        %1718 = vmatprep.subr.mxu0 0.0
        %1719 = vmatpush1.msra.mxu0 0.0
        %1720 = vmatprep.subr.mxu0 0.0
        %1721 = vmatpush1.msra.mxu0 0.0
        %1722 = vmatprep.subr.mxu0 0.0
        %1723 = vmatpush1.msra.mxu0 0.0
        %1724 = vmatprep.subr.mxu0 0.0
        %1725 = vmatpush1.msra.mxu0 0.0
        %1726 = vmatprep.subr.mxu0 0.0
        %1727 = vmatpush1.msra.mxu0 0.0
        %1728 = vmatprep.subr.mxu0 0.0
        %1729 = vmatpush1.msra.mxu0 0.0
        %1730 = vmatprep.subr.mxu0 0.0
        %1731 = vmatpush1.msra.mxu0 0.0
        %1732 = vmatprep.subr.mxu0 0.0
        %1733 = vmatpush1.msra.mxu0 0.0
        %1734 = vmatprep.subr.mxu0 0.0
        %1735 = vmatpush1.msra.mxu0 0.0
        %1736 = vmatprep.subr.mxu0 0.0
        %1737 = vmatpush1.msra.mxu0 0.0
        %1738 = vmatprep.mubr.f32.mxu0 0.0
        %v1739 = vand.u32 %v1461, 4294901760
        %v1740 = vsub.f32 %v1461, %v1739
        %1741 = vmatmul.mubr.f32.gmra.mrb[0].mxu0 %v1740
        %v1742 = vpop.f32.mrb[0].mxu0
        %v1743 = vadd.f32 %v1651, %v1742
        %v1744 = vpop.f32.mrb[0].mxu0
        %1745 = vmatprep.mubr.f32.mxu0 0.0
        %v1746 = vand.u32 %v1464, 4294901760
        %v1747 = vsub.f32 %v1464, %v1746
        %1748 = vmatmul.mubr.f32.gmra.mrb[0].mxu0 %v1747
        %v1749 = vpop.f32.mrb[0].mxu0
        %v1750 = vadd.f32 %v1657, %v1749
        %v1751 = vpop.f32.mrb[0].mxu0
        %1752 = vmatprep.mubr.f32.mxu0 0.0
        %v1753 = vand.u32 %v1467, 4294901760
        %v1754 = vsub.f32 %v1467, %v1753
        %1755 = vmatmul.mubr.f32.gmra.mrb[0].mxu0 %v1754
        %v1756 = vpop.f32.mrb[0].mxu0
        %v1757 = vadd.f32 %v1663, %v1756
        %v1758 = vpop.f32.mrb[0].mxu0
        %1759 = vmatprep.mubr.f32.mxu0 0.0
        %v1760 = vand.u32 %v1470, 4294901760
        %v1761 = vsub.f32 %v1470, %v1760
        %1762 = vmatmul.mubr.f32.gmra.mrb[0].mxu0 %v1761
        %v1763 = vpop.f32.mrb[0].mxu0
        %v1764 = vadd.f32 %v1669, %v1763
        %v1765 = vpop.f32.mrb[0].mxu0
        %1766 = vdwg.mxu0
        %1767 = vmatprep.subr.mxu0 0.0
        %v1768 = vand.u32 %v1454, 4294901760
        %1769 = vmatpush1.msra.mxu0 %v1768
        %1770 = vmatprep.subr.mxu0 0.0
        %1771 = vmatpush1.msra.mxu0 0.0
        %1772 = vmatprep.subr.mxu0 0.0
        %1773 = vmatpush1.msra.mxu0 0.0
        %1774 = vmatprep.subr.mxu0 0.0
        %1775 = vmatpush1.msra.mxu0 0.0
        %1776 = vmatprep.subr.mxu0 0.0
        %1777 = vmatpush1.msra.mxu0 0.0
        %1778 = vmatprep.subr.mxu0 0.0
        %1779 = vmatpush1.msra.mxu0 0.0
        %1780 = vmatprep.subr.mxu0 0.0
        %1781 = vmatpush1.msra.mxu0 0.0
        %1782 = vmatprep.subr.mxu0 0.0
        %1783 = vmatpush1.msra.mxu0 0.0
        %1784 = vmatprep.subr.mxu0 0.0
        %1785 = vmatpush1.msra.mxu0 0.0
        %1786 = vmatprep.subr.mxu0 0.0
        %1787 = vmatpush1.msra.mxu0 0.0
        %1788 = vmatprep.subr.mxu0 0.0
        %1789 = vmatpush1.msra.mxu0 0.0
        %1790 = vmatprep.subr.mxu0 0.0
        %1791 = vmatpush1.msra.mxu0 0.0
        %1792 = vmatprep.subr.mxu0 0.0
        %1793 = vmatpush1.msra.mxu0 0.0
        %1794 = vmatprep.subr.mxu0 0.0
        %1795 = vmatpush1.msra.mxu0 0.0
        %1796 = vmatprep.subr.mxu0 0.0
        %1797 = vmatpush1.msra.mxu0 0.0
        %1798 = vmatprep.subr.mxu0 0.0
        %1799 = vmatpush1.msra.mxu0 0.0
        %1800 = vmatprep.subr.mxu0 0.0
        %1801 = vmatpush1.msra.mxu0 0.0
        %1802 = vmatprep.subr.mxu0 0.0
        %1803 = vmatpush1.msra.mxu0 0.0
        %1804 = vmatprep.subr.mxu0 0.0
        %1805 = vmatpush1.msra.mxu0 0.0
        %1806 = vmatprep.subr.mxu0 0.0
        %1807 = vmatpush1.msra.mxu0 0.0
        %1808 = vmatprep.subr.mxu0 0.0
        %1809 = vmatpush1.msra.mxu0 0.0
        %1810 = vmatprep.subr.mxu0 0.0
        %1811 = vmatpush1.msra.mxu0 0.0
        %1812 = vmatprep.subr.mxu0 0.0
        %1813 = vmatpush1.msra.mxu0 0.0
        %1814 = vmatprep.subr.mxu0 0.0
        %1815 = vmatpush1.msra.mxu0 0.0
        %1816 = vmatprep.subr.mxu0 0.0
        %1817 = vmatpush1.msra.mxu0 0.0
        %1818 = vmatprep.subr.mxu0 0.0
        %1819 = vmatpush1.msra.mxu0 0.0
        %1820 = vmatprep.subr.mxu0 0.0
        %1821 = vmatpush1.msra.mxu0 0.0
        %1822 = vmatprep.subr.mxu0 0.0
        %1823 = vmatpush1.msra.mxu0 0.0
        %1824 = vmatprep.subr.mxu0 0.0
        %1825 = vmatpush1.msra.mxu0 0.0
        %1826 = vmatprep.subr.mxu0 0.0
        %1827 = vmatpush1.msra.mxu0 0.0
        %1828 = vmatprep.subr.mxu0 0.0
        %1829 = vmatpush1.msra.mxu0 0.0
        %1830 = vmatprep.subr.mxu0 0.0
        %1831 = vmatpush1.msra.mxu0 0.0
        %1832 = vmatprep.mubr.f32.mxu0 0.0
        %v1833 = vand.u32 %v1461, 4294901760
        %v1834 = vsub.f32 %v1461, %v1833
        %v1835 = vand.u32 %v1834, 4294901760
        %1836 = vmatmul.mubr.f32.gmra.mrb[0].mxu0 %v1835
        %v1837 = vpop.f32.mrb[0].mxu0
        %v1838 = vadd.f32 %v1743, %v1837
        %v1839 = vpop.f32.mrb[0].mxu0
        %1840 = vmatprep.mubr.f32.mxu0 0.0
        %v1841 = vand.u32 %v1464, 4294901760
        %v1842 = vsub.f32 %v1464, %v1841
        %v1843 = vand.u32 %v1842, 4294901760
        %1844 = vmatmul.mubr.f32.gmra.mrb[0].mxu0 %v1843
        %v1845 = vpop.f32.mrb[0].mxu0
        %v1846 = vadd.f32 %v1750, %v1845
        %v1847 = vpop.f32.mrb[0].mxu0
        %1848 = vmatprep.mubr.f32.mxu0 0.0
        %v1849 = vand.u32 %v1467, 4294901760
        %v1850 = vsub.f32 %v1467, %v1849
        %v1851 = vand.u32 %v1850, 4294901760
        %1852 = vmatmul.mubr.f32.gmra.mrb[0].mxu0 %v1851
        %v1853 = vpop.f32.mrb[0].mxu0
        %v1854 = vadd.f32 %v1757, %v1853
        %v1855 = vpop.f32.mrb[0].mxu0
        %1856 = vmatprep.mubr.f32.mxu0 0.0
        %v1857 = vand.u32 %v1470, 4294901760
        %v1858 = vsub.f32 %v1470, %v1857
        %v1859 = vand.u32 %v1858, 4294901760
        %1860 = vmatmul.mubr.f32.gmra.mrb[0].mxu0 %v1859
        %v1861 = vpop.f32.mrb[0].mxu0
        %v1862 = vadd.f32 %v1764, %v1861
        %v1863 = vpop.f32.mrb[0].mxu0
        %1864 = vdwg.mxu0
        %1865 = vmatprep.subr.mxu0 0.0
        %v1866 = vand.u32 %v1454, 4294901760
        %v1867 = vsub.f32 %v1454, %v1866
        %v1868 = vand.u32 %v1867, 4294901760
        %1869 = vmatpush1.msra.mxu0 %v1868
        %1870 = vmatprep.subr.mxu0 0.0
        %1871 = vmatpush1.msra.mxu0 0.0
        %1872 = vmatprep.subr.mxu0 0.0
        %1873 = vmatpush1.msra.mxu0 0.0
        %1874 = vmatprep.subr.mxu0 0.0
        %1875 = vmatpush1.msra.mxu0 0.0
        %1876 = vmatprep.subr.mxu0 0.0
        %1877 = vmatpush1.msra.mxu0 0.0
        %1878 = vmatprep.subr.mxu0 0.0
        %1879 = vmatpush1.msra.mxu0 0.0
        %1880 = vmatprep.subr.mxu0 0.0
        %1881 = vmatpush1.msra.mxu0 0.0
        %1882 = vmatprep.subr.mxu0 0.0
        %1883 = vmatpush1.msra.mxu0 0.0
        %1884 = vmatprep.subr.mxu0 0.0
        %1885 = vmatpush1.msra.mxu0 0.0
        %1886 = vmatprep.subr.mxu0 0.0
        %1887 = vmatpush1.msra.mxu0 0.0
        %1888 = vmatprep.subr.mxu0 0.0
        %1889 = vmatpush1.msra.mxu0 0.0
        %1890 = vmatprep.subr.mxu0 0.0
        %1891 = vmatpush1.msra.mxu0 0.0
        %1892 = vmatprep.subr.mxu0 0.0
        %1893 = vmatpush1.msra.mxu0 0.0
        %1894 = vmatprep.subr.mxu0 0.0
        %1895 = vmatpush1.msra.mxu0 0.0
        %1896 = vmatprep.subr.mxu0 0.0
        %1897 = vmatpush1.msra.mxu0 0.0
        %1898 = vmatprep.subr.mxu0 0.0
        %1899 = vmatpush1.msra.mxu0 0.0
        %1900 = vmatprep.subr.mxu0 0.0
        %1901 = vmatpush1.msra.mxu0 0.0
        %1902 = vmatprep.subr.mxu0 0.0
        %1903 = vmatpush1.msra.mxu0 0.0
        %1904 = vmatprep.subr.mxu0 0.0
        %1905 = vmatpush1.msra.mxu0 0.0
        %1906 = vmatprep.subr.mxu0 0.0
        %1907 = vmatpush1.msra.mxu0 0.0
        %1908 = vmatprep.subr.mxu0 0.0
        %1909 = vmatpush1.msra.mxu0 0.0
        %1910 = vmatprep.subr.mxu0 0.0
        %1911 = vmatpush1.msra.mxu0 0.0
        %1912 = vmatprep.subr.mxu0 0.0
        %1913 = vmatpush1.msra.mxu0 0.0
        %1914 = vmatprep.subr.mxu0 0.0
        %1915 = vmatpush1.msra.mxu0 0.0
        %1916 = vmatprep.subr.mxu0 0.0
        %1917 = vmatpush1.msra.mxu0 0.0
        %1918 = vmatprep.subr.mxu0 0.0
        %1919 = vmatpush1.msra.mxu0 0.0
        %1920 = vmatprep.subr.mxu0 0.0
        %1921 = vmatpush1.msra.mxu0 0.0
        %1922 = vmatprep.subr.mxu0 0.0
        %1923 = vmatpush1.msra.mxu0 0.0
        %1924 = vmatprep.subr.mxu0 0.0
        %1925 = vmatpush1.msra.mxu0 0.0
        %1926 = vmatprep.subr.mxu0 0.0
        %1927 = vmatpush1.msra.mxu0 0.0
        %1928 = vmatprep.subr.mxu0 0.0
        %1929 = vmatpush1.msra.mxu0 0.0
        %1930 = vmatprep.subr.mxu0 0.0
        %1931 = vmatpush1.msra.mxu0 0.0
        %1932 = vmatprep.mubr.f32.mxu0 0.0
        %v1933 = vand.u32 %v1461, 4294901760
        %1934 = vmatmul.mubr.f32.gmra.mrb[0].mxu0 %v1933
        %v1935 = vpop.f32.mrb[0].mxu0
        %v1936 = vadd.f32 %v1838, %v1935
        %v1937 = vpop.f32.mrb[0].mxu0
        %1938 = vmatprep.mubr.f32.mxu0 0.0
        %v1939 = vand.u32 %v1464, 4294901760
        %1940 = vmatmul.mubr.f32.gmra.mrb[0].mxu0 %v1939
        %v1941 = vpop.f32.mrb[0].mxu0
        %v1942 = vadd.f32 %v1846, %v1941
        %v1943 = vpop.f32.mrb[0].mxu0
        %1944 = vmatprep.mubr.f32.mxu0 0.0
        %v1945 = vand.u32 %v1467, 4294901760
        %1946 = vmatmul.mubr.f32.gmra.mrb[0].mxu0 %v1945
        %v1947 = vpop.f32.mrb[0].mxu0
        %v1948 = vadd.f32 %v1854, %v1947
        %v1949 = vpop.f32.mrb[0].mxu0
        %1950 = vmatprep.mubr.f32.mxu0 0.0
        %v1951 = vand.u32 %v1470, 4294901760
        %1952 = vmatmul.mubr.f32.gmra.mrb[0].mxu0 %v1951
        %v1953 = vpop.f32.mrb[0].mxu0
        %v1954 = vadd.f32 %v1862, %v1953
        %v1955 = vpop.f32.mrb[0].mxu0
        %1956 = vdwg.mxu0
        %1957 = vmatprep.subr.mxu0 0.0
        %v1958 = vand.u32 %v1454, 4294901760
        %1959 = vmatpush1.msra.mxu0 %v1958
        %1960 = vmatprep.subr.mxu0 0.0
        %1961 = vmatpush1.msra.mxu0 0.0
        %1962 = vmatprep.subr.mxu0 0.0
        %1963 = vmatpush1.msra.mxu0 0.0
        %1964 = vmatprep.subr.mxu0 0.0
        %1965 = vmatpush1.msra.mxu0 0.0
        %1966 = vmatprep.subr.mxu0 0.0
        %1967 = vmatpush1.msra.mxu0 0.0
        %1968 = vmatprep.subr.mxu0 0.0
        %1969 = vmatpush1.msra.mxu0 0.0
        %1970 = vmatprep.subr.mxu0 0.0
        %1971 = vmatpush1.msra.mxu0 0.0
        %1972 = vmatprep.subr.mxu0 0.0
        %1973 = vmatpush1.msra.mxu0 0.0
        %1974 = vmatprep.subr.mxu0 0.0
        %1975 = vmatpush1.msra.mxu0 0.0
        %1976 = vmatprep.subr.mxu0 0.0
        %1977 = vmatpush1.msra.mxu0 0.0
        %1978 = vmatprep.subr.mxu0 0.0
        %1979 = vmatpush1.msra.mxu0 0.0
        %1980 = vmatprep.subr.mxu0 0.0
        %1981 = vmatpush1.msra.mxu0 0.0
        %1982 = vmatprep.subr.mxu0 0.0
        %1983 = vmatpush1.msra.mxu0 0.0
        %1984 = vmatprep.subr.mxu0 0.0
        %1985 = vmatpush1.msra.mxu0 0.0
        %1986 = vmatprep.subr.mxu0 0.0
        %1987 = vmatpush1.msra.mxu0 0.0
        %1988 = vmatprep.subr.mxu0 0.0
        %1989 = vmatpush1.msra.mxu0 0.0
        %1990 = vmatprep.subr.mxu0 0.0
        %1991 = vmatpush1.msra.mxu0 0.0
        %1992 = vmatprep.subr.mxu0 0.0
        %1993 = vmatpush1.msra.mxu0 0.0
        %1994 = vmatprep.subr.mxu0 0.0
        %1995 = vmatpush1.msra.mxu0 0.0
        %1996 = vmatprep.subr.mxu0 0.0
        %1997 = vmatpush1.msra.mxu0 0.0
        %1998 = vmatprep.subr.mxu0 0.0
        %1999 = vmatpush1.msra.mxu0 0.0
        %2000 = vmatprep.subr.mxu0 0.0
        %2001 = vmatpush1.msra.mxu0 0.0
        %2002 = vmatprep.subr.mxu0 0.0
        %2003 = vmatpush1.msra.mxu0 0.0
        %2004 = vmatprep.subr.mxu0 0.0
        %2005 = vmatpush1.msra.mxu0 0.0
        %2006 = vmatprep.subr.mxu0 0.0
        %2007 = vmatpush1.msra.mxu0 0.0
        %2008 = vmatprep.subr.mxu0 0.0
        %2009 = vmatpush1.msra.mxu0 0.0
        %2010 = vmatprep.subr.mxu0 0.0
        %2011 = vmatpush1.msra.mxu0 0.0
        %2012 = vmatprep.subr.mxu0 0.0
        %2013 = vmatpush1.msra.mxu0 0.0
        %2014 = vmatprep.subr.mxu0 0.0
        %2015 = vmatpush1.msra.mxu0 0.0
        %2016 = vmatprep.subr.mxu0 0.0
        %2017 = vmatpush1.msra.mxu0 0.0
        %2018 = vmatprep.subr.mxu0 0.0
        %2019 = vmatpush1.msra.mxu0 0.0
        %2020 = vmatprep.subr.mxu0 0.0
        %2021 = vmatpush1.msra.mxu0 0.0
        %2022 = vmatprep.mubr.f32.mxu0 0.0
        %v2023 = vand.u32 %v1461, 4294901760
        %2024 = vmatmul.mubr.f32.gmra.mrb[0].mxu0 %v2023
        %v2025 = vpop.f32.mrb[0].mxu0
        %v2026 = vadd.f32 %v1936, %v2025
        %v2027 = vpop.f32.mrb[0].mxu0
        %2028 = vmatprep.mubr.f32.mxu0 0.0
        %v2029 = vand.u32 %v1464, 4294901760
        %2030 = vmatmul.mubr.f32.gmra.mrb[0].mxu0 %v2029
        %v2031 = vpop.f32.mrb[0].mxu0
        %v2032 = vadd.f32 %v1942, %v2031
        %v2033 = vpop.f32.mrb[0].mxu0
        %2034 = vmatprep.mubr.f32.mxu0 0.0
        %v2035 = vand.u32 %v1467, 4294901760
        %2036 = vmatmul.mubr.f32.gmra.mrb[0].mxu0 %v2035
        %v2037 = vpop.f32.mrb[0].mxu0
        %v2038 = vadd.f32 %v1948, %v2037
        %v2039 = vpop.f32.mrb[0].mxu0
        %2040 = vmatprep.mubr.f32.mxu0 0.0
        %v2041 = vand.u32 %v1470, 4294901760
        %2042 = vmatmul.mubr.f32.gmra.mrb[0].mxu0 %v2041
        %v2043 = vpop.f32.mrb[0].mxu0
        %v2044 = vadd.f32 %v1954, %v2043
        %v2045 = vpop.f32.mrb[0].mxu0
        %2046 = vdwg.mxu0
        %v2047 = vadd.f32 %v1428, %v2026
        %v2048 = vadd.f32 %v1434, %v2032
        %v2049 = vadd.f32 %v1440, %v2038
        %v2050 = vadd.f32 %v1446, %v2044
        %2051 = vrot.lane.b32.xlu0 %v224, 1
        %v2052 = vpop.permute.xlu0 %2051
        %v2054 = vsel %vm263, %v2052, 0.0
        %s2055 = scalar_lea.vmem %s2, 96
        %v2056 = vld [vmem:[%s2055] sm:$0xff]
        %v2057 = vld [vmem:[%s2055 + $0x8] sm:$0xff]
        %v2058 = vld [vmem:[%s2055 + $0x10] sm:$0xff]
        %v2059 = vld [vmem:[%s2055 + $0x18] sm:$0xff]
        %v2061 = vsel %vm274, %v2056, 0
        %v2064 = vsel %vm274, %v2057, 0
        %v2067 = vsel %vm274, %v2058, 0
        %v2070 = vsel %vm274, %v2059, 0
        %2072 = vmatprep.subr.mxu0 0.0
        %v2073 = vand.u32 %v2054, 4294901760
        %2074 = vmatpush1.msra.mxu0 %v2073
        %2075 = vmatprep.subr.mxu0 0.0
        %2076 = vmatpush1.msra.mxu0 0.0
        %2077 = vmatprep.subr.mxu0 0.0
        %2078 = vmatpush1.msra.mxu0 0.0
        %2079 = vmatprep.subr.mxu0 0.0
        %2080 = vmatpush1.msra.mxu0 0.0
        %2081 = vmatprep.subr.mxu0 0.0
        %2082 = vmatpush1.msra.mxu0 0.0
        %2083 = vmatprep.subr.mxu0 0.0
        %2084 = vmatpush1.msra.mxu0 0.0
        %2085 = vmatprep.subr.mxu0 0.0
        %2086 = vmatpush1.msra.mxu0 0.0
        %2087 = vmatprep.subr.mxu0 0.0
        %2088 = vmatpush1.msra.mxu0 0.0
        %2089 = vmatprep.subr.mxu0 0.0
        %2090 = vmatpush1.msra.mxu0 0.0
        %2091 = vmatprep.subr.mxu0 0.0
        %2092 = vmatpush1.msra.mxu0 0.0
        %2093 = vmatprep.subr.mxu0 0.0
        %2094 = vmatpush1.msra.mxu0 0.0
        %2095 = vmatprep.subr.mxu0 0.0
        %2096 = vmatpush1.msra.mxu0 0.0
        %2097 = vmatprep.subr.mxu0 0.0
        %2098 = vmatpush1.msra.mxu0 0.0
        %2099 = vmatprep.subr.mxu0 0.0
        %2100 = vmatpush1.msra.mxu0 0.0
        %2101 = vmatprep.subr.mxu0 0.0
        %2102 = vmatpush1.msra.mxu0 0.0
        %2103 = vmatprep.subr.mxu0 0.0
        %2104 = vmatpush1.msra.mxu0 0.0
        %2105 = vmatprep.subr.mxu0 0.0
        %2106 = vmatpush1.msra.mxu0 0.0
        %2107 = vmatprep.subr.mxu0 0.0
        %2108 = vmatpush1.msra.mxu0 0.0
        %2109 = vmatprep.subr.mxu0 0.0
        %2110 = vmatpush1.msra.mxu0 0.0
        %2111 = vmatprep.subr.mxu0 0.0
        %2112 = vmatpush1.msra.mxu0 0.0
        %2113 = vmatprep.subr.mxu0 0.0
        %2114 = vmatpush1.msra.mxu0 0.0
        %2115 = vmatprep.subr.mxu0 0.0
        %2116 = vmatpush1.msra.mxu0 0.0
        %2117 = vmatprep.subr.mxu0 0.0
        %2118 = vmatpush1.msra.mxu0 0.0
        %2119 = vmatprep.subr.mxu0 0.0
        %2120 = vmatpush1.msra.mxu0 0.0
        %2121 = vmatprep.subr.mxu0 0.0
        %2122 = vmatpush1.msra.mxu0 0.0
        %2123 = vmatprep.subr.mxu0 0.0
        %2124 = vmatpush1.msra.mxu0 0.0
        %2125 = vmatprep.subr.mxu0 0.0
        %2126 = vmatpush1.msra.mxu0 0.0
        %2127 = vmatprep.subr.mxu0 0.0
        %2128 = vmatpush1.msra.mxu0 0.0
        %2129 = vmatprep.subr.mxu0 0.0
        %2130 = vmatpush1.msra.mxu0 0.0
        %2131 = vmatprep.subr.mxu0 0.0
        %2132 = vmatpush1.msra.mxu0 0.0
        %2133 = vmatprep.subr.mxu0 0.0
        %2134 = vmatpush1.msra.mxu0 0.0
        %2135 = vmatprep.subr.mxu0 0.0
        %2136 = vmatpush1.msra.mxu0 0.0
        %2137 = vmatprep.mubr.f32.mxu0 0.0
        %v2138 = vand.u32 %v2061, 4294901760
        %v2139 = vsub.f32 %v2061, %v2138
        %v2140 = vand.u32 %v2139, 4294901760
        %v2141 = vsub.f32 %v2139, %v2140
        %v2142 = vand.u32 %v2141, 4294901760
        %2143 = vmatmul.mubr.f32.gmra.mrb[0].mxu0 %v2142
        %v2144 = vpop.f32.mrb[0].mxu0
        %v2145 = vadd.f32 0.0, %v2144
        %v2146 = vpop.f32.mrb[0].mxu0
        %2147 = vmatprep.mubr.f32.mxu0 0.0
        %v2148 = vand.u32 %v2064, 4294901760
        %v2149 = vsub.f32 %v2064, %v2148
        %v2150 = vand.u32 %v2149, 4294901760
        %v2151 = vsub.f32 %v2149, %v2150
        %v2152 = vand.u32 %v2151, 4294901760
        %2153 = vmatmul.mubr.f32.gmra.mrb[0].mxu0 %v2152
        %v2154 = vpop.f32.mrb[0].mxu0
        %v2155 = vadd.f32 0.0, %v2154
        %v2156 = vpop.f32.mrb[0].mxu0
        %2157 = vmatprep.mubr.f32.mxu0 0.0
        %v2158 = vand.u32 %v2067, 4294901760
        %v2159 = vsub.f32 %v2067, %v2158
        %v2160 = vand.u32 %v2159, 4294901760
        %v2161 = vsub.f32 %v2159, %v2160
        %v2162 = vand.u32 %v2161, 4294901760
        %2163 = vmatmul.mubr.f32.gmra.mrb[0].mxu0 %v2162
        %v2164 = vpop.f32.mrb[0].mxu0
        %v2165 = vadd.f32 0.0, %v2164
        %v2166 = vpop.f32.mrb[0].mxu0
        %2167 = vmatprep.mubr.f32.mxu0 0.0
        %v2168 = vand.u32 %v2070, 4294901760
        %v2169 = vsub.f32 %v2070, %v2168
        %v2170 = vand.u32 %v2169, 4294901760
        %v2171 = vsub.f32 %v2169, %v2170
        %v2172 = vand.u32 %v2171, 4294901760
        %2173 = vmatmul.mubr.f32.gmra.mrb[0].mxu0 %v2172
        %v2174 = vpop.f32.mrb[0].mxu0
        %v2175 = vadd.f32 0.0, %v2174
        %v2176 = vpop.f32.mrb[0].mxu0
        %2177 = vdwg.mxu0
        %2178 = vmatprep.subr.mxu0 0.0
        %v2179 = vand.u32 %v2054, 4294901760
        %v2180 = vsub.f32 %v2054, %v2179
        %v2181 = vand.u32 %v2180, 4294901760
        %v2182 = vsub.f32 %v2180, %v2181
        %v2183 = vand.u32 %v2182, 4294901760
        %2184 = vmatpush1.msra.mxu0 %v2183
        %2185 = vmatprep.subr.mxu0 0.0
        %2186 = vmatpush1.msra.mxu0 0.0
        %2187 = vmatprep.subr.mxu0 0.0
        %2188 = vmatpush1.msra.mxu0 0.0
        %2189 = vmatprep.subr.mxu0 0.0
        %2190 = vmatpush1.msra.mxu0 0.0
        %2191 = vmatprep.subr.mxu0 0.0
        %2192 = vmatpush1.msra.mxu0 0.0
        %2193 = vmatprep.subr.mxu0 0.0
        %2194 = vmatpush1.msra.mxu0 0.0
        %2195 = vmatprep.subr.mxu0 0.0
        %2196 = vmatpush1.msra.mxu0 0.0
        %2197 = vmatprep.subr.mxu0 0.0
        %2198 = vmatpush1.msra.mxu0 0.0
        %2199 = vmatprep.subr.mxu0 0.0
        %2200 = vmatpush1.msra.mxu0 0.0
        %2201 = vmatprep.subr.mxu0 0.0
        %2202 = vmatpush1.msra.mxu0 0.0
        %2203 = vmatprep.subr.mxu0 0.0
        %2204 = vmatpush1.msra.mxu0 0.0
        %2205 = vmatprep.subr.mxu0 0.0
        %2206 = vmatpush1.msra.mxu0 0.0
        %2207 = vmatprep.subr.mxu0 0.0
        %2208 = vmatpush1.msra.mxu0 0.0
        %2209 = vmatprep.subr.mxu0 0.0
        %2210 = vmatpush1.msra.mxu0 0.0
        %2211 = vmatprep.subr.mxu0 0.0
        %2212 = vmatpush1.msra.mxu0 0.0
        %2213 = vmatprep.subr.mxu0 0.0
        %2214 = vmatpush1.msra.mxu0 0.0
        %2215 = vmatprep.subr.mxu0 0.0
        %2216 = vmatpush1.msra.mxu0 0.0
        %2217 = vmatprep.subr.mxu0 0.0
        %2218 = vmatpush1.msra.mxu0 0.0
        %2219 = vmatprep.subr.mxu0 0.0
        %2220 = vmatpush1.msra.mxu0 0.0
        %2221 = vmatprep.subr.mxu0 0.0
        %2222 = vmatpush1.msra.mxu0 0.0
        %2223 = vmatprep.subr.mxu0 0.0
        %2224 = vmatpush1.msra.mxu0 0.0
        %2225 = vmatprep.subr.mxu0 0.0
        %2226 = vmatpush1.msra.mxu0 0.0
        %2227 = vmatprep.subr.mxu0 0.0
        %2228 = vmatpush1.msra.mxu0 0.0
        %2229 = vmatprep.subr.mxu0 0.0
        %2230 = vmatpush1.msra.mxu0 0.0
        %2231 = vmatprep.subr.mxu0 0.0
        %2232 = vmatpush1.msra.mxu0 0.0
        %2233 = vmatprep.subr.mxu0 0.0
        %2234 = vmatpush1.msra.mxu0 0.0
        %2235 = vmatprep.subr.mxu0 0.0
        %2236 = vmatpush1.msra.mxu0 0.0
        %2237 = vmatprep.subr.mxu0 0.0
        %2238 = vmatpush1.msra.mxu0 0.0
        %2239 = vmatprep.subr.mxu0 0.0
        %2240 = vmatpush1.msra.mxu0 0.0
        %2241 = vmatprep.subr.mxu0 0.0
        %2242 = vmatpush1.msra.mxu0 0.0
        %2243 = vmatprep.subr.mxu0 0.0
        %2244 = vmatpush1.msra.mxu0 0.0
        %2245 = vmatprep.subr.mxu0 0.0
        %2246 = vmatpush1.msra.mxu0 0.0
        %2247 = vmatprep.mubr.f32.mxu0 0.0
        %v2248 = vand.u32 %v2061, 4294901760
        %2249 = vmatmul.mubr.f32.gmra.mrb[0].mxu0 %v2248
        %v2250 = vpop.f32.mrb[0].mxu0
        %v2251 = vadd.f32 %v2145, %v2250
        %v2252 = vpop.f32.mrb[0].mxu0
        %2253 = vmatprep.mubr.f32.mxu0 0.0
        %v2254 = vand.u32 %v2064, 4294901760
        %2255 = vmatmul.mubr.f32.gmra.mrb[0].mxu0 %v2254
        %v2256 = vpop.f32.mrb[0].mxu0
        %v2257 = vadd.f32 %v2155, %v2256
        %v2258 = vpop.f32.mrb[0].mxu0
        %2259 = vmatprep.mubr.f32.mxu0 0.0
        %v2260 = vand.u32 %v2067, 4294901760
        %2261 = vmatmul.mubr.f32.gmra.mrb[0].mxu0 %v2260
        %v2262 = vpop.f32.mrb[0].mxu0
        %v2263 = vadd.f32 %v2165, %v2262
        %v2264 = vpop.f32.mrb[0].mxu0
        %2265 = vmatprep.mubr.f32.mxu0 0.0
        %v2266 = vand.u32 %v2070, 4294901760
        %2267 = vmatmul.mubr.f32.gmra.mrb[0].mxu0 %v2266
        %v2268 = vpop.f32.mrb[0].mxu0
        %v2269 = vadd.f32 %v2175, %v2268
        %v2270 = vpop.f32.mrb[0].mxu0
        %2271 = vdwg.mxu0
        %2272 = vmatprep.subr.mxu0 0.0
        %v2273 = vand.u32 %v2054, 4294901760
        %v2274 = vsub.f32 %v2054, %v2273
        %2275 = vmatpush1.msra.mxu0 %v2274
        %2276 = vmatprep.subr.mxu0 0.0
        %2277 = vmatpush1.msra.mxu0 0.0
        %2278 = vmatprep.subr.mxu0 0.0
        %2279 = vmatpush1.msra.mxu0 0.0
        %2280 = vmatprep.subr.mxu0 0.0
        %2281 = vmatpush1.msra.mxu0 0.0
        %2282 = vmatprep.subr.mxu0 0.0
        %2283 = vmatpush1.msra.mxu0 0.0
        %2284 = vmatprep.subr.mxu0 0.0
        %2285 = vmatpush1.msra.mxu0 0.0
        %2286 = vmatprep.subr.mxu0 0.0
        %2287 = vmatpush1.msra.mxu0 0.0
        %2288 = vmatprep.subr.mxu0 0.0
        %2289 = vmatpush1.msra.mxu0 0.0
        %2290 = vmatprep.subr.mxu0 0.0
        %2291 = vmatpush1.msra.mxu0 0.0
        %2292 = vmatprep.subr.mxu0 0.0
        %2293 = vmatpush1.msra.mxu0 0.0
        %2294 = vmatprep.subr.mxu0 0.0
        %2295 = vmatpush1.msra.mxu0 0.0
        %2296 = vmatprep.subr.mxu0 0.0
        %2297 = vmatpush1.msra.mxu0 0.0
        %2298 = vmatprep.subr.mxu0 0.0
        %2299 = vmatpush1.msra.mxu0 0.0
        %2300 = vmatprep.subr.mxu0 0.0
        %2301 = vmatpush1.msra.mxu0 0.0
        %2302 = vmatprep.subr.mxu0 0.0
        %2303 = vmatpush1.msra.mxu0 0.0
        %2304 = vmatprep.subr.mxu0 0.0
        %2305 = vmatpush1.msra.mxu0 0.0
        %2306 = vmatprep.subr.mxu0 0.0
        %2307 = vmatpush1.msra.mxu0 0.0
        %2308 = vmatprep.subr.mxu0 0.0
        %2309 = vmatpush1.msra.mxu0 0.0
        %2310 = vmatprep.subr.mxu0 0.0
        %2311 = vmatpush1.msra.mxu0 0.0
        %2312 = vmatprep.subr.mxu0 0.0
        %2313 = vmatpush1.msra.mxu0 0.0
        %2314 = vmatprep.subr.mxu0 0.0
        %2315 = vmatpush1.msra.mxu0 0.0
        %2316 = vmatprep.subr.mxu0 0.0
        %2317 = vmatpush1.msra.mxu0 0.0
        %2318 = vmatprep.subr.mxu0 0.0
        %2319 = vmatpush1.msra.mxu0 0.0
        %2320 = vmatprep.subr.mxu0 0.0
        %2321 = vmatpush1.msra.mxu0 0.0
        %2322 = vmatprep.subr.mxu0 0.0
        %2323 = vmatpush1.msra.mxu0 0.0
        %2324 = vmatprep.subr.mxu0 0.0
        %2325 = vmatpush1.msra.mxu0 0.0
        %2326 = vmatprep.subr.mxu0 0.0
        %2327 = vmatpush1.msra.mxu0 0.0
        %2328 = vmatprep.subr.mxu0 0.0
        %2329 = vmatpush1.msra.mxu0 0.0
        %2330 = vmatprep.subr.mxu0 0.0
        %2331 = vmatpush1.msra.mxu0 0.0
        %2332 = vmatprep.subr.mxu0 0.0
        %2333 = vmatpush1.msra.mxu0 0.0
        %2334 = vmatprep.subr.mxu0 0.0
        %2335 = vmatpush1.msra.mxu0 0.0
        %2336 = vmatprep.subr.mxu0 0.0
        %2337 = vmatpush1.msra.mxu0 0.0
        %2338 = vmatprep.mubr.f32.mxu0 0.0
        %v2339 = vand.u32 %v2061, 4294901760
        %v2340 = vsub.f32 %v2061, %v2339
        %2341 = vmatmul.mubr.f32.gmra.mrb[0].mxu0 %v2340
        %v2342 = vpop.f32.mrb[0].mxu0
        %v2343 = vadd.f32 %v2251, %v2342
        %v2344 = vpop.f32.mrb[0].mxu0
        %2345 = vmatprep.mubr.f32.mxu0 0.0
        %v2346 = vand.u32 %v2064, 4294901760
        %v2347 = vsub.f32 %v2064, %v2346
        %2348 = vmatmul.mubr.f32.gmra.mrb[0].mxu0 %v2347
        %v2349 = vpop.f32.mrb[0].mxu0
        %v2350 = vadd.f32 %v2257, %v2349
        %v2351 = vpop.f32.mrb[0].mxu0
        %2352 = vmatprep.mubr.f32.mxu0 0.0
        %v2353 = vand.u32 %v2067, 4294901760
        %v2354 = vsub.f32 %v2067, %v2353
        %2355 = vmatmul.mubr.f32.gmra.mrb[0].mxu0 %v2354
        %v2356 = vpop.f32.mrb[0].mxu0
        %v2357 = vadd.f32 %v2263, %v2356
        %v2358 = vpop.f32.mrb[0].mxu0
        %2359 = vmatprep.mubr.f32.mxu0 0.0
        %v2360 = vand.u32 %v2070, 4294901760
        %v2361 = vsub.f32 %v2070, %v2360
        %2362 = vmatmul.mubr.f32.gmra.mrb[0].mxu0 %v2361
        %v2363 = vpop.f32.mrb[0].mxu0
        %v2364 = vadd.f32 %v2269, %v2363
        %v2365 = vpop.f32.mrb[0].mxu0
        %2366 = vdwg.mxu0
        %2367 = vmatprep.subr.mxu0 0.0
        %v2368 = vand.u32 %v2054, 4294901760
        %2369 = vmatpush1.msra.mxu0 %v2368
        %2370 = vmatprep.subr.mxu0 0.0
        %2371 = vmatpush1.msra.mxu0 0.0
        %2372 = vmatprep.subr.mxu0 0.0
        %2373 = vmatpush1.msra.mxu0 0.0
        %2374 = vmatprep.subr.mxu0 0.0
        %2375 = vmatpush1.msra.mxu0 0.0
        %2376 = vmatprep.subr.mxu0 0.0
        %2377 = vmatpush1.msra.mxu0 0.0
        %2378 = vmatprep.subr.mxu0 0.0
        %2379 = vmatpush1.msra.mxu0 0.0
        %2380 = vmatprep.subr.mxu0 0.0
        %2381 = vmatpush1.msra.mxu0 0.0
        %2382 = vmatprep.subr.mxu0 0.0
        %2383 = vmatpush1.msra.mxu0 0.0
        %2384 = vmatprep.subr.mxu0 0.0
        %2385 = vmatpush1.msra.mxu0 0.0
        %2386 = vmatprep.subr.mxu0 0.0
        %2387 = vmatpush1.msra.mxu0 0.0
        %2388 = vmatprep.subr.mxu0 0.0
        %2389 = vmatpush1.msra.mxu0 0.0
        %2390 = vmatprep.subr.mxu0 0.0
        %2391 = vmatpush1.msra.mxu0 0.0
        %2392 = vmatprep.subr.mxu0 0.0
        %2393 = vmatpush1.msra.mxu0 0.0
        %2394 = vmatprep.subr.mxu0 0.0
        %2395 = vmatpush1.msra.mxu0 0.0
        %2396 = vmatprep.subr.mxu0 0.0
        %2397 = vmatpush1.msra.mxu0 0.0
        %2398 = vmatprep.subr.mxu0 0.0
        %2399 = vmatpush1.msra.mxu0 0.0
        %2400 = vmatprep.subr.mxu0 0.0
        %2401 = vmatpush1.msra.mxu0 0.0
        %2402 = vmatprep.subr.mxu0 0.0
        %2403 = vmatpush1.msra.mxu0 0.0
        %2404 = vmatprep.subr.mxu0 0.0
        %2405 = vmatpush1.msra.mxu0 0.0
        %2406 = vmatprep.subr.mxu0 0.0
        %2407 = vmatpush1.msra.mxu0 0.0
        %2408 = vmatprep.subr.mxu0 0.0
        %2409 = vmatpush1.msra.mxu0 0.0
        %2410 = vmatprep.subr.mxu0 0.0
        %2411 = vmatpush1.msra.mxu0 0.0
        %2412 = vmatprep.subr.mxu0 0.0
        %2413 = vmatpush1.msra.mxu0 0.0
        %2414 = vmatprep.subr.mxu0 0.0
        %2415 = vmatpush1.msra.mxu0 0.0
        %2416 = vmatprep.subr.mxu0 0.0
        %2417 = vmatpush1.msra.mxu0 0.0
        %2418 = vmatprep.subr.mxu0 0.0
        %2419 = vmatpush1.msra.mxu0 0.0
        %2420 = vmatprep.subr.mxu0 0.0
        %2421 = vmatpush1.msra.mxu0 0.0
        %2422 = vmatprep.subr.mxu0 0.0
        %2423 = vmatpush1.msra.mxu0 0.0
        %2424 = vmatprep.subr.mxu0 0.0
        %2425 = vmatpush1.msra.mxu0 0.0
        %2426 = vmatprep.subr.mxu0 0.0
        %2427 = vmatpush1.msra.mxu0 0.0
        %2428 = vmatprep.subr.mxu0 0.0
        %2429 = vmatpush1.msra.mxu0 0.0
        %2430 = vmatprep.subr.mxu0 0.0
        %2431 = vmatpush1.msra.mxu0 0.0
        %2432 = vmatprep.mubr.f32.mxu0 0.0
        %v2433 = vand.u32 %v2061, 4294901760
        %v2434 = vsub.f32 %v2061, %v2433
        %v2435 = vand.u32 %v2434, 4294901760
        %2436 = vmatmul.mubr.f32.gmra.mrb[0].mxu0 %v2435
        %v2437 = vpop.f32.mrb[0].mxu0
        %v2438 = vadd.f32 %v2343, %v2437
        %v2439 = vpop.f32.mrb[0].mxu0
        %2440 = vmatprep.mubr.f32.mxu0 0.0
        %v2441 = vand.u32 %v2064, 4294901760
        %v2442 = vsub.f32 %v2064, %v2441
        %v2443 = vand.u32 %v2442, 4294901760
        %2444 = vmatmul.mubr.f32.gmra.mrb[0].mxu0 %v2443
        %v2445 = vpop.f32.mrb[0].mxu0
        %v2446 = vadd.f32 %v2350, %v2445
        %v2447 = vpop.f32.mrb[0].mxu0
        %2448 = vmatprep.mubr.f32.mxu0 0.0
        %v2449 = vand.u32 %v2067, 4294901760
        %v2450 = vsub.f32 %v2067, %v2449
        %v2451 = vand.u32 %v2450, 4294901760
        %2452 = vmatmul.mubr.f32.gmra.mrb[0].mxu0 %v2451
        %v2453 = vpop.f32.mrb[0].mxu0
        %v2454 = vadd.f32 %v2357, %v2453
        %v2455 = vpop.f32.mrb[0].mxu0
        %2456 = vmatprep.mubr.f32.mxu0 0.0
        %v2457 = vand.u32 %v2070, 4294901760
        %v2458 = vsub.f32 %v2070, %v2457
        %v2459 = vand.u32 %v2458, 4294901760
        %2460 = vmatmul.mubr.f32.gmra.mrb[0].mxu0 %v2459
        %v2461 = vpop.f32.mrb[0].mxu0
        %v2462 = vadd.f32 %v2364, %v2461
        %v2463 = vpop.f32.mrb[0].mxu0
        %2464 = vdwg.mxu0
        %2465 = vmatprep.subr.mxu0 0.0
        %v2466 = vand.u32 %v2054, 4294901760
        %v2467 = vsub.f32 %v2054, %v2466
        %v2468 = vand.u32 %v2467, 4294901760
        %2469 = vmatpush1.msra.mxu0 %v2468
        %2470 = vmatprep.subr.mxu0 0.0
        %2471 = vmatpush1.msra.mxu0 0.0
        %2472 = vmatprep.subr.mxu0 0.0
        %2473 = vmatpush1.msra.mxu0 0.0
        %2474 = vmatprep.subr.mxu0 0.0
        %2475 = vmatpush1.msra.mxu0 0.0
        %2476 = vmatprep.subr.mxu0 0.0
        %2477 = vmatpush1.msra.mxu0 0.0
        %2478 = vmatprep.subr.mxu0 0.0
        %2479 = vmatpush1.msra.mxu0 0.0
        %2480 = vmatprep.subr.mxu0 0.0
        %2481 = vmatpush1.msra.mxu0 0.0
        %2482 = vmatprep.subr.mxu0 0.0
        %2483 = vmatpush1.msra.mxu0 0.0
        %2484 = vmatprep.subr.mxu0 0.0
        %2485 = vmatpush1.msra.mxu0 0.0
        %2486 = vmatprep.subr.mxu0 0.0
        %2487 = vmatpush1.msra.mxu0 0.0
        %2488 = vmatprep.subr.mxu0 0.0
        %2489 = vmatpush1.msra.mxu0 0.0
        %2490 = vmatprep.subr.mxu0 0.0
        %2491 = vmatpush1.msra.mxu0 0.0
        %2492 = vmatprep.subr.mxu0 0.0
        %2493 = vmatpush1.msra.mxu0 0.0
        %2494 = vmatprep.subr.mxu0 0.0
        %2495 = vmatpush1.msra.mxu0 0.0
        %2496 = vmatprep.subr.mxu0 0.0
        %2497 = vmatpush1.msra.mxu0 0.0
        %2498 = vmatprep.subr.mxu0 0.0
        %2499 = vmatpush1.msra.mxu0 0.0
        %2500 = vmatprep.subr.mxu0 0.0
        %2501 = vmatpush1.msra.mxu0 0.0
        %2502 = vmatprep.subr.mxu0 0.0
        %2503 = vmatpush1.msra.mxu0 0.0
        %2504 = vmatprep.subr.mxu0 0.0
        %2505 = vmatpush1.msra.mxu0 0.0
        %2506 = vmatprep.subr.mxu0 0.0
        %2507 = vmatpush1.msra.mxu0 0.0
        %2508 = vmatprep.subr.mxu0 0.0
        %2509 = vmatpush1.msra.mxu0 0.0
        %2510 = vmatprep.subr.mxu0 0.0
        %2511 = vmatpush1.msra.mxu0 0.0
        %2512 = vmatprep.subr.mxu0 0.0
        %2513 = vmatpush1.msra.mxu0 0.0
        %2514 = vmatprep.subr.mxu0 0.0
        %2515 = vmatpush1.msra.mxu0 0.0
        %2516 = vmatprep.subr.mxu0 0.0
        %2517 = vmatpush1.msra.mxu0 0.0
        %2518 = vmatprep.subr.mxu0 0.0
        %2519 = vmatpush1.msra.mxu0 0.0
        %2520 = vmatprep.subr.mxu0 0.0
        %2521 = vmatpush1.msra.mxu0 0.0
        %2522 = vmatprep.subr.mxu0 0.0
        %2523 = vmatpush1.msra.mxu0 0.0
        %2524 = vmatprep.subr.mxu0 0.0
        %2525 = vmatpush1.msra.mxu0 0.0
        %2526 = vmatprep.subr.mxu0 0.0
        %2527 = vmatpush1.msra.mxu0 0.0
        %2528 = vmatprep.subr.mxu0 0.0
        %2529 = vmatpush1.msra.mxu0 0.0
        %2530 = vmatprep.subr.mxu0 0.0
        %2531 = vmatpush1.msra.mxu0 0.0
        %2532 = vmatprep.mubr.f32.mxu0 0.0
        %v2533 = vand.u32 %v2061, 4294901760
        %2534 = vmatmul.mubr.f32.gmra.mrb[0].mxu0 %v2533
        %v2535 = vpop.f32.mrb[0].mxu0
        %v2536 = vadd.f32 %v2438, %v2535
        %v2537 = vpop.f32.mrb[0].mxu0
        %2538 = vmatprep.mubr.f32.mxu0 0.0
        %v2539 = vand.u32 %v2064, 4294901760
        %2540 = vmatmul.mubr.f32.gmra.mrb[0].mxu0 %v2539
        %v2541 = vpop.f32.mrb[0].mxu0
        %v2542 = vadd.f32 %v2446, %v2541
        %v2543 = vpop.f32.mrb[0].mxu0
        %2544 = vmatprep.mubr.f32.mxu0 0.0
        %v2545 = vand.u32 %v2067, 4294901760
        %2546 = vmatmul.mubr.f32.gmra.mrb[0].mxu0 %v2545
        %v2547 = vpop.f32.mrb[0].mxu0
        %v2548 = vadd.f32 %v2454, %v2547
        %v2549 = vpop.f32.mrb[0].mxu0
        %2550 = vmatprep.mubr.f32.mxu0 0.0
        %v2551 = vand.u32 %v2070, 4294901760
        %2552 = vmatmul.mubr.f32.gmra.mrb[0].mxu0 %v2551
        %v2553 = vpop.f32.mrb[0].mxu0
        %v2554 = vadd.f32 %v2462, %v2553
        %v2555 = vpop.f32.mrb[0].mxu0
        %2556 = vdwg.mxu0
        %2557 = vmatprep.subr.mxu0 0.0
        %v2558 = vand.u32 %v2054, 4294901760
        %2559 = vmatpush1.msra.mxu0 %v2558
        %2560 = vmatprep.subr.mxu0 0.0
        %2561 = vmatpush1.msra.mxu0 0.0
        %2562 = vmatprep.subr.mxu0 0.0
        %2563 = vmatpush1.msra.mxu0 0.0
        %2564 = vmatprep.subr.mxu0 0.0
        %2565 = vmatpush1.msra.mxu0 0.0
        %2566 = vmatprep.subr.mxu0 0.0
        %2567 = vmatpush1.msra.mxu0 0.0
        %2568 = vmatprep.subr.mxu0 0.0
        %2569 = vmatpush1.msra.mxu0 0.0
        %2570 = vmatprep.subr.mxu0 0.0
        %2571 = vmatpush1.msra.mxu0 0.0
        %2572 = vmatprep.subr.mxu0 0.0
        %2573 = vmatpush1.msra.mxu0 0.0
        %2574 = vmatprep.subr.mxu0 0.0
        %2575 = vmatpush1.msra.mxu0 0.0
        %2576 = vmatprep.subr.mxu0 0.0
        %2577 = vmatpush1.msra.mxu0 0.0
        %2578 = vmatprep.subr.mxu0 0.0
        %2579 = vmatpush1.msra.mxu0 0.0
        %2580 = vmatprep.subr.mxu0 0.0
        %2581 = vmatpush1.msra.mxu0 0.0
        %2582 = vmatprep.subr.mxu0 0.0
        %2583 = vmatpush1.msra.mxu0 0.0
        %2584 = vmatprep.subr.mxu0 0.0
        %2585 = vmatpush1.msra.mxu0 0.0
        %2586 = vmatprep.subr.mxu0 0.0
        %2587 = vmatpush1.msra.mxu0 0.0
        %2588 = vmatprep.subr.mxu0 0.0
        %2589 = vmatpush1.msra.mxu0 0.0
        %2590 = vmatprep.subr.mxu0 0.0
        %2591 = vmatpush1.msra.mxu0 0.0
        %2592 = vmatprep.subr.mxu0 0.0
        %2593 = vmatpush1.msra.mxu0 0.0
        %2594 = vmatprep.subr.mxu0 0.0
        %2595 = vmatpush1.msra.mxu0 0.0
        %2596 = vmatprep.subr.mxu0 0.0
        %2597 = vmatpush1.msra.mxu0 0.0
        %2598 = vmatprep.subr.mxu0 0.0
        %2599 = vmatpush1.msra.mxu0 0.0
        %2600 = vmatprep.subr.mxu0 0.0
        %2601 = vmatpush1.msra.mxu0 0.0
        %2602 = vmatprep.subr.mxu0 0.0
        %2603 = vmatpush1.msra.mxu0 0.0
        %2604 = vmatprep.subr.mxu0 0.0
        %2605 = vmatpush1.msra.mxu0 0.0
        %2606 = vmatprep.subr.mxu0 0.0
        %2607 = vmatpush1.msra.mxu0 0.0
        %2608 = vmatprep.subr.mxu0 0.0
        %2609 = vmatpush1.msra.mxu0 0.0
        %2610 = vmatprep.subr.mxu0 0.0
        %2611 = vmatpush1.msra.mxu0 0.0
        %2612 = vmatprep.subr.mxu0 0.0
        %2613 = vmatpush1.msra.mxu0 0.0
        %2614 = vmatprep.subr.mxu0 0.0
        %2615 = vmatpush1.msra.mxu0 0.0
        %2616 = vmatprep.subr.mxu0 0.0
        %2617 = vmatpush1.msra.mxu0 0.0
        %2618 = vmatprep.subr.mxu0 0.0
        %2619 = vmatpush1.msra.mxu0 0.0
        %2620 = vmatprep.subr.mxu0 0.0
        %2621 = vmatpush1.msra.mxu0 0.0
        %2622 = vmatprep.mubr.f32.mxu0 0.0
        %v2623 = vand.u32 %v2061, 4294901760
        %2624 = vmatmul.mubr.f32.gmra.mrb[0].mxu0 %v2623
        %v2625 = vpop.f32.mrb[0].mxu0
        %v2626 = vadd.f32 %v2536, %v2625
        %v2627 = vpop.f32.mrb[0].mxu0
        %2628 = vmatprep.mubr.f32.mxu0 0.0
        %v2629 = vand.u32 %v2064, 4294901760
        %2630 = vmatmul.mubr.f32.gmra.mrb[0].mxu0 %v2629
        %v2631 = vpop.f32.mrb[0].mxu0
        %v2632 = vadd.f32 %v2542, %v2631
        %v2633 = vpop.f32.mrb[0].mxu0
        %2634 = vmatprep.mubr.f32.mxu0 0.0
        %v2635 = vand.u32 %v2067, 4294901760
        %2636 = vmatmul.mubr.f32.gmra.mrb[0].mxu0 %v2635
        %v2637 = vpop.f32.mrb[0].mxu0
        %v2638 = vadd.f32 %v2548, %v2637
        %v2639 = vpop.f32.mrb[0].mxu0
        %2640 = vmatprep.mubr.f32.mxu0 0.0
        %v2641 = vand.u32 %v2070, 4294901760
        %2642 = vmatmul.mubr.f32.gmra.mrb[0].mxu0 %v2641
        %v2643 = vpop.f32.mrb[0].mxu0
        %v2644 = vadd.f32 %v2554, %v2643
        %v2645 = vpop.f32.mrb[0].mxu0
        %2646 = vdwg.mxu0
        %v2647 = vadd.f32 %v2047, %v2626
        %v2648 = vadd.f32 %v2048, %v2632
        %v2649 = vadd.f32 %v2049, %v2638
        %v2650 = vadd.f32 %v2050, %v2644
        %s2651 = scalar_lea.vmem %s2, 128
        %v2652 = vld [vmem:[%s2651] sm:$0xff]
        %v2653 = vld [vmem:[%s2651 + $0x8] sm:$0xff]
        %v2654 = vld [vmem:[%s2651 + $0x10] sm:$0xff]
        %v2655 = vld [vmem:[%s2651 + $0x18] sm:$0xff]
        %v2657 = vsel %vm274, %v2652, 0
        %v2660 = vsel %vm274, %v2653, 0
        %v2663 = vsel %vm274, %v2654, 0
        %v2666 = vsel %vm274, %v2655, 0
        %2668 = vmatprep.subr.mxu0 0.0
        %v2669 = vand.u32 %v224, 4294901760
        %2670 = vmatpush1.msra.mxu0 %v2669
        %2671 = vmatprep.subr.mxu0 0.0
        %2672 = vmatpush1.msra.mxu0 0.0
        %2673 = vmatprep.subr.mxu0 0.0
        %2674 = vmatpush1.msra.mxu0 0.0
        %2675 = vmatprep.subr.mxu0 0.0
        %2676 = vmatpush1.msra.mxu0 0.0
        %2677 = vmatprep.subr.mxu0 0.0
        %2678 = vmatpush1.msra.mxu0 0.0
        %2679 = vmatprep.subr.mxu0 0.0
        %2680 = vmatpush1.msra.mxu0 0.0
        %2681 = vmatprep.subr.mxu0 0.0
        %2682 = vmatpush1.msra.mxu0 0.0
        %2683 = vmatprep.subr.mxu0 0.0
        %2684 = vmatpush1.msra.mxu0 0.0
        %2685 = vmatprep.subr.mxu0 0.0
        %2686 = vmatpush1.msra.mxu0 0.0
        %2687 = vmatprep.subr.mxu0 0.0
        %2688 = vmatpush1.msra.mxu0 0.0
        %2689 = vmatprep.subr.mxu0 0.0
        %2690 = vmatpush1.msra.mxu0 0.0
        %2691 = vmatprep.subr.mxu0 0.0
        %2692 = vmatpush1.msra.mxu0 0.0
        %2693 = vmatprep.subr.mxu0 0.0
        %2694 = vmatpush1.msra.mxu0 0.0
        %2695 = vmatprep.subr.mxu0 0.0
        %2696 = vmatpush1.msra.mxu0 0.0
        %2697 = vmatprep.subr.mxu0 0.0
        %2698 = vmatpush1.msra.mxu0 0.0
        %2699 = vmatprep.subr.mxu0 0.0
        %2700 = vmatpush1.msra.mxu0 0.0
        %2701 = vmatprep.subr.mxu0 0.0
        %2702 = vmatpush1.msra.mxu0 0.0
        %2703 = vmatprep.subr.mxu0 0.0
        %2704 = vmatpush1.msra.mxu0 0.0
        %2705 = vmatprep.subr.mxu0 0.0
        %2706 = vmatpush1.msra.mxu0 0.0
        %2707 = vmatprep.subr.mxu0 0.0
        %2708 = vmatpush1.msra.mxu0 0.0
        %2709 = vmatprep.subr.mxu0 0.0
        %2710 = vmatpush1.msra.mxu0 0.0
        %2711 = vmatprep.subr.mxu0 0.0
        %2712 = vmatpush1.msra.mxu0 0.0
        %2713 = vmatprep.subr.mxu0 0.0
        %2714 = vmatpush1.msra.mxu0 0.0
        %2715 = vmatprep.subr.mxu0 0.0
        %2716 = vmatpush1.msra.mxu0 0.0
        %2717 = vmatprep.subr.mxu0 0.0
        %2718 = vmatpush1.msra.mxu0 0.0
        %2719 = vmatprep.subr.mxu0 0.0
        %2720 = vmatpush1.msra.mxu0 0.0
        %2721 = vmatprep.subr.mxu0 0.0
        %2722 = vmatpush1.msra.mxu0 0.0
        %2723 = vmatprep.subr.mxu0 0.0
        %2724 = vmatpush1.msra.mxu0 0.0
        %2725 = vmatprep.subr.mxu0 0.0
        %2726 = vmatpush1.msra.mxu0 0.0
        %2727 = vmatprep.subr.mxu0 0.0
        %2728 = vmatpush1.msra.mxu0 0.0
        %2729 = vmatprep.subr.mxu0 0.0
        %2730 = vmatpush1.msra.mxu0 0.0
        %2731 = vmatprep.subr.mxu0 0.0
        %2732 = vmatpush1.msra.mxu0 0.0
        %2733 = vmatprep.mubr.f32.mxu0 0.0
        %v2734 = vand.u32 %v2657, 4294901760
        %v2735 = vsub.f32 %v2657, %v2734
        %v2736 = vand.u32 %v2735, 4294901760
        %v2737 = vsub.f32 %v2735, %v2736
        %v2738 = vand.u32 %v2737, 4294901760
        %2739 = vmatmul.mubr.f32.gmra.mrb[0].mxu0 %v2738
        %v2740 = vpop.f32.mrb[0].mxu0
        %v2741 = vadd.f32 0.0, %v2740
        %v2742 = vpop.f32.mrb[0].mxu0
        %2743 = vmatprep.mubr.f32.mxu0 0.0
        %v2744 = vand.u32 %v2660, 4294901760
        %v2745 = vsub.f32 %v2660, %v2744
        %v2746 = vand.u32 %v2745, 4294901760
        %v2747 = vsub.f32 %v2745, %v2746
        %v2748 = vand.u32 %v2747, 4294901760
        %2749 = vmatmul.mubr.f32.gmra.mrb[0].mxu0 %v2748
        %v2750 = vpop.f32.mrb[0].mxu0
        %v2751 = vadd.f32 0.0, %v2750
        %v2752 = vpop.f32.mrb[0].mxu0
        %2753 = vmatprep.mubr.f32.mxu0 0.0
        %v2754 = vand.u32 %v2663, 4294901760
        %v2755 = vsub.f32 %v2663, %v2754
        %v2756 = vand.u32 %v2755, 4294901760
        %v2757 = vsub.f32 %v2755, %v2756
        %v2758 = vand.u32 %v2757, 4294901760
        %2759 = vmatmul.mubr.f32.gmra.mrb[0].mxu0 %v2758
        %v2760 = vpop.f32.mrb[0].mxu0
        %v2761 = vadd.f32 0.0, %v2760
        %v2762 = vpop.f32.mrb[0].mxu0
        %2763 = vmatprep.mubr.f32.mxu0 0.0
        %v2764 = vand.u32 %v2666, 4294901760
        %v2765 = vsub.f32 %v2666, %v2764
        %v2766 = vand.u32 %v2765, 4294901760
        %v2767 = vsub.f32 %v2765, %v2766
        %v2768 = vand.u32 %v2767, 4294901760
        %2769 = vmatmul.mubr.f32.gmra.mrb[0].mxu0 %v2768
        %v2770 = vpop.f32.mrb[0].mxu0
        %v2771 = vadd.f32 0.0, %v2770
        %v2772 = vpop.f32.mrb[0].mxu0
        %2773 = vdwg.mxu0
        %2774 = vmatprep.subr.mxu0 0.0
        %v2775 = vand.u32 %v224, 4294901760
        %v2776 = vsub.f32 %v224, %v2775
        %v2777 = vand.u32 %v2776, 4294901760
        %v2778 = vsub.f32 %v2776, %v2777
        %v2779 = vand.u32 %v2778, 4294901760
        %2780 = vmatpush1.msra.mxu0 %v2779
        %2781 = vmatprep.subr.mxu0 0.0
        %2782 = vmatpush1.msra.mxu0 0.0
        %2783 = vmatprep.subr.mxu0 0.0
        %2784 = vmatpush1.msra.mxu0 0.0
        %2785 = vmatprep.subr.mxu0 0.0
        %2786 = vmatpush1.msra.mxu0 0.0
        %2787 = vmatprep.subr.mxu0 0.0
        %2788 = vmatpush1.msra.mxu0 0.0
        %2789 = vmatprep.subr.mxu0 0.0
        %2790 = vmatpush1.msra.mxu0 0.0
        %2791 = vmatprep.subr.mxu0 0.0
        %2792 = vmatpush1.msra.mxu0 0.0
        %2793 = vmatprep.subr.mxu0 0.0
        %2794 = vmatpush1.msra.mxu0 0.0
        %2795 = vmatprep.subr.mxu0 0.0
        %2796 = vmatpush1.msra.mxu0 0.0
        %2797 = vmatprep.subr.mxu0 0.0
        %2798 = vmatpush1.msra.mxu0 0.0
        %2799 = vmatprep.subr.mxu0 0.0
        %2800 = vmatpush1.msra.mxu0 0.0
        %2801 = vmatprep.subr.mxu0 0.0
        %2802 = vmatpush1.msra.mxu0 0.0
        %2803 = vmatprep.subr.mxu0 0.0
        %2804 = vmatpush1.msra.mxu0 0.0
        %2805 = vmatprep.subr.mxu0 0.0
        %2806 = vmatpush1.msra.mxu0 0.0
        %2807 = vmatprep.subr.mxu0 0.0
        %2808 = vmatpush1.msra.mxu0 0.0
        %2809 = vmatprep.subr.mxu0 0.0
        %2810 = vmatpush1.msra.mxu0 0.0
        %2811 = vmatprep.subr.mxu0 0.0
        %2812 = vmatpush1.msra.mxu0 0.0
        %2813 = vmatprep.subr.mxu0 0.0
        %2814 = vmatpush1.msra.mxu0 0.0
        %2815 = vmatprep.subr.mxu0 0.0
        %2816 = vmatpush1.msra.mxu0 0.0
        %2817 = vmatprep.subr.mxu0 0.0
        %2818 = vmatpush1.msra.mxu0 0.0
        %2819 = vmatprep.subr.mxu0 0.0
        %2820 = vmatpush1.msra.mxu0 0.0
        %2821 = vmatprep.subr.mxu0 0.0
        %2822 = vmatpush1.msra.mxu0 0.0
        %2823 = vmatprep.subr.mxu0 0.0
        %2824 = vmatpush1.msra.mxu0 0.0
        %2825 = vmatprep.subr.mxu0 0.0
        %2826 = vmatpush1.msra.mxu0 0.0
        %2827 = vmatprep.subr.mxu0 0.0
        %2828 = vmatpush1.msra.mxu0 0.0
        %2829 = vmatprep.subr.mxu0 0.0
        %2830 = vmatpush1.msra.mxu0 0.0
        %2831 = vmatprep.subr.mxu0 0.0
        %2832 = vmatpush1.msra.mxu0 0.0
        %2833 = vmatprep.subr.mxu0 0.0
        %2834 = vmatpush1.msra.mxu0 0.0
        %2835 = vmatprep.subr.mxu0 0.0
        %2836 = vmatpush1.msra.mxu0 0.0
        %2837 = vmatprep.subr.mxu0 0.0
        %2838 = vmatpush1.msra.mxu0 0.0
        %2839 = vmatprep.subr.mxu0 0.0
        %2840 = vmatpush1.msra.mxu0 0.0
        %2841 = vmatprep.subr.mxu0 0.0
        %2842 = vmatpush1.msra.mxu0 0.0
        %2843 = vmatprep.mubr.f32.mxu0 0.0
        %v2844 = vand.u32 %v2657, 4294901760
        %2845 = vmatmul.mubr.f32.gmra.mrb[0].mxu0 %v2844
        %v2846 = vpop.f32.mrb[0].mxu0
        %v2847 = vadd.f32 %v2741, %v2846
        %v2848 = vpop.f32.mrb[0].mxu0
        %2849 = vmatprep.mubr.f32.mxu0 0.0
        %v2850 = vand.u32 %v2660, 4294901760
        %2851 = vmatmul.mubr.f32.gmra.mrb[0].mxu0 %v2850
        %v2852 = vpop.f32.mrb[0].mxu0
        %v2853 = vadd.f32 %v2751, %v2852
        %v2854 = vpop.f32.mrb[0].mxu0
        %2855 = vmatprep.mubr.f32.mxu0 0.0
        %v2856 = vand.u32 %v2663, 4294901760
        %2857 = vmatmul.mubr.f32.gmra.mrb[0].mxu0 %v2856
        %v2858 = vpop.f32.mrb[0].mxu0
        %v2859 = vadd.f32 %v2761, %v2858
        %v2860 = vpop.f32.mrb[0].mxu0
        %2861 = vmatprep.mubr.f32.mxu0 0.0
        %v2862 = vand.u32 %v2666, 4294901760
        %2863 = vmatmul.mubr.f32.gmra.mrb[0].mxu0 %v2862
        %v2864 = vpop.f32.mrb[0].mxu0
        %v2865 = vadd.f32 %v2771, %v2864
        %v2866 = vpop.f32.mrb[0].mxu0
        %2867 = vdwg.mxu0
        %2868 = vmatprep.subr.mxu0 0.0
        %v2869 = vand.u32 %v224, 4294901760
        %v2870 = vsub.f32 %v224, %v2869
        %2871 = vmatpush1.msra.mxu0 %v2870
        %2872 = vmatprep.subr.mxu0 0.0
        %2873 = vmatpush1.msra.mxu0 0.0
        %2874 = vmatprep.subr.mxu0 0.0
        %2875 = vmatpush1.msra.mxu0 0.0
        %2876 = vmatprep.subr.mxu0 0.0
        %2877 = vmatpush1.msra.mxu0 0.0
        %2878 = vmatprep.subr.mxu0 0.0
        %2879 = vmatpush1.msra.mxu0 0.0
        %2880 = vmatprep.subr.mxu0 0.0
        %2881 = vmatpush1.msra.mxu0 0.0
        %2882 = vmatprep.subr.mxu0 0.0
        %2883 = vmatpush1.msra.mxu0 0.0
        %2884 = vmatprep.subr.mxu0 0.0
        %2885 = vmatpush1.msra.mxu0 0.0
        %2886 = vmatprep.subr.mxu0 0.0
        %2887 = vmatpush1.msra.mxu0 0.0
        %2888 = vmatprep.subr.mxu0 0.0
        %2889 = vmatpush1.msra.mxu0 0.0
        %2890 = vmatprep.subr.mxu0 0.0
        %2891 = vmatpush1.msra.mxu0 0.0
        %2892 = vmatprep.subr.mxu0 0.0
        %2893 = vmatpush1.msra.mxu0 0.0
        %2894 = vmatprep.subr.mxu0 0.0
        %2895 = vmatpush1.msra.mxu0 0.0
        %2896 = vmatprep.subr.mxu0 0.0
        %2897 = vmatpush1.msra.mxu0 0.0
        %2898 = vmatprep.subr.mxu0 0.0
        %2899 = vmatpush1.msra.mxu0 0.0
        %2900 = vmatprep.subr.mxu0 0.0
        %2901 = vmatpush1.msra.mxu0 0.0
        %2902 = vmatprep.subr.mxu0 0.0
        %2903 = vmatpush1.msra.mxu0 0.0
        %2904 = vmatprep.subr.mxu0 0.0
        %2905 = vmatpush1.msra.mxu0 0.0
        %2906 = vmatprep.subr.mxu0 0.0
        %2907 = vmatpush1.msra.mxu0 0.0
        %2908 = vmatprep.subr.mxu0 0.0
        %2909 = vmatpush1.msra.mxu0 0.0
        %2910 = vmatprep.subr.mxu0 0.0
        %2911 = vmatpush1.msra.mxu0 0.0
        %2912 = vmatprep.subr.mxu0 0.0
        %2913 = vmatpush1.msra.mxu0 0.0
        %2914 = vmatprep.subr.mxu0 0.0
        %2915 = vmatpush1.msra.mxu0 0.0
        %2916 = vmatprep.subr.mxu0 0.0
        %2917 = vmatpush1.msra.mxu0 0.0
        %2918 = vmatprep.subr.mxu0 0.0
        %2919 = vmatpush1.msra.mxu0 0.0
        %2920 = vmatprep.subr.mxu0 0.0
        %2921 = vmatpush1.msra.mxu0 0.0
        %2922 = vmatprep.subr.mxu0 0.0
        %2923 = vmatpush1.msra.mxu0 0.0
        %2924 = vmatprep.subr.mxu0 0.0
        %2925 = vmatpush1.msra.mxu0 0.0
        %2926 = vmatprep.subr.mxu0 0.0
        %2927 = vmatpush1.msra.mxu0 0.0
        %2928 = vmatprep.subr.mxu0 0.0
        %2929 = vmatpush1.msra.mxu0 0.0
        %2930 = vmatprep.subr.mxu0 0.0
        %2931 = vmatpush1.msra.mxu0 0.0
        %2932 = vmatprep.subr.mxu0 0.0
        %2933 = vmatpush1.msra.mxu0 0.0
        %2934 = vmatprep.mubr.f32.mxu0 0.0
        %v2935 = vand.u32 %v2657, 4294901760
        %v2936 = vsub.f32 %v2657, %v2935
        %2937 = vmatmul.mubr.f32.gmra.mrb[0].mxu0 %v2936
        %v2938 = vpop.f32.mrb[0].mxu0
        %v2939 = vadd.f32 %v2847, %v2938
        %v2940 = vpop.f32.mrb[0].mxu0
        %2941 = vmatprep.mubr.f32.mxu0 0.0
        %v2942 = vand.u32 %v2660, 4294901760
        %v2943 = vsub.f32 %v2660, %v2942
        %2944 = vmatmul.mubr.f32.gmra.mrb[0].mxu0 %v2943
        %v2945 = vpop.f32.mrb[0].mxu0
        %v2946 = vadd.f32 %v2853, %v2945
        %v2947 = vpop.f32.mrb[0].mxu0
        %2948 = vmatprep.mubr.f32.mxu0 0.0
        %v2949 = vand.u32 %v2663, 4294901760
        %v2950 = vsub.f32 %v2663, %v2949
        %2951 = vmatmul.mubr.f32.gmra.mrb[0].mxu0 %v2950
        %v2952 = vpop.f32.mrb[0].mxu0
        %v2953 = vadd.f32 %v2859, %v2952
        %v2954 = vpop.f32.mrb[0].mxu0
        %2955 = vmatprep.mubr.f32.mxu0 0.0
        %v2956 = vand.u32 %v2666, 4294901760
        %v2957 = vsub.f32 %v2666, %v2956
        %2958 = vmatmul.mubr.f32.gmra.mrb[0].mxu0 %v2957
        %v2959 = vpop.f32.mrb[0].mxu0
        %v2960 = vadd.f32 %v2865, %v2959
        %v2961 = vpop.f32.mrb[0].mxu0
        %2962 = vdwg.mxu0
        %2963 = vmatprep.subr.mxu0 0.0
        %v2964 = vand.u32 %v224, 4294901760
        %2965 = vmatpush1.msra.mxu0 %v2964
        %2966 = vmatprep.subr.mxu0 0.0
        %2967 = vmatpush1.msra.mxu0 0.0
        %2968 = vmatprep.subr.mxu0 0.0
        %2969 = vmatpush1.msra.mxu0 0.0
        %2970 = vmatprep.subr.mxu0 0.0
        %2971 = vmatpush1.msra.mxu0 0.0
        %2972 = vmatprep.subr.mxu0 0.0
        %2973 = vmatpush1.msra.mxu0 0.0
        %2974 = vmatprep.subr.mxu0 0.0
        %2975 = vmatpush1.msra.mxu0 0.0
        %2976 = vmatprep.subr.mxu0 0.0
        %2977 = vmatpush1.msra.mxu0 0.0
        %2978 = vmatprep.subr.mxu0 0.0
        %2979 = vmatpush1.msra.mxu0 0.0
        %2980 = vmatprep.subr.mxu0 0.0
        %2981 = vmatpush1.msra.mxu0 0.0
        %2982 = vmatprep.subr.mxu0 0.0
        %2983 = vmatpush1.msra.mxu0 0.0
        %2984 = vmatprep.subr.mxu0 0.0
        %2985 = vmatpush1.msra.mxu0 0.0
        %2986 = vmatprep.subr.mxu0 0.0
        %2987 = vmatpush1.msra.mxu0 0.0
        %2988 = vmatprep.subr.mxu0 0.0
        %2989 = vmatpush1.msra.mxu0 0.0
        %2990 = vmatprep.subr.mxu0 0.0
        %2991 = vmatpush1.msra.mxu0 0.0
        %2992 = vmatprep.subr.mxu0 0.0
        %2993 = vmatpush1.msra.mxu0 0.0
        %2994 = vmatprep.subr.mxu0 0.0
        %2995 = vmatpush1.msra.mxu0 0.0
        %2996 = vmatprep.subr.mxu0 0.0
        %2997 = vmatpush1.msra.mxu0 0.0
        %2998 = vmatprep.subr.mxu0 0.0
        %2999 = vmatpush1.msra.mxu0 0.0
        %3000 = vmatprep.subr.mxu0 0.0
        %3001 = vmatpush1.msra.mxu0 0.0
        %3002 = vmatprep.subr.mxu0 0.0
        %3003 = vmatpush1.msra.mxu0 0.0
        %3004 = vmatprep.subr.mxu0 0.0
        %3005 = vmatpush1.msra.mxu0 0.0
        %3006 = vmatprep.subr.mxu0 0.0
        %3007 = vmatpush1.msra.mxu0 0.0
        %3008 = vmatprep.subr.mxu0 0.0
        %3009 = vmatpush1.msra.mxu0 0.0
        %3010 = vmatprep.subr.mxu0 0.0
        %3011 = vmatpush1.msra.mxu0 0.0
        %3012 = vmatprep.subr.mxu0 0.0
        %3013 = vmatpush1.msra.mxu0 0.0
        %3014 = vmatprep.subr.mxu0 0.0
        %3015 = vmatpush1.msra.mxu0 0.0
        %3016 = vmatprep.subr.mxu0 0.0
        %3017 = vmatpush1.msra.mxu0 0.0
        %3018 = vmatprep.subr.mxu0 0.0
        %3019 = vmatpush1.msra.mxu0 0.0
        %3020 = vmatprep.subr.mxu0 0.0
        %3021 = vmatpush1.msra.mxu0 0.0
        %3022 = vmatprep.subr.mxu0 0.0
        %3023 = vmatpush1.msra.mxu0 0.0
        %3024 = vmatprep.subr.mxu0 0.0
        %3025 = vmatpush1.msra.mxu0 0.0
        %3026 = vmatprep.subr.mxu0 0.0
        %3027 = vmatpush1.msra.mxu0 0.0
        %3028 = vmatprep.mubr.f32.mxu0 0.0
        %v3029 = vand.u32 %v2657, 4294901760
        %v3030 = vsub.f32 %v2657, %v3029
        %v3031 = vand.u32 %v3030, 4294901760
        %3032 = vmatmul.mubr.f32.gmra.mrb[0].mxu0 %v3031
        %v3033 = vpop.f32.mrb[0].mxu0
        %v3034 = vadd.f32 %v2939, %v3033
        %v3035 = vpop.f32.mrb[0].mxu0
        %3036 = vmatprep.mubr.f32.mxu0 0.0
        %v3037 = vand.u32 %v2660, 4294901760
        %v3038 = vsub.f32 %v2660, %v3037
        %v3039 = vand.u32 %v3038, 4294901760
        %3040 = vmatmul.mubr.f32.gmra.mrb[0].mxu0 %v3039
        %v3041 = vpop.f32.mrb[0].mxu0
        %v3042 = vadd.f32 %v2946, %v3041
        %v3043 = vpop.f32.mrb[0].mxu0
        %3044 = vmatprep.mubr.f32.mxu0 0.0
        %v3045 = vand.u32 %v2663, 4294901760
        %v3046 = vsub.f32 %v2663, %v3045
        %v3047 = vand.u32 %v3046, 4294901760
        %3048 = vmatmul.mubr.f32.gmra.mrb[0].mxu0 %v3047
        %v3049 = vpop.f32.mrb[0].mxu0
        %v3050 = vadd.f32 %v2953, %v3049
        %v3051 = vpop.f32.mrb[0].mxu0
        %3052 = vmatprep.mubr.f32.mxu0 0.0
        %v3053 = vand.u32 %v2666, 4294901760
        %v3054 = vsub.f32 %v2666, %v3053
        %v3055 = vand.u32 %v3054, 4294901760
        %3056 = vmatmul.mubr.f32.gmra.mrb[0].mxu0 %v3055
        %v3057 = vpop.f32.mrb[0].mxu0
        %v3058 = vadd.f32 %v2960, %v3057
        %v3059 = vpop.f32.mrb[0].mxu0
        %3060 = vdwg.mxu0
        %3061 = vmatprep.subr.mxu0 0.0
        %v3062 = vand.u32 %v224, 4294901760
        %v3063 = vsub.f32 %v224, %v3062
        %v3064 = vand.u32 %v3063, 4294901760
        %3065 = vmatpush1.msra.mxu0 %v3064
        %3066 = vmatprep.subr.mxu0 0.0
        %3067 = vmatpush1.msra.mxu0 0.0
        %3068 = vmatprep.subr.mxu0 0.0
        %3069 = vmatpush1.msra.mxu0 0.0
        %3070 = vmatprep.subr.mxu0 0.0
        %3071 = vmatpush1.msra.mxu0 0.0
        %3072 = vmatprep.subr.mxu0 0.0
        %3073 = vmatpush1.msra.mxu0 0.0
        %3074 = vmatprep.subr.mxu0 0.0
        %3075 = vmatpush1.msra.mxu0 0.0
        %3076 = vmatprep.subr.mxu0 0.0
        %3077 = vmatpush1.msra.mxu0 0.0
        %3078 = vmatprep.subr.mxu0 0.0
        %3079 = vmatpush1.msra.mxu0 0.0
        %3080 = vmatprep.subr.mxu0 0.0
        %3081 = vmatpush1.msra.mxu0 0.0
        %3082 = vmatprep.subr.mxu0 0.0
        %3083 = vmatpush1.msra.mxu0 0.0
        %3084 = vmatprep.subr.mxu0 0.0
        %3085 = vmatpush1.msra.mxu0 0.0
        %3086 = vmatprep.subr.mxu0 0.0
        %3087 = vmatpush1.msra.mxu0 0.0
        %3088 = vmatprep.subr.mxu0 0.0
        %3089 = vmatpush1.msra.mxu0 0.0
        %3090 = vmatprep.subr.mxu0 0.0
        %3091 = vmatpush1.msra.mxu0 0.0
        %3092 = vmatprep.subr.mxu0 0.0
        %3093 = vmatpush1.msra.mxu0 0.0
        %3094 = vmatprep.subr.mxu0 0.0
        %3095 = vmatpush1.msra.mxu0 0.0
        %3096 = vmatprep.subr.mxu0 0.0
        %3097 = vmatpush1.msra.mxu0 0.0
        %3098 = vmatprep.subr.mxu0 0.0
        %3099 = vmatpush1.msra.mxu0 0.0
        %3100 = vmatprep.subr.mxu0 0.0
        %3101 = vmatpush1.msra.mxu0 0.0
        %3102 = vmatprep.subr.mxu0 0.0
        %3103 = vmatpush1.msra.mxu0 0.0
        %3104 = vmatprep.subr.mxu0 0.0
        %3105 = vmatpush1.msra.mxu0 0.0
        %3106 = vmatprep.subr.mxu0 0.0
        %3107 = vmatpush1.msra.mxu0 0.0
        %3108 = vmatprep.subr.mxu0 0.0
        %3109 = vmatpush1.msra.mxu0 0.0
        %3110 = vmatprep.subr.mxu0 0.0
        %3111 = vmatpush1.msra.mxu0 0.0
        %3112 = vmatprep.subr.mxu0 0.0
        %3113 = vmatpush1.msra.mxu0 0.0
        %3114 = vmatprep.subr.mxu0 0.0
        %3115 = vmatpush1.msra.mxu0 0.0
        %3116 = vmatprep.subr.mxu0 0.0
        %3117 = vmatpush1.msra.mxu0 0.0
        %3118 = vmatprep.subr.mxu0 0.0
        %3119 = vmatpush1.msra.mxu0 0.0
        %3120 = vmatprep.subr.mxu0 0.0
        %3121 = vmatpush1.msra.mxu0 0.0
        %3122 = vmatprep.subr.mxu0 0.0
        %3123 = vmatpush1.msra.mxu0 0.0
        %3124 = vmatprep.subr.mxu0 0.0
        %3125 = vmatpush1.msra.mxu0 0.0
        %3126 = vmatprep.subr.mxu0 0.0
        %3127 = vmatpush1.msra.mxu0 0.0
        %3128 = vmatprep.mubr.f32.mxu0 0.0
        %v3129 = vand.u32 %v2657, 4294901760
        %3130 = vmatmul.mubr.f32.gmra.mrb[0].mxu0 %v3129
        %v3131 = vpop.f32.mrb[0].mxu0
        %v3132 = vadd.f32 %v3034, %v3131
        %v3133 = vpop.f32.mrb[0].mxu0
        %3134 = vmatprep.mubr.f32.mxu0 0.0
        %v3135 = vand.u32 %v2660, 4294901760
        %3136 = vmatmul.mubr.f32.gmra.mrb[0].mxu0 %v3135
        %v3137 = vpop.f32.mrb[0].mxu0
        %v3138 = vadd.f32 %v3042, %v3137
        %v3139 = vpop.f32.mrb[0].mxu0
        %3140 = vmatprep.mubr.f32.mxu0 0.0
        %v3141 = vand.u32 %v2663, 4294901760
        %3142 = vmatmul.mubr.f32.gmra.mrb[0].mxu0 %v3141
        %v3143 = vpop.f32.mrb[0].mxu0
        %v3144 = vadd.f32 %v3050, %v3143
        %v3145 = vpop.f32.mrb[0].mxu0
        %3146 = vmatprep.mubr.f32.mxu0 0.0
        %v3147 = vand.u32 %v2666, 4294901760
        %3148 = vmatmul.mubr.f32.gmra.mrb[0].mxu0 %v3147
        %v3149 = vpop.f32.mrb[0].mxu0
        %v3150 = vadd.f32 %v3058, %v3149
        %v3151 = vpop.f32.mrb[0].mxu0
        %3152 = vdwg.mxu0
        %3153 = vmatprep.subr.mxu0 0.0
        %v3154 = vand.u32 %v224, 4294901760
        %3155 = vmatpush1.msra.mxu0 %v3154
        %3156 = vmatprep.subr.mxu0 0.0
        %3157 = vmatpush1.msra.mxu0 0.0
        %3158 = vmatprep.subr.mxu0 0.0
        %3159 = vmatpush1.msra.mxu0 0.0
        %3160 = vmatprep.subr.mxu0 0.0
        %3161 = vmatpush1.msra.mxu0 0.0
        %3162 = vmatprep.subr.mxu0 0.0
        %3163 = vmatpush1.msra.mxu0 0.0
        %3164 = vmatprep.subr.mxu0 0.0
        %3165 = vmatpush1.msra.mxu0 0.0
        %3166 = vmatprep.subr.mxu0 0.0
        %3167 = vmatpush1.msra.mxu0 0.0
        %3168 = vmatprep.subr.mxu0 0.0
        %3169 = vmatpush1.msra.mxu0 0.0
        %3170 = vmatprep.subr.mxu0 0.0
        %3171 = vmatpush1.msra.mxu0 0.0
        %3172 = vmatprep.subr.mxu0 0.0
        %3173 = vmatpush1.msra.mxu0 0.0
        %3174 = vmatprep.subr.mxu0 0.0
        %3175 = vmatpush1.msra.mxu0 0.0
        %3176 = vmatprep.subr.mxu0 0.0
        %3177 = vmatpush1.msra.mxu0 0.0
        %3178 = vmatprep.subr.mxu0 0.0
        %3179 = vmatpush1.msra.mxu0 0.0
        %3180 = vmatprep.subr.mxu0 0.0
        %3181 = vmatpush1.msra.mxu0 0.0
        %3182 = vmatprep.subr.mxu0 0.0
        %3183 = vmatpush1.msra.mxu0 0.0
        %3184 = vmatprep.subr.mxu0 0.0
        %3185 = vmatpush1.msra.mxu0 0.0
        %3186 = vmatprep.subr.mxu0 0.0
        %3187 = vmatpush1.msra.mxu0 0.0
        %3188 = vmatprep.subr.mxu0 0.0
        %3189 = vmatpush1.msra.mxu0 0.0
        %3190 = vmatprep.subr.mxu0 0.0
        %3191 = vmatpush1.msra.mxu0 0.0
        %3192 = vmatprep.subr.mxu0 0.0
        %3193 = vmatpush1.msra.mxu0 0.0
        %3194 = vmatprep.subr.mxu0 0.0
        %3195 = vmatpush1.msra.mxu0 0.0
        %3196 = vmatprep.subr.mxu0 0.0
        %3197 = vmatpush1.msra.mxu0 0.0
        %3198 = vmatprep.subr.mxu0 0.0
        %3199 = vmatpush1.msra.mxu0 0.0
        %3200 = vmatprep.subr.mxu0 0.0
        %3201 = vmatpush1.msra.mxu0 0.0
        %3202 = vmatprep.subr.mxu0 0.0
        %3203 = vmatpush1.msra.mxu0 0.0
        %3204 = vmatprep.subr.mxu0 0.0
        %3205 = vmatpush1.msra.mxu0 0.0
        %3206 = vmatprep.subr.mxu0 0.0
        %3207 = vmatpush1.msra.mxu0 0.0
        %3208 = vmatprep.subr.mxu0 0.0
        %3209 = vmatpush1.msra.mxu0 0.0
        %3210 = vmatprep.subr.mxu0 0.0
        %3211 = vmatpush1.msra.mxu0 0.0
        %3212 = vmatprep.subr.mxu0 0.0
        %3213 = vmatpush1.msra.mxu0 0.0
        %3214 = vmatprep.subr.mxu0 0.0
        %3215 = vmatpush1.msra.mxu0 0.0
        %3216 = vmatprep.subr.mxu0 0.0
        %3217 = vmatpush1.msra.mxu0 0.0
        %3218 = vmatprep.mubr.f32.mxu0 0.0
        %v3219 = vand.u32 %v2657, 4294901760
        %3220 = vmatmul.mubr.f32.gmra.mrb[0].mxu0 %v3219
        %v3221 = vpop.f32.mrb[0].mxu0
        %v3222 = vadd.f32 %v3132, %v3221
        %v3223 = vpop.f32.mrb[0].mxu0
        %3224 = vmatprep.mubr.f32.mxu0 0.0
        %v3225 = vand.u32 %v2660, 4294901760
        %3226 = vmatmul.mubr.f32.gmra.mrb[0].mxu0 %v3225
        %v3227 = vpop.f32.mrb[0].mxu0
        %v3228 = vadd.f32 %v3138, %v3227
        %v3229 = vpop.f32.mrb[0].mxu0
        %3230 = vmatprep.mubr.f32.mxu0 0.0
        %v3231 = vand.u32 %v2663, 4294901760
        %3232 = vmatmul.mubr.f32.gmra.mrb[0].mxu0 %v3231
        %v3233 = vpop.f32.mrb[0].mxu0
        %v3234 = vadd.f32 %v3144, %v3233
        %v3235 = vpop.f32.mrb[0].mxu0
        %3236 = vmatprep.mubr.f32.mxu0 0.0
        %v3237 = vand.u32 %v2666, 4294901760
        %3238 = vmatmul.mubr.f32.gmra.mrb[0].mxu0 %v3237
        %v3239 = vpop.f32.mrb[0].mxu0
        %v3240 = vadd.f32 %v3150, %v3239
        %v3241 = vpop.f32.mrb[0].mxu0
        %3242 = vdwg.mxu0
        %v3243 = vadd.f32 %v2647, %v3222
        %v3244 = vadd.f32 %v2648, %v3228
        %v3245 = vadd.f32 %v2649, %v3234
        %v3246 = vadd.f32 %v2650, %v3240
        %3247 = vrot.lane.b32.xlu0 %v224, 127
        %v3248 = vpop.permute.xlu0 %3247
        %v3250 = vsel %vm1453, %v3248, 0.0
        %s3251 = scalar_lea.vmem %s2, 160
        %v3252 = vld [vmem:[%s3251] sm:$0xff]
        %v3253 = vld [vmem:[%s3251 + $0x8] sm:$0xff]
        %v3254 = vld [vmem:[%s3251 + $0x10] sm:$0xff]
        %v3255 = vld [vmem:[%s3251 + $0x18] sm:$0xff]
        %v3257 = vsel %vm274, %v3252, 0
        %v3260 = vsel %vm274, %v3253, 0
        %v3263 = vsel %vm274, %v3254, 0
        %v3266 = vsel %vm274, %v3255, 0
        %3268 = vmatprep.subr.mxu0 0.0
        %v3269 = vand.u32 %v3250, 4294901760
        %3270 = vmatpush1.msra.mxu0 %v3269
        %3271 = vmatprep.subr.mxu0 0.0
        %3272 = vmatpush1.msra.mxu0 0.0
        %3273 = vmatprep.subr.mxu0 0.0
        %3274 = vmatpush1.msra.mxu0 0.0
        %3275 = vmatprep.subr.mxu0 0.0
        %3276 = vmatpush1.msra.mxu0 0.0
        %3277 = vmatprep.subr.mxu0 0.0
        %3278 = vmatpush1.msra.mxu0 0.0
        %3279 = vmatprep.subr.mxu0 0.0
        %3280 = vmatpush1.msra.mxu0 0.0
        %3281 = vmatprep.subr.mxu0 0.0
        %3282 = vmatpush1.msra.mxu0 0.0
        %3283 = vmatprep.subr.mxu0 0.0
        %3284 = vmatpush1.msra.mxu0 0.0
        %3285 = vmatprep.subr.mxu0 0.0
        %3286 = vmatpush1.msra.mxu0 0.0
        %3287 = vmatprep.subr.mxu0 0.0
        %3288 = vmatpush1.msra.mxu0 0.0
        %3289 = vmatprep.subr.mxu0 0.0
        %3290 = vmatpush1.msra.mxu0 0.0
        %3291 = vmatprep.subr.mxu0 0.0
        %3292 = vmatpush1.msra.mxu0 0.0
        %3293 = vmatprep.subr.mxu0 0.0
        %3294 = vmatpush1.msra.mxu0 0.0
        %3295 = vmatprep.subr.mxu0 0.0
        %3296 = vmatpush1.msra.mxu0 0.0
        %3297 = vmatprep.subr.mxu0 0.0
        %3298 = vmatpush1.msra.mxu0 0.0
        %3299 = vmatprep.subr.mxu0 0.0
        %3300 = vmatpush1.msra.mxu0 0.0
        %3301 = vmatprep.subr.mxu0 0.0
        %3302 = vmatpush1.msra.mxu0 0.0
        %3303 = vmatprep.subr.mxu0 0.0
        %3304 = vmatpush1.msra.mxu0 0.0
        %3305 = vmatprep.subr.mxu0 0.0
        %3306 = vmatpush1.msra.mxu0 0.0
        %3307 = vmatprep.subr.mxu0 0.0
        %3308 = vmatpush1.msra.mxu0 0.0
        %3309 = vmatprep.subr.mxu0 0.0
        %3310 = vmatpush1.msra.mxu0 0.0
        %3311 = vmatprep.subr.mxu0 0.0
        %3312 = vmatpush1.msra.mxu0 0.0
        %3313 = vmatprep.subr.mxu0 0.0
        %3314 = vmatpush1.msra.mxu0 0.0
        %3315 = vmatprep.subr.mxu0 0.0
        %3316 = vmatpush1.msra.mxu0 0.0
        %3317 = vmatprep.subr.mxu0 0.0
        %3318 = vmatpush1.msra.mxu0 0.0
        %3319 = vmatprep.subr.mxu0 0.0
        %3320 = vmatpush1.msra.mxu0 0.0
        %3321 = vmatprep.subr.mxu0 0.0
        %3322 = vmatpush1.msra.mxu0 0.0
        %3323 = vmatprep.subr.mxu0 0.0
        %3324 = vmatpush1.msra.mxu0 0.0
        %3325 = vmatprep.subr.mxu0 0.0
        %3326 = vmatpush1.msra.mxu0 0.0
        %3327 = vmatprep.subr.mxu0 0.0
        %3328 = vmatpush1.msra.mxu0 0.0
        %3329 = vmatprep.subr.mxu0 0.0
        %3330 = vmatpush1.msra.mxu0 0.0
        %3331 = vmatprep.subr.mxu0 0.0
        %3332 = vmatpush1.msra.mxu0 0.0
        %3333 = vmatprep.mubr.f32.mxu0 0.0
        %v3334 = vand.u32 %v3257, 4294901760
        %v3335 = vsub.f32 %v3257, %v3334
        %v3336 = vand.u32 %v3335, 4294901760
        %v3337 = vsub.f32 %v3335, %v3336
        %v3338 = vand.u32 %v3337, 4294901760
        %3339 = vmatmul.mubr.f32.gmra.mrb[0].mxu0 %v3338
        %v3340 = vpop.f32.mrb[0].mxu0
        %v3341 = vadd.f32 0.0, %v3340
        %v3342 = vpop.f32.mrb[0].mxu0
        %3343 = vmatprep.mubr.f32.mxu0 0.0
        %v3344 = vand.u32 %v3260, 4294901760
        %v3345 = vsub.f32 %v3260, %v3344
        %v3346 = vand.u32 %v3345, 4294901760
        %v3347 = vsub.f32 %v3345, %v3346
        %v3348 = vand.u32 %v3347, 4294901760
        %3349 = vmatmul.mubr.f32.gmra.mrb[0].mxu0 %v3348
        %v3350 = vpop.f32.mrb[0].mxu0
        %v3351 = vadd.f32 0.0, %v3350
        %v3352 = vpop.f32.mrb[0].mxu0
        %3353 = vmatprep.mubr.f32.mxu0 0.0
        %v3354 = vand.u32 %v3263, 4294901760
        %v3355 = vsub.f32 %v3263, %v3354
        %v3356 = vand.u32 %v3355, 4294901760
        %v3357 = vsub.f32 %v3355, %v3356
        %v3358 = vand.u32 %v3357, 4294901760
        %3359 = vmatmul.mubr.f32.gmra.mrb[0].mxu0 %v3358
        %v3360 = vpop.f32.mrb[0].mxu0
        %v3361 = vadd.f32 0.0, %v3360
        %v3362 = vpop.f32.mrb[0].mxu0
        %3363 = vmatprep.mubr.f32.mxu0 0.0
        %v3364 = vand.u32 %v3266, 4294901760
        %v3365 = vsub.f32 %v3266, %v3364
        %v3366 = vand.u32 %v3365, 4294901760
        %v3367 = vsub.f32 %v3365, %v3366
        %v3368 = vand.u32 %v3367, 4294901760
        %3369 = vmatmul.mubr.f32.gmra.mrb[0].mxu0 %v3368
        %v3370 = vpop.f32.mrb[0].mxu0
        %v3371 = vadd.f32 0.0, %v3370
        %v3372 = vpop.f32.mrb[0].mxu0
        %3373 = vdwg.mxu0
        %3374 = vmatprep.subr.mxu0 0.0
        %v3375 = vand.u32 %v3250, 4294901760
        %v3376 = vsub.f32 %v3250, %v3375
        %v3377 = vand.u32 %v3376, 4294901760
        %v3378 = vsub.f32 %v3376, %v3377
        %v3379 = vand.u32 %v3378, 4294901760
        %3380 = vmatpush1.msra.mxu0 %v3379
        %3381 = vmatprep.subr.mxu0 0.0
        %3382 = vmatpush1.msra.mxu0 0.0
        %3383 = vmatprep.subr.mxu0 0.0
        %3384 = vmatpush1.msra.mxu0 0.0
        %3385 = vmatprep.subr.mxu0 0.0
        %3386 = vmatpush1.msra.mxu0 0.0
        %3387 = vmatprep.subr.mxu0 0.0
        %3388 = vmatpush1.msra.mxu0 0.0
        %3389 = vmatprep.subr.mxu0 0.0
        %3390 = vmatpush1.msra.mxu0 0.0
        %3391 = vmatprep.subr.mxu0 0.0
        %3392 = vmatpush1.msra.mxu0 0.0
        %3393 = vmatprep.subr.mxu0 0.0
        %3394 = vmatpush1.msra.mxu0 0.0
        %3395 = vmatprep.subr.mxu0 0.0
        %3396 = vmatpush1.msra.mxu0 0.0
        %3397 = vmatprep.subr.mxu0 0.0
        %3398 = vmatpush1.msra.mxu0 0.0
        %3399 = vmatprep.subr.mxu0 0.0
        %3400 = vmatpush1.msra.mxu0 0.0
        %3401 = vmatprep.subr.mxu0 0.0
        %3402 = vmatpush1.msra.mxu0 0.0
        %3403 = vmatprep.subr.mxu0 0.0
        %3404 = vmatpush1.msra.mxu0 0.0
        %3405 = vmatprep.subr.mxu0 0.0
        %3406 = vmatpush1.msra.mxu0 0.0
        %3407 = vmatprep.subr.mxu0 0.0
        %3408 = vmatpush1.msra.mxu0 0.0
        %3409 = vmatprep.subr.mxu0 0.0
        %3410 = vmatpush1.msra.mxu0 0.0
        %3411 = vmatprep.subr.mxu0 0.0
        %3412 = vmatpush1.msra.mxu0 0.0
        %3413 = vmatprep.subr.mxu0 0.0
        %3414 = vmatpush1.msra.mxu0 0.0
        %3415 = vmatprep.subr.mxu0 0.0
        %3416 = vmatpush1.msra.mxu0 0.0
        %3417 = vmatprep.subr.mxu0 0.0
        %3418 = vmatpush1.msra.mxu0 0.0
        %3419 = vmatprep.subr.mxu0 0.0
        %3420 = vmatpush1.msra.mxu0 0.0
        %3421 = vmatprep.subr.mxu0 0.0
        %3422 = vmatpush1.msra.mxu0 0.0
        %3423 = vmatprep.subr.mxu0 0.0
        %3424 = vmatpush1.msra.mxu0 0.0
        %3425 = vmatprep.subr.mxu0 0.0
        %3426 = vmatpush1.msra.mxu0 0.0
        %3427 = vmatprep.subr.mxu0 0.0
        %3428 = vmatpush1.msra.mxu0 0.0
        %3429 = vmatprep.subr.mxu0 0.0
        %3430 = vmatpush1.msra.mxu0 0.0
        %3431 = vmatprep.subr.mxu0 0.0
        %3432 = vmatpush1.msra.mxu0 0.0
        %3433 = vmatprep.subr.mxu0 0.0
        %3434 = vmatpush1.msra.mxu0 0.0
        %3435 = vmatprep.subr.mxu0 0.0
        %3436 = vmatpush1.msra.mxu0 0.0
        %3437 = vmatprep.subr.mxu0 0.0
        %3438 = vmatpush1.msra.mxu0 0.0
        %3439 = vmatprep.subr.mxu0 0.0
        %3440 = vmatpush1.msra.mxu0 0.0
        %3441 = vmatprep.subr.mxu0 0.0
        %3442 = vmatpush1.msra.mxu0 0.0
        %3443 = vmatprep.mubr.f32.mxu0 0.0
        %v3444 = vand.u32 %v3257, 4294901760
        %3445 = vmatmul.mubr.f32.gmra.mrb[0].mxu0 %v3444
        %v3446 = vpop.f32.mrb[0].mxu0
        %v3447 = vadd.f32 %v3341, %v3446
        %v3448 = vpop.f32.mrb[0].mxu0
        %3449 = vmatprep.mubr.f32.mxu0 0.0
        %v3450 = vand.u32 %v3260, 4294901760
        %3451 = vmatmul.mubr.f32.gmra.mrb[0].mxu0 %v3450
        %v3452 = vpop.f32.mrb[0].mxu0
        %v3453 = vadd.f32 %v3351, %v3452
        %v3454 = vpop.f32.mrb[0].mxu0
        %3455 = vmatprep.mubr.f32.mxu0 0.0
        %v3456 = vand.u32 %v3263, 4294901760
        %3457 = vmatmul.mubr.f32.gmra.mrb[0].mxu0 %v3456
        %v3458 = vpop.f32.mrb[0].mxu0
        %v3459 = vadd.f32 %v3361, %v3458
        %v3460 = vpop.f32.mrb[0].mxu0
        %3461 = vmatprep.mubr.f32.mxu0 0.0
        %v3462 = vand.u32 %v3266, 4294901760
        %3463 = vmatmul.mubr.f32.gmra.mrb[0].mxu0 %v3462
        %v3464 = vpop.f32.mrb[0].mxu0
        %v3465 = vadd.f32 %v3371, %v3464
        %v3466 = vpop.f32.mrb[0].mxu0
        %3467 = vdwg.mxu0
        %3468 = vmatprep.subr.mxu0 0.0
        %v3469 = vand.u32 %v3250, 4294901760
        %v3470 = vsub.f32 %v3250, %v3469
        %3471 = vmatpush1.msra.mxu0 %v3470
        %3472 = vmatprep.subr.mxu0 0.0
        %3473 = vmatpush1.msra.mxu0 0.0
        %3474 = vmatprep.subr.mxu0 0.0
        %3475 = vmatpush1.msra.mxu0 0.0
        %3476 = vmatprep.subr.mxu0 0.0
        %3477 = vmatpush1.msra.mxu0 0.0
        %3478 = vmatprep.subr.mxu0 0.0
        %3479 = vmatpush1.msra.mxu0 0.0
        %3480 = vmatprep.subr.mxu0 0.0
        %3481 = vmatpush1.msra.mxu0 0.0
        %3482 = vmatprep.subr.mxu0 0.0
        %3483 = vmatpush1.msra.mxu0 0.0
        %3484 = vmatprep.subr.mxu0 0.0
        %3485 = vmatpush1.msra.mxu0 0.0
        %3486 = vmatprep.subr.mxu0 0.0
        %3487 = vmatpush1.msra.mxu0 0.0
        %3488 = vmatprep.subr.mxu0 0.0
        %3489 = vmatpush1.msra.mxu0 0.0
        %3490 = vmatprep.subr.mxu0 0.0
        %3491 = vmatpush1.msra.mxu0 0.0
        %3492 = vmatprep.subr.mxu0 0.0
        %3493 = vmatpush1.msra.mxu0 0.0
        %3494 = vmatprep.subr.mxu0 0.0
        %3495 = vmatpush1.msra.mxu0 0.0
        %3496 = vmatprep.subr.mxu0 0.0
        %3497 = vmatpush1.msra.mxu0 0.0
        %3498 = vmatprep.subr.mxu0 0.0
        %3499 = vmatpush1.msra.mxu0 0.0
        %3500 = vmatprep.subr.mxu0 0.0
        %3501 = vmatpush1.msra.mxu0 0.0
        %3502 = vmatprep.subr.mxu0 0.0
        %3503 = vmatpush1.msra.mxu0 0.0
        %3504 = vmatprep.subr.mxu0 0.0
        %3505 = vmatpush1.msra.mxu0 0.0
        %3506 = vmatprep.subr.mxu0 0.0
        %3507 = vmatpush1.msra.mxu0 0.0
        %3508 = vmatprep.subr.mxu0 0.0
        %3509 = vmatpush1.msra.mxu0 0.0
        %3510 = vmatprep.subr.mxu0 0.0
        %3511 = vmatpush1.msra.mxu0 0.0
        %3512 = vmatprep.subr.mxu0 0.0
        %3513 = vmatpush1.msra.mxu0 0.0
        %3514 = vmatprep.subr.mxu0 0.0
        %3515 = vmatpush1.msra.mxu0 0.0
        %3516 = vmatprep.subr.mxu0 0.0
        %3517 = vmatpush1.msra.mxu0 0.0
        %3518 = vmatprep.subr.mxu0 0.0
        %3519 = vmatpush1.msra.mxu0 0.0
        %3520 = vmatprep.subr.mxu0 0.0
        %3521 = vmatpush1.msra.mxu0 0.0
        %3522 = vmatprep.subr.mxu0 0.0
        %3523 = vmatpush1.msra.mxu0 0.0
        %3524 = vmatprep.subr.mxu0 0.0
        %3525 = vmatpush1.msra.mxu0 0.0
        %3526 = vmatprep.subr.mxu0 0.0
        %3527 = vmatpush1.msra.mxu0 0.0
        %3528 = vmatprep.subr.mxu0 0.0
        %3529 = vmatpush1.msra.mxu0 0.0
        %3530 = vmatprep.subr.mxu0 0.0
        %3531 = vmatpush1.msra.mxu0 0.0
        %3532 = vmatprep.subr.mxu0 0.0
        %3533 = vmatpush1.msra.mxu0 0.0
        %3534 = vmatprep.mubr.f32.mxu0 0.0
        %v3535 = vand.u32 %v3257, 4294901760
        %v3536 = vsub.f32 %v3257, %v3535
        %3537 = vmatmul.mubr.f32.gmra.mrb[0].mxu0 %v3536
        %v3538 = vpop.f32.mrb[0].mxu0
        %v3539 = vadd.f32 %v3447, %v3538
        %v3540 = vpop.f32.mrb[0].mxu0
        %3541 = vmatprep.mubr.f32.mxu0 0.0
        %v3542 = vand.u32 %v3260, 4294901760
        %v3543 = vsub.f32 %v3260, %v3542
        %3544 = vmatmul.mubr.f32.gmra.mrb[0].mxu0 %v3543
        %v3545 = vpop.f32.mrb[0].mxu0
        %v3546 = vadd.f32 %v3453, %v3545
        %v3547 = vpop.f32.mrb[0].mxu0
        %3548 = vmatprep.mubr.f32.mxu0 0.0
        %v3549 = vand.u32 %v3263, 4294901760
        %v3550 = vsub.f32 %v3263, %v3549
        %3551 = vmatmul.mubr.f32.gmra.mrb[0].mxu0 %v3550
        %v3552 = vpop.f32.mrb[0].mxu0
        %v3553 = vadd.f32 %v3459, %v3552
        %v3554 = vpop.f32.mrb[0].mxu0
        %3555 = vmatprep.mubr.f32.mxu0 0.0
        %v3556 = vand.u32 %v3266, 4294901760
        %v3557 = vsub.f32 %v3266, %v3556
        %3558 = vmatmul.mubr.f32.gmra.mrb[0].mxu0 %v3557
        %v3559 = vpop.f32.mrb[0].mxu0
        %v3560 = vadd.f32 %v3465, %v3559
        %v3561 = vpop.f32.mrb[0].mxu0
        %3562 = vdwg.mxu0
        %3563 = vmatprep.subr.mxu0 0.0
        %v3564 = vand.u32 %v3250, 4294901760
        %3565 = vmatpush1.msra.mxu0 %v3564
        %3566 = vmatprep.subr.mxu0 0.0
        %3567 = vmatpush1.msra.mxu0 0.0
        %3568 = vmatprep.subr.mxu0 0.0
        %3569 = vmatpush1.msra.mxu0 0.0
        %3570 = vmatprep.subr.mxu0 0.0
        %3571 = vmatpush1.msra.mxu0 0.0
        %3572 = vmatprep.subr.mxu0 0.0
        %3573 = vmatpush1.msra.mxu0 0.0
        %3574 = vmatprep.subr.mxu0 0.0
        %3575 = vmatpush1.msra.mxu0 0.0
        %3576 = vmatprep.subr.mxu0 0.0
        %3577 = vmatpush1.msra.mxu0 0.0
        %3578 = vmatprep.subr.mxu0 0.0
        %3579 = vmatpush1.msra.mxu0 0.0
        %3580 = vmatprep.subr.mxu0 0.0
        %3581 = vmatpush1.msra.mxu0 0.0
        %3582 = vmatprep.subr.mxu0 0.0
        %3583 = vmatpush1.msra.mxu0 0.0
        %3584 = vmatprep.subr.mxu0 0.0
        %3585 = vmatpush1.msra.mxu0 0.0
        %3586 = vmatprep.subr.mxu0 0.0
        %3587 = vmatpush1.msra.mxu0 0.0
        %3588 = vmatprep.subr.mxu0 0.0
        %3589 = vmatpush1.msra.mxu0 0.0
        %3590 = vmatprep.subr.mxu0 0.0
        %3591 = vmatpush1.msra.mxu0 0.0
        %3592 = vmatprep.subr.mxu0 0.0
        %3593 = vmatpush1.msra.mxu0 0.0
        %3594 = vmatprep.subr.mxu0 0.0
        %3595 = vmatpush1.msra.mxu0 0.0
        %3596 = vmatprep.subr.mxu0 0.0
        %3597 = vmatpush1.msra.mxu0 0.0
        %3598 = vmatprep.subr.mxu0 0.0
        %3599 = vmatpush1.msra.mxu0 0.0
        %3600 = vmatprep.subr.mxu0 0.0
        %3601 = vmatpush1.msra.mxu0 0.0
        %3602 = vmatprep.subr.mxu0 0.0
        %3603 = vmatpush1.msra.mxu0 0.0
        %3604 = vmatprep.subr.mxu0 0.0
        %3605 = vmatpush1.msra.mxu0 0.0
        %3606 = vmatprep.subr.mxu0 0.0
        %3607 = vmatpush1.msra.mxu0 0.0
        %3608 = vmatprep.subr.mxu0 0.0
        %3609 = vmatpush1.msra.mxu0 0.0
        %3610 = vmatprep.subr.mxu0 0.0
        %3611 = vmatpush1.msra.mxu0 0.0
        %3612 = vmatprep.subr.mxu0 0.0
        %3613 = vmatpush1.msra.mxu0 0.0
        %3614 = vmatprep.subr.mxu0 0.0
        %3615 = vmatpush1.msra.mxu0 0.0
        %3616 = vmatprep.subr.mxu0 0.0
        %3617 = vmatpush1.msra.mxu0 0.0
        %3618 = vmatprep.subr.mxu0 0.0
        %3619 = vmatpush1.msra.mxu0 0.0
        %3620 = vmatprep.subr.mxu0 0.0
        %3621 = vmatpush1.msra.mxu0 0.0
        %3622 = vmatprep.subr.mxu0 0.0
        %3623 = vmatpush1.msra.mxu0 0.0
        %3624 = vmatprep.subr.mxu0 0.0
        %3625 = vmatpush1.msra.mxu0 0.0
        %3626 = vmatprep.subr.mxu0 0.0
        %3627 = vmatpush1.msra.mxu0 0.0
        %3628 = vmatprep.mubr.f32.mxu0 0.0
        %v3629 = vand.u32 %v3257, 4294901760
        %v3630 = vsub.f32 %v3257, %v3629
        %v3631 = vand.u32 %v3630, 4294901760
        %3632 = vmatmul.mubr.f32.gmra.mrb[0].mxu0 %v3631
        %v3633 = vpop.f32.mrb[0].mxu0
        %v3634 = vadd.f32 %v3539, %v3633
        %v3635 = vpop.f32.mrb[0].mxu0
        %3636 = vmatprep.mubr.f32.mxu0 0.0
        %v3637 = vand.u32 %v3260, 4294901760
        %v3638 = vsub.f32 %v3260, %v3637
        %v3639 = vand.u32 %v3638, 4294901760
        %3640 = vmatmul.mubr.f32.gmra.mrb[0].mxu0 %v3639
        %v3641 = vpop.f32.mrb[0].mxu0
        %v3642 = vadd.f32 %v3546, %v3641
        %v3643 = vpop.f32.mrb[0].mxu0
        %3644 = vmatprep.mubr.f32.mxu0 0.0
        %v3645 = vand.u32 %v3263, 4294901760
        %v3646 = vsub.f32 %v3263, %v3645
        %v3647 = vand.u32 %v3646, 4294901760
        %3648 = vmatmul.mubr.f32.gmra.mrb[0].mxu0 %v3647
        %v3649 = vpop.f32.mrb[0].mxu0
        %v3650 = vadd.f32 %v3553, %v3649
        %v3651 = vpop.f32.mrb[0].mxu0
        %3652 = vmatprep.mubr.f32.mxu0 0.0
        %v3653 = vand.u32 %v3266, 4294901760
        %v3654 = vsub.f32 %v3266, %v3653
        %v3655 = vand.u32 %v3654, 4294901760
        %3656 = vmatmul.mubr.f32.gmra.mrb[0].mxu0 %v3655
        %v3657 = vpop.f32.mrb[0].mxu0
        %v3658 = vadd.f32 %v3560, %v3657
        %v3659 = vpop.f32.mrb[0].mxu0
        %3660 = vdwg.mxu0
        %3661 = vmatprep.subr.mxu0 0.0
        %v3662 = vand.u32 %v3250, 4294901760
        %v3663 = vsub.f32 %v3250, %v3662
        %v3664 = vand.u32 %v3663, 4294901760
        %3665 = vmatpush1.msra.mxu0 %v3664
        %3666 = vmatprep.subr.mxu0 0.0
        %3667 = vmatpush1.msra.mxu0 0.0
        %3668 = vmatprep.subr.mxu0 0.0
        %3669 = vmatpush1.msra.mxu0 0.0
        %3670 = vmatprep.subr.mxu0 0.0
        %3671 = vmatpush1.msra.mxu0 0.0
        %3672 = vmatprep.subr.mxu0 0.0
        %3673 = vmatpush1.msra.mxu0 0.0
        %3674 = vmatprep.subr.mxu0 0.0
        %3675 = vmatpush1.msra.mxu0 0.0
        %3676 = vmatprep.subr.mxu0 0.0
        %3677 = vmatpush1.msra.mxu0 0.0
        %3678 = vmatprep.subr.mxu0 0.0
        %3679 = vmatpush1.msra.mxu0 0.0
        %3680 = vmatprep.subr.mxu0 0.0
        %3681 = vmatpush1.msra.mxu0 0.0
        %3682 = vmatprep.subr.mxu0 0.0
        %3683 = vmatpush1.msra.mxu0 0.0
        %3684 = vmatprep.subr.mxu0 0.0
        %3685 = vmatpush1.msra.mxu0 0.0
        %3686 = vmatprep.subr.mxu0 0.0
        %3687 = vmatpush1.msra.mxu0 0.0
        %3688 = vmatprep.subr.mxu0 0.0
        %3689 = vmatpush1.msra.mxu0 0.0
        %3690 = vmatprep.subr.mxu0 0.0
        %3691 = vmatpush1.msra.mxu0 0.0
        %3692 = vmatprep.subr.mxu0 0.0
        %3693 = vmatpush1.msra.mxu0 0.0
        %3694 = vmatprep.subr.mxu0 0.0
        %3695 = vmatpush1.msra.mxu0 0.0
        %3696 = vmatprep.subr.mxu0 0.0
        %3697 = vmatpush1.msra.mxu0 0.0
        %3698 = vmatprep.subr.mxu0 0.0
        %3699 = vmatpush1.msra.mxu0 0.0
        %3700 = vmatprep.subr.mxu0 0.0
        %3701 = vmatpush1.msra.mxu0 0.0
        %3702 = vmatprep.subr.mxu0 0.0
        %3703 = vmatpush1.msra.mxu0 0.0
        %3704 = vmatprep.subr.mxu0 0.0
        %3705 = vmatpush1.msra.mxu0 0.0
        %3706 = vmatprep.subr.mxu0 0.0
        %3707 = vmatpush1.msra.mxu0 0.0
        %3708 = vmatprep.subr.mxu0 0.0
        %3709 = vmatpush1.msra.mxu0 0.0
        %3710 = vmatprep.subr.mxu0 0.0
        %3711 = vmatpush1.msra.mxu0 0.0
        %3712 = vmatprep.subr.mxu0 0.0
        %3713 = vmatpush1.msra.mxu0 0.0
        %3714 = vmatprep.subr.mxu0 0.0
        %3715 = vmatpush1.msra.mxu0 0.0
        %3716 = vmatprep.subr.mxu0 0.0
        %3717 = vmatpush1.msra.mxu0 0.0
        %3718 = vmatprep.subr.mxu0 0.0
        %3719 = vmatpush1.msra.mxu0 0.0
        %3720 = vmatprep.subr.mxu0 0.0
        %3721 = vmatpush1.msra.mxu0 0.0
        %3722 = vmatprep.subr.mxu0 0.0
        %3723 = vmatpush1.msra.mxu0 0.0
        %3724 = vmatprep.subr.mxu0 0.0
        %3725 = vmatpush1.msra.mxu0 0.0
        %3726 = vmatprep.subr.mxu0 0.0
        %3727 = vmatpush1.msra.mxu0 0.0
        %3728 = vmatprep.mubr.f32.mxu0 0.0
        %v3729 = vand.u32 %v3257, 4294901760
        %3730 = vmatmul.mubr.f32.gmra.mrb[0].mxu0 %v3729
        %v3731 = vpop.f32.mrb[0].mxu0
        %v3732 = vadd.f32 %v3634, %v3731
        %v3733 = vpop.f32.mrb[0].mxu0
        %3734 = vmatprep.mubr.f32.mxu0 0.0
        %v3735 = vand.u32 %v3260, 4294901760
        %3736 = vmatmul.mubr.f32.gmra.mrb[0].mxu0 %v3735
        %v3737 = vpop.f32.mrb[0].mxu0
        %v3738 = vadd.f32 %v3642, %v3737
        %v3739 = vpop.f32.mrb[0].mxu0
        %3740 = vmatprep.mubr.f32.mxu0 0.0
        %v3741 = vand.u32 %v3263, 4294901760
        %3742 = vmatmul.mubr.f32.gmra.mrb[0].mxu0 %v3741
        %v3743 = vpop.f32.mrb[0].mxu0
        %v3744 = vadd.f32 %v3650, %v3743
        %v3745 = vpop.f32.mrb[0].mxu0
        %3746 = vmatprep.mubr.f32.mxu0 0.0
        %v3747 = vand.u32 %v3266, 4294901760
        %3748 = vmatmul.mubr.f32.gmra.mrb[0].mxu0 %v3747
        %v3749 = vpop.f32.mrb[0].mxu0
        %v3750 = vadd.f32 %v3658, %v3749
        %v3751 = vpop.f32.mrb[0].mxu0
        %3752 = vdwg.mxu0
        %3753 = vmatprep.subr.mxu0 0.0
        %v3754 = vand.u32 %v3250, 4294901760
        %3755 = vmatpush1.msra.mxu0 %v3754
        %3756 = vmatprep.subr.mxu0 0.0
        %3757 = vmatpush1.msra.mxu0 0.0
        %3758 = vmatprep.subr.mxu0 0.0
        %3759 = vmatpush1.msra.mxu0 0.0
        %3760 = vmatprep.subr.mxu0 0.0
        %3761 = vmatpush1.msra.mxu0 0.0
        %3762 = vmatprep.subr.mxu0 0.0
        %3763 = vmatpush1.msra.mxu0 0.0
        %3764 = vmatprep.subr.mxu0 0.0
        %3765 = vmatpush1.msra.mxu0 0.0
        %3766 = vmatprep.subr.mxu0 0.0
        %3767 = vmatpush1.msra.mxu0 0.0
        %3768 = vmatprep.subr.mxu0 0.0
        %3769 = vmatpush1.msra.mxu0 0.0
        %3770 = vmatprep.subr.mxu0 0.0
        %3771 = vmatpush1.msra.mxu0 0.0
        %3772 = vmatprep.subr.mxu0 0.0
        %3773 = vmatpush1.msra.mxu0 0.0
        %3774 = vmatprep.subr.mxu0 0.0
        %3775 = vmatpush1.msra.mxu0 0.0
        %3776 = vmatprep.subr.mxu0 0.0
        %3777 = vmatpush1.msra.mxu0 0.0
        %3778 = vmatprep.subr.mxu0 0.0
        %3779 = vmatpush1.msra.mxu0 0.0
        %3780 = vmatprep.subr.mxu0 0.0
        %3781 = vmatpush1.msra.mxu0 0.0
        %3782 = vmatprep.subr.mxu0 0.0
        %3783 = vmatpush1.msra.mxu0 0.0
        %3784 = vmatprep.subr.mxu0 0.0
        %3785 = vmatpush1.msra.mxu0 0.0
        %3786 = vmatprep.subr.mxu0 0.0
        %3787 = vmatpush1.msra.mxu0 0.0
        %3788 = vmatprep.subr.mxu0 0.0
        %3789 = vmatpush1.msra.mxu0 0.0
        %3790 = vmatprep.subr.mxu0 0.0
        %3791 = vmatpush1.msra.mxu0 0.0
        %3792 = vmatprep.subr.mxu0 0.0
        %3793 = vmatpush1.msra.mxu0 0.0
        %3794 = vmatprep.subr.mxu0 0.0
        %3795 = vmatpush1.msra.mxu0 0.0
        %3796 = vmatprep.subr.mxu0 0.0
        %3797 = vmatpush1.msra.mxu0 0.0
        %3798 = vmatprep.subr.mxu0 0.0
        %3799 = vmatpush1.msra.mxu0 0.0
        %3800 = vmatprep.subr.mxu0 0.0
        %3801 = vmatpush1.msra.mxu0 0.0
        %3802 = vmatprep.subr.mxu0 0.0
        %3803 = vmatpush1.msra.mxu0 0.0
        %3804 = vmatprep.subr.mxu0 0.0
        %3805 = vmatpush1.msra.mxu0 0.0
        %3806 = vmatprep.subr.mxu0 0.0
        %3807 = vmatpush1.msra.mxu0 0.0
        %3808 = vmatprep.subr.mxu0 0.0
        %3809 = vmatpush1.msra.mxu0 0.0
        %3810 = vmatprep.subr.mxu0 0.0
        %3811 = vmatpush1.msra.mxu0 0.0
        %3812 = vmatprep.subr.mxu0 0.0
        %3813 = vmatpush1.msra.mxu0 0.0
        %3814 = vmatprep.subr.mxu0 0.0
        %3815 = vmatpush1.msra.mxu0 0.0
        %3816 = vmatprep.subr.mxu0 0.0
        %3817 = vmatpush1.msra.mxu0 0.0
        %3818 = vmatprep.mubr.f32.mxu0 0.0
        %v3819 = vand.u32 %v3257, 4294901760
        %3820 = vmatmul.mubr.f32.gmra.mrb[0].mxu0 %v3819
        %v3821 = vpop.f32.mrb[0].mxu0
        %v3822 = vadd.f32 %v3732, %v3821
        %v3823 = vpop.f32.mrb[0].mxu0
        %3824 = vmatprep.mubr.f32.mxu0 0.0
        %v3825 = vand.u32 %v3260, 4294901760
        %3826 = vmatmul.mubr.f32.gmra.mrb[0].mxu0 %v3825
        %v3827 = vpop.f32.mrb[0].mxu0
        %v3828 = vadd.f32 %v3738, %v3827
        %v3829 = vpop.f32.mrb[0].mxu0
        %3830 = vmatprep.mubr.f32.mxu0 0.0
        %v3831 = vand.u32 %v3263, 4294901760
        %3832 = vmatmul.mubr.f32.gmra.mrb[0].mxu0 %v3831
        %v3833 = vpop.f32.mrb[0].mxu0
        %v3834 = vadd.f32 %v3744, %v3833
        %v3835 = vpop.f32.mrb[0].mxu0
        %3836 = vmatprep.mubr.f32.mxu0 0.0
        %v3837 = vand.u32 %v3266, 4294901760
        %3838 = vmatmul.mubr.f32.gmra.mrb[0].mxu0 %v3837
        %v3839 = vpop.f32.mrb[0].mxu0
        %v3840 = vadd.f32 %v3750, %v3839
        %v3841 = vpop.f32.mrb[0].mxu0
        %3842 = vdwg.mxu0
        %v3843 = vadd.f32 %v3243, %v3822
        %v3844 = vadd.f32 %v3244, %v3828
        %v3845 = vadd.f32 %v3245, %v3834
        %v3846 = vadd.f32 %v3246, %v3840
        %3848 = vrot.lane.b32.xlu0 %v241, 1
        %v3849 = vpop.permute.xlu0 %3848
        %v3851 = vsel %vm263, %v3849, 0.0
        %s3852 = scalar_lea.vmem %s2, 192
        %v3853 = vld [vmem:[%s3852] sm:$0xff]
        %v3854 = vld [vmem:[%s3852 + $0x8] sm:$0xff]
        %v3855 = vld [vmem:[%s3852 + $0x10] sm:$0xff]
        %v3856 = vld [vmem:[%s3852 + $0x18] sm:$0xff]
        %v3858 = vsel %vm274, %v3853, 0
        %v3861 = vsel %vm274, %v3854, 0
        %v3864 = vsel %vm274, %v3855, 0
        %v3867 = vsel %vm274, %v3856, 0
        %3869 = vmatprep.subr.mxu0 0.0
        %v3870 = vand.u32 %v3851, 4294901760
        %3871 = vmatpush1.msra.mxu0 %v3870
        %3872 = vmatprep.subr.mxu0 0.0
        %3873 = vmatpush1.msra.mxu0 0.0
        %3874 = vmatprep.subr.mxu0 0.0
        %3875 = vmatpush1.msra.mxu0 0.0
        %3876 = vmatprep.subr.mxu0 0.0
        %3877 = vmatpush1.msra.mxu0 0.0
        %3878 = vmatprep.subr.mxu0 0.0
        %3879 = vmatpush1.msra.mxu0 0.0
        %3880 = vmatprep.subr.mxu0 0.0
        %3881 = vmatpush1.msra.mxu0 0.0
        %3882 = vmatprep.subr.mxu0 0.0
        %3883 = vmatpush1.msra.mxu0 0.0
        %3884 = vmatprep.subr.mxu0 0.0
        %3885 = vmatpush1.msra.mxu0 0.0
        %3886 = vmatprep.subr.mxu0 0.0
        %3887 = vmatpush1.msra.mxu0 0.0
        %3888 = vmatprep.subr.mxu0 0.0
        %3889 = vmatpush1.msra.mxu0 0.0
        %3890 = vmatprep.subr.mxu0 0.0
        %3891 = vmatpush1.msra.mxu0 0.0
        %3892 = vmatprep.subr.mxu0 0.0
        %3893 = vmatpush1.msra.mxu0 0.0
        %3894 = vmatprep.subr.mxu0 0.0
        %3895 = vmatpush1.msra.mxu0 0.0
        %3896 = vmatprep.subr.mxu0 0.0
        %3897 = vmatpush1.msra.mxu0 0.0
        %3898 = vmatprep.subr.mxu0 0.0
        %3899 = vmatpush1.msra.mxu0 0.0
        %3900 = vmatprep.subr.mxu0 0.0
        %3901 = vmatpush1.msra.mxu0 0.0
        %3902 = vmatprep.subr.mxu0 0.0
        %3903 = vmatpush1.msra.mxu0 0.0
        %3904 = vmatprep.subr.mxu0 0.0
        %3905 = vmatpush1.msra.mxu0 0.0
        %3906 = vmatprep.subr.mxu0 0.0
        %3907 = vmatpush1.msra.mxu0 0.0
        %3908 = vmatprep.subr.mxu0 0.0
        %3909 = vmatpush1.msra.mxu0 0.0
        %3910 = vmatprep.subr.mxu0 0.0
        %3911 = vmatpush1.msra.mxu0 0.0
        %3912 = vmatprep.subr.mxu0 0.0
        %3913 = vmatpush1.msra.mxu0 0.0
        %3914 = vmatprep.subr.mxu0 0.0
        %3915 = vmatpush1.msra.mxu0 0.0
        %3916 = vmatprep.subr.mxu0 0.0
        %3917 = vmatpush1.msra.mxu0 0.0
        %3918 = vmatprep.subr.mxu0 0.0
        %3919 = vmatpush1.msra.mxu0 0.0
        %3920 = vmatprep.subr.mxu0 0.0
        %3921 = vmatpush1.msra.mxu0 0.0
        %3922 = vmatprep.subr.mxu0 0.0
        %3923 = vmatpush1.msra.mxu0 0.0
        %3924 = vmatprep.subr.mxu0 0.0
        %3925 = vmatpush1.msra.mxu0 0.0
        %3926 = vmatprep.subr.mxu0 0.0
        %3927 = vmatpush1.msra.mxu0 0.0
        %3928 = vmatprep.subr.mxu0 0.0
        %3929 = vmatpush1.msra.mxu0 0.0
        %3930 = vmatprep.subr.mxu0 0.0
        %3931 = vmatpush1.msra.mxu0 0.0
        %3932 = vmatprep.subr.mxu0 0.0
        %3933 = vmatpush1.msra.mxu0 0.0
        %3934 = vmatprep.mubr.f32.mxu0 0.0
        %v3935 = vand.u32 %v3858, 4294901760
        %v3936 = vsub.f32 %v3858, %v3935
        %v3937 = vand.u32 %v3936, 4294901760
        %v3938 = vsub.f32 %v3936, %v3937
        %v3939 = vand.u32 %v3938, 4294901760
        %3940 = vmatmul.mubr.f32.gmra.mrb[0].mxu0 %v3939
        %v3941 = vpop.f32.mrb[0].mxu0
        %v3942 = vadd.f32 0.0, %v3941
        %v3943 = vpop.f32.mrb[0].mxu0
        %3944 = vmatprep.mubr.f32.mxu0 0.0
        %v3945 = vand.u32 %v3861, 4294901760
        %v3946 = vsub.f32 %v3861, %v3945
        %v3947 = vand.u32 %v3946, 4294901760
        %v3948 = vsub.f32 %v3946, %v3947
        %v3949 = vand.u32 %v3948, 4294901760
        %3950 = vmatmul.mubr.f32.gmra.mrb[0].mxu0 %v3949
        %v3951 = vpop.f32.mrb[0].mxu0
        %v3952 = vadd.f32 0.0, %v3951
        %v3953 = vpop.f32.mrb[0].mxu0
        %3954 = vmatprep.mubr.f32.mxu0 0.0
        %v3955 = vand.u32 %v3864, 4294901760
        %v3956 = vsub.f32 %v3864, %v3955
        %v3957 = vand.u32 %v3956, 4294901760
        %v3958 = vsub.f32 %v3956, %v3957
        %v3959 = vand.u32 %v3958, 4294901760
        %3960 = vmatmul.mubr.f32.gmra.mrb[0].mxu0 %v3959
        %v3961 = vpop.f32.mrb[0].mxu0
        %v3962 = vadd.f32 0.0, %v3961
        %v3963 = vpop.f32.mrb[0].mxu0
        %3964 = vmatprep.mubr.f32.mxu0 0.0
        %v3965 = vand.u32 %v3867, 4294901760
        %v3966 = vsub.f32 %v3867, %v3965
        %v3967 = vand.u32 %v3966, 4294901760
        %v3968 = vsub.f32 %v3966, %v3967
        %v3969 = vand.u32 %v3968, 4294901760
        %3970 = vmatmul.mubr.f32.gmra.mrb[0].mxu0 %v3969
        %v3971 = vpop.f32.mrb[0].mxu0
        %v3972 = vadd.f32 0.0, %v3971
        %v3973 = vpop.f32.mrb[0].mxu0
        %3974 = vdwg.mxu0
        %3975 = vmatprep.subr.mxu0 0.0
        %v3976 = vand.u32 %v3851, 4294901760
        %v3977 = vsub.f32 %v3851, %v3976
        %v3978 = vand.u32 %v3977, 4294901760
        %v3979 = vsub.f32 %v3977, %v3978
        %v3980 = vand.u32 %v3979, 4294901760
        %3981 = vmatpush1.msra.mxu0 %v3980
        %3982 = vmatprep.subr.mxu0 0.0
        %3983 = vmatpush1.msra.mxu0 0.0
        %3984 = vmatprep.subr.mxu0 0.0
        %3985 = vmatpush1.msra.mxu0 0.0
        %3986 = vmatprep.subr.mxu0 0.0
        %3987 = vmatpush1.msra.mxu0 0.0
        %3988 = vmatprep.subr.mxu0 0.0
        %3989 = vmatpush1.msra.mxu0 0.0
        %3990 = vmatprep.subr.mxu0 0.0
        %3991 = vmatpush1.msra.mxu0 0.0
        %3992 = vmatprep.subr.mxu0 0.0
        %3993 = vmatpush1.msra.mxu0 0.0
        %3994 = vmatprep.subr.mxu0 0.0
        %3995 = vmatpush1.msra.mxu0 0.0
        %3996 = vmatprep.subr.mxu0 0.0
        %3997 = vmatpush1.msra.mxu0 0.0
        %3998 = vmatprep.subr.mxu0 0.0
        %3999 = vmatpush1.msra.mxu0 0.0
        %4000 = vmatprep.subr.mxu0 0.0
        %4001 = vmatpush1.msra.mxu0 0.0
        %4002 = vmatprep.subr.mxu0 0.0
        %4003 = vmatpush1.msra.mxu0 0.0
        %4004 = vmatprep.subr.mxu0 0.0
        %4005 = vmatpush1.msra.mxu0 0.0
        %4006 = vmatprep.subr.mxu0 0.0
        %4007 = vmatpush1.msra.mxu0 0.0
        %4008 = vmatprep.subr.mxu0 0.0
        %4009 = vmatpush1.msra.mxu0 0.0
        %4010 = vmatprep.subr.mxu0 0.0
        %4011 = vmatpush1.msra.mxu0 0.0
        %4012 = vmatprep.subr.mxu0 0.0
        %4013 = vmatpush1.msra.mxu0 0.0
        %4014 = vmatprep.subr.mxu0 0.0
        %4015 = vmatpush1.msra.mxu0 0.0
        %4016 = vmatprep.subr.mxu0 0.0
        %4017 = vmatpush1.msra.mxu0 0.0
        %4018 = vmatprep.subr.mxu0 0.0
        %4019 = vmatpush1.msra.mxu0 0.0
        %4020 = vmatprep.subr.mxu0 0.0
        %4021 = vmatpush1.msra.mxu0 0.0
        %4022 = vmatprep.subr.mxu0 0.0
        %4023 = vmatpush1.msra.mxu0 0.0
        %4024 = vmatprep.subr.mxu0 0.0
        %4025 = vmatpush1.msra.mxu0 0.0
        %4026 = vmatprep.subr.mxu0 0.0
        %4027 = vmatpush1.msra.mxu0 0.0
        %4028 = vmatprep.subr.mxu0 0.0
        %4029 = vmatpush1.msra.mxu0 0.0
        %4030 = vmatprep.subr.mxu0 0.0
        %4031 = vmatpush1.msra.mxu0 0.0
        %4032 = vmatprep.subr.mxu0 0.0
        %4033 = vmatpush1.msra.mxu0 0.0
        %4034 = vmatprep.subr.mxu0 0.0
        %4035 = vmatpush1.msra.mxu0 0.0
        %4036 = vmatprep.subr.mxu0 0.0
        %4037 = vmatpush1.msra.mxu0 0.0
        %4038 = vmatprep.subr.mxu0 0.0
        %4039 = vmatpush1.msra.mxu0 0.0
        %4040 = vmatprep.subr.mxu0 0.0
        %4041 = vmatpush1.msra.mxu0 0.0
        %4042 = vmatprep.subr.mxu0 0.0
        %4043 = vmatpush1.msra.mxu0 0.0
        %4044 = vmatprep.mubr.f32.mxu0 0.0
        %v4045 = vand.u32 %v3858, 4294901760
        %4046 = vmatmul.mubr.f32.gmra.mrb[0].mxu0 %v4045
        %v4047 = vpop.f32.mrb[0].mxu0
        %v4048 = vadd.f32 %v3942, %v4047
        %v4049 = vpop.f32.mrb[0].mxu0
        %4050 = vmatprep.mubr.f32.mxu0 0.0
        %v4051 = vand.u32 %v3861, 4294901760
        %4052 = vmatmul.mubr.f32.gmra.mrb[0].mxu0 %v4051
        %v4053 = vpop.f32.mrb[0].mxu0
        %v4054 = vadd.f32 %v3952, %v4053
        %v4055 = vpop.f32.mrb[0].mxu0
        %4056 = vmatprep.mubr.f32.mxu0 0.0
        %v4057 = vand.u32 %v3864, 4294901760
        %4058 = vmatmul.mubr.f32.gmra.mrb[0].mxu0 %v4057
        %v4059 = vpop.f32.mrb[0].mxu0
        %v4060 = vadd.f32 %v3962, %v4059
        %v4061 = vpop.f32.mrb[0].mxu0
        %4062 = vmatprep.mubr.f32.mxu0 0.0
        %v4063 = vand.u32 %v3867, 4294901760
        %4064 = vmatmul.mubr.f32.gmra.mrb[0].mxu0 %v4063
        %v4065 = vpop.f32.mrb[0].mxu0
        %v4066 = vadd.f32 %v3972, %v4065
        %v4067 = vpop.f32.mrb[0].mxu0
        %4068 = vdwg.mxu0
        %4069 = vmatprep.subr.mxu0 0.0
        %v4070 = vand.u32 %v3851, 4294901760
        %v4071 = vsub.f32 %v3851, %v4070
        %4072 = vmatpush1.msra.mxu0 %v4071
        %4073 = vmatprep.subr.mxu0 0.0
        %4074 = vmatpush1.msra.mxu0 0.0
        %4075 = vmatprep.subr.mxu0 0.0
        %4076 = vmatpush1.msra.mxu0 0.0
        %4077 = vmatprep.subr.mxu0 0.0
        %4078 = vmatpush1.msra.mxu0 0.0
        %4079 = vmatprep.subr.mxu0 0.0
        %4080 = vmatpush1.msra.mxu0 0.0
        %4081 = vmatprep.subr.mxu0 0.0
        %4082 = vmatpush1.msra.mxu0 0.0
        %4083 = vmatprep.subr.mxu0 0.0
        %4084 = vmatpush1.msra.mxu0 0.0
        %4085 = vmatprep.subr.mxu0 0.0
        %4086 = vmatpush1.msra.mxu0 0.0
        %4087 = vmatprep.subr.mxu0 0.0
        %4088 = vmatpush1.msra.mxu0 0.0
        %4089 = vmatprep.subr.mxu0 0.0
        %4090 = vmatpush1.msra.mxu0 0.0
        %4091 = vmatprep.subr.mxu0 0.0
        %4092 = vmatpush1.msra.mxu0 0.0
        %4093 = vmatprep.subr.mxu0 0.0
        %4094 = vmatpush1.msra.mxu0 0.0
        %4095 = vmatprep.subr.mxu0 0.0
        %4096 = vmatpush1.msra.mxu0 0.0
        %4097 = vmatprep.subr.mxu0 0.0
        %4098 = vmatpush1.msra.mxu0 0.0
        %4099 = vmatprep.subr.mxu0 0.0
        %4100 = vmatpush1.msra.mxu0 0.0
        %4101 = vmatprep.subr.mxu0 0.0
        %4102 = vmatpush1.msra.mxu0 0.0
        %4103 = vmatprep.subr.mxu0 0.0
        %4104 = vmatpush1.msra.mxu0 0.0
        %4105 = vmatprep.subr.mxu0 0.0
        %4106 = vmatpush1.msra.mxu0 0.0
        %4107 = vmatprep.subr.mxu0 0.0
        %4108 = vmatpush1.msra.mxu0 0.0
        %4109 = vmatprep.subr.mxu0 0.0
        %4110 = vmatpush1.msra.mxu0 0.0
        %4111 = vmatprep.subr.mxu0 0.0
        %4112 = vmatpush1.msra.mxu0 0.0
        %4113 = vmatprep.subr.mxu0 0.0
        %4114 = vmatpush1.msra.mxu0 0.0
        %4115 = vmatprep.subr.mxu0 0.0
        %4116 = vmatpush1.msra.mxu0 0.0
        %4117 = vmatprep.subr.mxu0 0.0
        %4118 = vmatpush1.msra.mxu0 0.0
        %4119 = vmatprep.subr.mxu0 0.0
        %4120 = vmatpush1.msra.mxu0 0.0
        %4121 = vmatprep.subr.mxu0 0.0
        %4122 = vmatpush1.msra.mxu0 0.0
        %4123 = vmatprep.subr.mxu0 0.0
        %4124 = vmatpush1.msra.mxu0 0.0
        %4125 = vmatprep.subr.mxu0 0.0
        %4126 = vmatpush1.msra.mxu0 0.0
        %4127 = vmatprep.subr.mxu0 0.0
        %4128 = vmatpush1.msra.mxu0 0.0
        %4129 = vmatprep.subr.mxu0 0.0
        %4130 = vmatpush1.msra.mxu0 0.0
        %4131 = vmatprep.subr.mxu0 0.0
        %4132 = vmatpush1.msra.mxu0 0.0
        %4133 = vmatprep.subr.mxu0 0.0
        %4134 = vmatpush1.msra.mxu0 0.0
        %4135 = vmatprep.mubr.f32.mxu0 0.0
        %v4136 = vand.u32 %v3858, 4294901760
        %v4137 = vsub.f32 %v3858, %v4136
        %4138 = vmatmul.mubr.f32.gmra.mrb[0].mxu0 %v4137
        %v4139 = vpop.f32.mrb[0].mxu0
        %v4140 = vadd.f32 %v4048, %v4139
        %v4141 = vpop.f32.mrb[0].mxu0
        %4142 = vmatprep.mubr.f32.mxu0 0.0
        %v4143 = vand.u32 %v3861, 4294901760
        %v4144 = vsub.f32 %v3861, %v4143
        %4145 = vmatmul.mubr.f32.gmra.mrb[0].mxu0 %v4144
        %v4146 = vpop.f32.mrb[0].mxu0
        %v4147 = vadd.f32 %v4054, %v4146
        %v4148 = vpop.f32.mrb[0].mxu0
        %4149 = vmatprep.mubr.f32.mxu0 0.0
        %v4150 = vand.u32 %v3864, 4294901760
        %v4151 = vsub.f32 %v3864, %v4150
        %4152 = vmatmul.mubr.f32.gmra.mrb[0].mxu0 %v4151
        %v4153 = vpop.f32.mrb[0].mxu0
        %v4154 = vadd.f32 %v4060, %v4153
        %v4155 = vpop.f32.mrb[0].mxu0
        %4156 = vmatprep.mubr.f32.mxu0 0.0
        %v4157 = vand.u32 %v3867, 4294901760
        %v4158 = vsub.f32 %v3867, %v4157
        %4159 = vmatmul.mubr.f32.gmra.mrb[0].mxu0 %v4158
        %v4160 = vpop.f32.mrb[0].mxu0
        %v4161 = vadd.f32 %v4066, %v4160
        %v4162 = vpop.f32.mrb[0].mxu0
        %4163 = vdwg.mxu0
        %4164 = vmatprep.subr.mxu0 0.0
        %v4165 = vand.u32 %v3851, 4294901760
        %4166 = vmatpush1.msra.mxu0 %v4165
        %4167 = vmatprep.subr.mxu0 0.0
        %4168 = vmatpush1.msra.mxu0 0.0
        %4169 = vmatprep.subr.mxu0 0.0
        %4170 = vmatpush1.msra.mxu0 0.0
        %4171 = vmatprep.subr.mxu0 0.0
        %4172 = vmatpush1.msra.mxu0 0.0
        %4173 = vmatprep.subr.mxu0 0.0
        %4174 = vmatpush1.msra.mxu0 0.0
        %4175 = vmatprep.subr.mxu0 0.0
        %4176 = vmatpush1.msra.mxu0 0.0
        %4177 = vmatprep.subr.mxu0 0.0
        %4178 = vmatpush1.msra.mxu0 0.0
        %4179 = vmatprep.subr.mxu0 0.0
        %4180 = vmatpush1.msra.mxu0 0.0
        %4181 = vmatprep.subr.mxu0 0.0
        %4182 = vmatpush1.msra.mxu0 0.0
        %4183 = vmatprep.subr.mxu0 0.0
        %4184 = vmatpush1.msra.mxu0 0.0
        %4185 = vmatprep.subr.mxu0 0.0
        %4186 = vmatpush1.msra.mxu0 0.0
        %4187 = vmatprep.subr.mxu0 0.0
        %4188 = vmatpush1.msra.mxu0 0.0
        %4189 = vmatprep.subr.mxu0 0.0
        %4190 = vmatpush1.msra.mxu0 0.0
        %4191 = vmatprep.subr.mxu0 0.0
        %4192 = vmatpush1.msra.mxu0 0.0
        %4193 = vmatprep.subr.mxu0 0.0
        %4194 = vmatpush1.msra.mxu0 0.0
        %4195 = vmatprep.subr.mxu0 0.0
        %4196 = vmatpush1.msra.mxu0 0.0
        %4197 = vmatprep.subr.mxu0 0.0
        %4198 = vmatpush1.msra.mxu0 0.0
        %4199 = vmatprep.subr.mxu0 0.0
        %4200 = vmatpush1.msra.mxu0 0.0
        %4201 = vmatprep.subr.mxu0 0.0
        %4202 = vmatpush1.msra.mxu0 0.0
        %4203 = vmatprep.subr.mxu0 0.0
        %4204 = vmatpush1.msra.mxu0 0.0
        %4205 = vmatprep.subr.mxu0 0.0
        %4206 = vmatpush1.msra.mxu0 0.0
        %4207 = vmatprep.subr.mxu0 0.0
        %4208 = vmatpush1.msra.mxu0 0.0
        %4209 = vmatprep.subr.mxu0 0.0
        %4210 = vmatpush1.msra.mxu0 0.0
        %4211 = vmatprep.subr.mxu0 0.0
        %4212 = vmatpush1.msra.mxu0 0.0
        %4213 = vmatprep.subr.mxu0 0.0
        %4214 = vmatpush1.msra.mxu0 0.0
        %4215 = vmatprep.subr.mxu0 0.0
        %4216 = vmatpush1.msra.mxu0 0.0
        %4217 = vmatprep.subr.mxu0 0.0
        %4218 = vmatpush1.msra.mxu0 0.0
        %4219 = vmatprep.subr.mxu0 0.0
        %4220 = vmatpush1.msra.mxu0 0.0
        %4221 = vmatprep.subr.mxu0 0.0
        %4222 = vmatpush1.msra.mxu0 0.0
        %4223 = vmatprep.subr.mxu0 0.0
        %4224 = vmatpush1.msra.mxu0 0.0
        %4225 = vmatprep.subr.mxu0 0.0
        %4226 = vmatpush1.msra.mxu0 0.0
        %4227 = vmatprep.subr.mxu0 0.0
        %4228 = vmatpush1.msra.mxu0 0.0
        %4229 = vmatprep.mubr.f32.mxu0 0.0
        %v4230 = vand.u32 %v3858, 4294901760
        %v4231 = vsub.f32 %v3858, %v4230
        %v4232 = vand.u32 %v4231, 4294901760
        %4233 = vmatmul.mubr.f32.gmra.mrb[0].mxu0 %v4232
        %v4234 = vpop.f32.mrb[0].mxu0
        %v4235 = vadd.f32 %v4140, %v4234
        %v4236 = vpop.f32.mrb[0].mxu0
        %4237 = vmatprep.mubr.f32.mxu0 0.0
        %v4238 = vand.u32 %v3861, 4294901760
        %v4239 = vsub.f32 %v3861, %v4238
        %v4240 = vand.u32 %v4239, 4294901760
        %4241 = vmatmul.mubr.f32.gmra.mrb[0].mxu0 %v4240
        %v4242 = vpop.f32.mrb[0].mxu0
        %v4243 = vadd.f32 %v4147, %v4242
        %v4244 = vpop.f32.mrb[0].mxu0
        %4245 = vmatprep.mubr.f32.mxu0 0.0
        %v4246 = vand.u32 %v3864, 4294901760
        %v4247 = vsub.f32 %v3864, %v4246
        %v4248 = vand.u32 %v4247, 4294901760
        %4249 = vmatmul.mubr.f32.gmra.mrb[0].mxu0 %v4248
        %v4250 = vpop.f32.mrb[0].mxu0
        %v4251 = vadd.f32 %v4154, %v4250
        %v4252 = vpop.f32.mrb[0].mxu0
        %4253 = vmatprep.mubr.f32.mxu0 0.0
        %v4254 = vand.u32 %v3867, 4294901760
        %v4255 = vsub.f32 %v3867, %v4254
        %v4256 = vand.u32 %v4255, 4294901760
        %4257 = vmatmul.mubr.f32.gmra.mrb[0].mxu0 %v4256
        %v4258 = vpop.f32.mrb[0].mxu0
        %v4259 = vadd.f32 %v4161, %v4258
        %v4260 = vpop.f32.mrb[0].mxu0
        %4261 = vdwg.mxu0
        %4262 = vmatprep.subr.mxu0 0.0
        %v4263 = vand.u32 %v3851, 4294901760
        %v4264 = vsub.f32 %v3851, %v4263
        %v4265 = vand.u32 %v4264, 4294901760
        %4266 = vmatpush1.msra.mxu0 %v4265
        %4267 = vmatprep.subr.mxu0 0.0
        %4268 = vmatpush1.msra.mxu0 0.0
        %4269 = vmatprep.subr.mxu0 0.0
        %4270 = vmatpush1.msra.mxu0 0.0
        %4271 = vmatprep.subr.mxu0 0.0
        %4272 = vmatpush1.msra.mxu0 0.0
        %4273 = vmatprep.subr.mxu0 0.0
        %4274 = vmatpush1.msra.mxu0 0.0
        %4275 = vmatprep.subr.mxu0 0.0
        %4276 = vmatpush1.msra.mxu0 0.0
        %4277 = vmatprep.subr.mxu0 0.0
        %4278 = vmatpush1.msra.mxu0 0.0
        %4279 = vmatprep.subr.mxu0 0.0
        %4280 = vmatpush1.msra.mxu0 0.0
        %4281 = vmatprep.subr.mxu0 0.0
        %4282 = vmatpush1.msra.mxu0 0.0
        %4283 = vmatprep.subr.mxu0 0.0
        %4284 = vmatpush1.msra.mxu0 0.0
        %4285 = vmatprep.subr.mxu0 0.0
        %4286 = vmatpush1.msra.mxu0 0.0
        %4287 = vmatprep.subr.mxu0 0.0
        %4288 = vmatpush1.msra.mxu0 0.0
        %4289 = vmatprep.subr.mxu0 0.0
        %4290 = vmatpush1.msra.mxu0 0.0
        %4291 = vmatprep.subr.mxu0 0.0
        %4292 = vmatpush1.msra.mxu0 0.0
        %4293 = vmatprep.subr.mxu0 0.0
        %4294 = vmatpush1.msra.mxu0 0.0
        %4295 = vmatprep.subr.mxu0 0.0
        %4296 = vmatpush1.msra.mxu0 0.0
        %4297 = vmatprep.subr.mxu0 0.0
        %4298 = vmatpush1.msra.mxu0 0.0
        %4299 = vmatprep.subr.mxu0 0.0
        %4300 = vmatpush1.msra.mxu0 0.0
        %4301 = vmatprep.subr.mxu0 0.0
        %4302 = vmatpush1.msra.mxu0 0.0
        %4303 = vmatprep.subr.mxu0 0.0
        %4304 = vmatpush1.msra.mxu0 0.0
        %4305 = vmatprep.subr.mxu0 0.0
        %4306 = vmatpush1.msra.mxu0 0.0
        %4307 = vmatprep.subr.mxu0 0.0
        %4308 = vmatpush1.msra.mxu0 0.0
        %4309 = vmatprep.subr.mxu0 0.0
        %4310 = vmatpush1.msra.mxu0 0.0
        %4311 = vmatprep.subr.mxu0 0.0
        %4312 = vmatpush1.msra.mxu0 0.0
        %4313 = vmatprep.subr.mxu0 0.0
        %4314 = vmatpush1.msra.mxu0 0.0
        %4315 = vmatprep.subr.mxu0 0.0
        %4316 = vmatpush1.msra.mxu0 0.0
        %4317 = vmatprep.subr.mxu0 0.0
        %4318 = vmatpush1.msra.mxu0 0.0
        %4319 = vmatprep.subr.mxu0 0.0
        %4320 = vmatpush1.msra.mxu0 0.0
        %4321 = vmatprep.subr.mxu0 0.0
        %4322 = vmatpush1.msra.mxu0 0.0
        %4323 = vmatprep.subr.mxu0 0.0
        %4324 = vmatpush1.msra.mxu0 0.0
        %4325 = vmatprep.subr.mxu0 0.0
        %4326 = vmatpush1.msra.mxu0 0.0
        %4327 = vmatprep.subr.mxu0 0.0
        %4328 = vmatpush1.msra.mxu0 0.0
        %4329 = vmatprep.mubr.f32.mxu0 0.0
        %v4330 = vand.u32 %v3858, 4294901760
        %4331 = vmatmul.mubr.f32.gmra.mrb[0].mxu0 %v4330
        %v4332 = vpop.f32.mrb[0].mxu0
        %v4333 = vadd.f32 %v4235, %v4332
        %v4334 = vpop.f32.mrb[0].mxu0
        %4335 = vmatprep.mubr.f32.mxu0 0.0
        %v4336 = vand.u32 %v3861, 4294901760
        %4337 = vmatmul.mubr.f32.gmra.mrb[0].mxu0 %v4336
        %v4338 = vpop.f32.mrb[0].mxu0
        %v4339 = vadd.f32 %v4243, %v4338
        %v4340 = vpop.f32.mrb[0].mxu0
        %4341 = vmatprep.mubr.f32.mxu0 0.0
        %v4342 = vand.u32 %v3864, 4294901760
        %4343 = vmatmul.mubr.f32.gmra.mrb[0].mxu0 %v4342
        %v4344 = vpop.f32.mrb[0].mxu0
        %v4345 = vadd.f32 %v4251, %v4344
        %v4346 = vpop.f32.mrb[0].mxu0
        %4347 = vmatprep.mubr.f32.mxu0 0.0
        %v4348 = vand.u32 %v3867, 4294901760
        %4349 = vmatmul.mubr.f32.gmra.mrb[0].mxu0 %v4348
        %v4350 = vpop.f32.mrb[0].mxu0
        %v4351 = vadd.f32 %v4259, %v4350
        %v4352 = vpop.f32.mrb[0].mxu0
        %4353 = vdwg.mxu0
        %4354 = vmatprep.subr.mxu0 0.0
        %v4355 = vand.u32 %v3851, 4294901760
        %4356 = vmatpush1.msra.mxu0 %v4355
        %4357 = vmatprep.subr.mxu0 0.0
        %4358 = vmatpush1.msra.mxu0 0.0
        %4359 = vmatprep.subr.mxu0 0.0
        %4360 = vmatpush1.msra.mxu0 0.0
        %4361 = vmatprep.subr.mxu0 0.0
        %4362 = vmatpush1.msra.mxu0 0.0
        %4363 = vmatprep.subr.mxu0 0.0
        %4364 = vmatpush1.msra.mxu0 0.0
        %4365 = vmatprep.subr.mxu0 0.0
        %4366 = vmatpush1.msra.mxu0 0.0
        %4367 = vmatprep.subr.mxu0 0.0
        %4368 = vmatpush1.msra.mxu0 0.0
        %4369 = vmatprep.subr.mxu0 0.0
        %4370 = vmatpush1.msra.mxu0 0.0
        %4371 = vmatprep.subr.mxu0 0.0
        %4372 = vmatpush1.msra.mxu0 0.0
        %4373 = vmatprep.subr.mxu0 0.0
        %4374 = vmatpush1.msra.mxu0 0.0
        %4375 = vmatprep.subr.mxu0 0.0
        %4376 = vmatpush1.msra.mxu0 0.0
        %4377 = vmatprep.subr.mxu0 0.0
        %4378 = vmatpush1.msra.mxu0 0.0
        %4379 = vmatprep.subr.mxu0 0.0
        %4380 = vmatpush1.msra.mxu0 0.0
        %4381 = vmatprep.subr.mxu0 0.0
        %4382 = vmatpush1.msra.mxu0 0.0
        %4383 = vmatprep.subr.mxu0 0.0
        %4384 = vmatpush1.msra.mxu0 0.0
        %4385 = vmatprep.subr.mxu0 0.0
        %4386 = vmatpush1.msra.mxu0 0.0
        %4387 = vmatprep.subr.mxu0 0.0
        %4388 = vmatpush1.msra.mxu0 0.0
        %4389 = vmatprep.subr.mxu0 0.0
        %4390 = vmatpush1.msra.mxu0 0.0
        %4391 = vmatprep.subr.mxu0 0.0
        %4392 = vmatpush1.msra.mxu0 0.0
        %4393 = vmatprep.subr.mxu0 0.0
        %4394 = vmatpush1.msra.mxu0 0.0
        %4395 = vmatprep.subr.mxu0 0.0
        %4396 = vmatpush1.msra.mxu0 0.0
        %4397 = vmatprep.subr.mxu0 0.0
        %4398 = vmatpush1.msra.mxu0 0.0
        %4399 = vmatprep.subr.mxu0 0.0
        %4400 = vmatpush1.msra.mxu0 0.0
        %4401 = vmatprep.subr.mxu0 0.0
        %4402 = vmatpush1.msra.mxu0 0.0
        %4403 = vmatprep.subr.mxu0 0.0
        %4404 = vmatpush1.msra.mxu0 0.0
        %4405 = vmatprep.subr.mxu0 0.0
        %4406 = vmatpush1.msra.mxu0 0.0
        %4407 = vmatprep.subr.mxu0 0.0
        %4408 = vmatpush1.msra.mxu0 0.0
        %4409 = vmatprep.subr.mxu0 0.0
        %4410 = vmatpush1.msra.mxu0 0.0
        %4411 = vmatprep.subr.mxu0 0.0
        %4412 = vmatpush1.msra.mxu0 0.0
        %4413 = vmatprep.subr.mxu0 0.0
        %4414 = vmatpush1.msra.mxu0 0.0
        %4415 = vmatprep.subr.mxu0 0.0
        %4416 = vmatpush1.msra.mxu0 0.0
        %4417 = vmatprep.subr.mxu0 0.0
        %4418 = vmatpush1.msra.mxu0 0.0
        %4419 = vmatprep.mubr.f32.mxu0 0.0
        %v4420 = vand.u32 %v3858, 4294901760
        %4421 = vmatmul.mubr.f32.gmra.mrb[0].mxu0 %v4420
        %v4422 = vpop.f32.mrb[0].mxu0
        %v4423 = vadd.f32 %v4333, %v4422
        %v4424 = vpop.f32.mrb[0].mxu0
        %4425 = vmatprep.mubr.f32.mxu0 0.0
        %v4426 = vand.u32 %v3861, 4294901760
        %4427 = vmatmul.mubr.f32.gmra.mrb[0].mxu0 %v4426
        %v4428 = vpop.f32.mrb[0].mxu0
        %v4429 = vadd.f32 %v4339, %v4428
        %v4430 = vpop.f32.mrb[0].mxu0
        %4431 = vmatprep.mubr.f32.mxu0 0.0
        %v4432 = vand.u32 %v3864, 4294901760
        %4433 = vmatmul.mubr.f32.gmra.mrb[0].mxu0 %v4432
        %v4434 = vpop.f32.mrb[0].mxu0
        %v4435 = vadd.f32 %v4345, %v4434
        %v4436 = vpop.f32.mrb[0].mxu0
        %4437 = vmatprep.mubr.f32.mxu0 0.0
        %v4438 = vand.u32 %v3867, 4294901760
        %4439 = vmatmul.mubr.f32.gmra.mrb[0].mxu0 %v4438
        %v4440 = vpop.f32.mrb[0].mxu0
        %v4441 = vadd.f32 %v4351, %v4440
        %v4442 = vpop.f32.mrb[0].mxu0
        %4443 = vdwg.mxu0
        %v4444 = vadd.f32 %v3843, %v4423
        %v4445 = vadd.f32 %v3844, %v4429
        %v4446 = vadd.f32 %v3845, %v4435
        %v4447 = vadd.f32 %v3846, %v4441
        %s4448 = scalar_lea.vmem %s2, 224
        %v4449 = vld [vmem:[%s4448] sm:$0xff]
        %v4450 = vld [vmem:[%s4448 + $0x8] sm:$0xff]
        %v4451 = vld [vmem:[%s4448 + $0x10] sm:$0xff]
        %v4452 = vld [vmem:[%s4448 + $0x18] sm:$0xff]
        %v4454 = vsel %vm274, %v4449, 0
        %v4457 = vsel %vm274, %v4450, 0
        %v4460 = vsel %vm274, %v4451, 0
        %v4463 = vsel %vm274, %v4452, 0
        %4465 = vmatprep.subr.mxu0 0.0
        %v4466 = vand.u32 %v241, 4294901760
        %4467 = vmatpush1.msra.mxu0 %v4466
        %4468 = vmatprep.subr.mxu0 0.0
        %4469 = vmatpush1.msra.mxu0 0.0
        %4470 = vmatprep.subr.mxu0 0.0
        %4471 = vmatpush1.msra.mxu0 0.0
        %4472 = vmatprep.subr.mxu0 0.0
        %4473 = vmatpush1.msra.mxu0 0.0
        %4474 = vmatprep.subr.mxu0 0.0
        %4475 = vmatpush1.msra.mxu0 0.0
        %4476 = vmatprep.subr.mxu0 0.0
        %4477 = vmatpush1.msra.mxu0 0.0
        %4478 = vmatprep.subr.mxu0 0.0
        %4479 = vmatpush1.msra.mxu0 0.0
        %4480 = vmatprep.subr.mxu0 0.0
        %4481 = vmatpush1.msra.mxu0 0.0
        %4482 = vmatprep.subr.mxu0 0.0
        %4483 = vmatpush1.msra.mxu0 0.0
        %4484 = vmatprep.subr.mxu0 0.0
        %4485 = vmatpush1.msra.mxu0 0.0
        %4486 = vmatprep.subr.mxu0 0.0
        %4487 = vmatpush1.msra.mxu0 0.0
        %4488 = vmatprep.subr.mxu0 0.0
        %4489 = vmatpush1.msra.mxu0 0.0
        %4490 = vmatprep.subr.mxu0 0.0
        %4491 = vmatpush1.msra.mxu0 0.0
        %4492 = vmatprep.subr.mxu0 0.0
        %4493 = vmatpush1.msra.mxu0 0.0
        %4494 = vmatprep.subr.mxu0 0.0
        %4495 = vmatpush1.msra.mxu0 0.0
        %4496 = vmatprep.subr.mxu0 0.0
        %4497 = vmatpush1.msra.mxu0 0.0
        %4498 = vmatprep.subr.mxu0 0.0
        %4499 = vmatpush1.msra.mxu0 0.0
        %4500 = vmatprep.subr.mxu0 0.0
        %4501 = vmatpush1.msra.mxu0 0.0
        %4502 = vmatprep.subr.mxu0 0.0
        %4503 = vmatpush1.msra.mxu0 0.0
        %4504 = vmatprep.subr.mxu0 0.0
        %4505 = vmatpush1.msra.mxu0 0.0
        %4506 = vmatprep.subr.mxu0 0.0
        %4507 = vmatpush1.msra.mxu0 0.0
        %4508 = vmatprep.subr.mxu0 0.0
        %4509 = vmatpush1.msra.mxu0 0.0
        %4510 = vmatprep.subr.mxu0 0.0
        %4511 = vmatpush1.msra.mxu0 0.0
        %4512 = vmatprep.subr.mxu0 0.0
        %4513 = vmatpush1.msra.mxu0 0.0
        %4514 = vmatprep.subr.mxu0 0.0
        %4515 = vmatpush1.msra.mxu0 0.0
        %4516 = vmatprep.subr.mxu0 0.0
        %4517 = vmatpush1.msra.mxu0 0.0
        %4518 = vmatprep.subr.mxu0 0.0
        %4519 = vmatpush1.msra.mxu0 0.0
        %4520 = vmatprep.subr.mxu0 0.0
        %4521 = vmatpush1.msra.mxu0 0.0
        %4522 = vmatprep.subr.mxu0 0.0
        %4523 = vmatpush1.msra.mxu0 0.0
        %4524 = vmatprep.subr.mxu0 0.0
        %4525 = vmatpush1.msra.mxu0 0.0
        %4526 = vmatprep.subr.mxu0 0.0
        %4527 = vmatpush1.msra.mxu0 0.0
        %4528 = vmatprep.subr.mxu0 0.0
        %4529 = vmatpush1.msra.mxu0 0.0
        %4530 = vmatprep.mubr.f32.mxu0 0.0
        %v4531 = vand.u32 %v4454, 4294901760
        %v4532 = vsub.f32 %v4454, %v4531
        %v4533 = vand.u32 %v4532, 4294901760
        %v4534 = vsub.f32 %v4532, %v4533
        %v4535 = vand.u32 %v4534, 4294901760
        %4536 = vmatmul.mubr.f32.gmra.mrb[0].mxu0 %v4535
        %v4537 = vpop.f32.mrb[0].mxu0
        %v4538 = vadd.f32 0.0, %v4537
        %v4539 = vpop.f32.mrb[0].mxu0
        %4540 = vmatprep.mubr.f32.mxu0 0.0
        %v4541 = vand.u32 %v4457, 4294901760
        %v4542 = vsub.f32 %v4457, %v4541
        %v4543 = vand.u32 %v4542, 4294901760
        %v4544 = vsub.f32 %v4542, %v4543
        %v4545 = vand.u32 %v4544, 4294901760
        %4546 = vmatmul.mubr.f32.gmra.mrb[0].mxu0 %v4545
        %v4547 = vpop.f32.mrb[0].mxu0
        %v4548 = vadd.f32 0.0, %v4547
        %v4549 = vpop.f32.mrb[0].mxu0
        %4550 = vmatprep.mubr.f32.mxu0 0.0
        %v4551 = vand.u32 %v4460, 4294901760
        %v4552 = vsub.f32 %v4460, %v4551
        %v4553 = vand.u32 %v4552, 4294901760
        %v4554 = vsub.f32 %v4552, %v4553
        %v4555 = vand.u32 %v4554, 4294901760
        %4556 = vmatmul.mubr.f32.gmra.mrb[0].mxu0 %v4555
        %v4557 = vpop.f32.mrb[0].mxu0
        %v4558 = vadd.f32 0.0, %v4557
        %v4559 = vpop.f32.mrb[0].mxu0
        %4560 = vmatprep.mubr.f32.mxu0 0.0
        %v4561 = vand.u32 %v4463, 4294901760
        %v4562 = vsub.f32 %v4463, %v4561
        %v4563 = vand.u32 %v4562, 4294901760
        %v4564 = vsub.f32 %v4562, %v4563
        %v4565 = vand.u32 %v4564, 4294901760
        %4566 = vmatmul.mubr.f32.gmra.mrb[0].mxu0 %v4565
        %v4567 = vpop.f32.mrb[0].mxu0
        %v4568 = vadd.f32 0.0, %v4567
        %v4569 = vpop.f32.mrb[0].mxu0
        %4570 = vdwg.mxu0
        %4571 = vmatprep.subr.mxu0 0.0
        %v4572 = vand.u32 %v241, 4294901760
        %v4573 = vsub.f32 %v241, %v4572
        %v4574 = vand.u32 %v4573, 4294901760
        %v4575 = vsub.f32 %v4573, %v4574
        %v4576 = vand.u32 %v4575, 4294901760
        %4577 = vmatpush1.msra.mxu0 %v4576
        %4578 = vmatprep.subr.mxu0 0.0
        %4579 = vmatpush1.msra.mxu0 0.0
        %4580 = vmatprep.subr.mxu0 0.0
        %4581 = vmatpush1.msra.mxu0 0.0
        %4582 = vmatprep.subr.mxu0 0.0
        %4583 = vmatpush1.msra.mxu0 0.0
        %4584 = vmatprep.subr.mxu0 0.0
        %4585 = vmatpush1.msra.mxu0 0.0
        %4586 = vmatprep.subr.mxu0 0.0
        %4587 = vmatpush1.msra.mxu0 0.0
        %4588 = vmatprep.subr.mxu0 0.0
        %4589 = vmatpush1.msra.mxu0 0.0
        %4590 = vmatprep.subr.mxu0 0.0
        %4591 = vmatpush1.msra.mxu0 0.0
        %4592 = vmatprep.subr.mxu0 0.0
        %4593 = vmatpush1.msra.mxu0 0.0
        %4594 = vmatprep.subr.mxu0 0.0
        %4595 = vmatpush1.msra.mxu0 0.0
        %4596 = vmatprep.subr.mxu0 0.0
        %4597 = vmatpush1.msra.mxu0 0.0
        %4598 = vmatprep.subr.mxu0 0.0
        %4599 = vmatpush1.msra.mxu0 0.0
        %4600 = vmatprep.subr.mxu0 0.0
        %4601 = vmatpush1.msra.mxu0 0.0
        %4602 = vmatprep.subr.mxu0 0.0
        %4603 = vmatpush1.msra.mxu0 0.0
        %4604 = vmatprep.subr.mxu0 0.0
        %4605 = vmatpush1.msra.mxu0 0.0
        %4606 = vmatprep.subr.mxu0 0.0
        %4607 = vmatpush1.msra.mxu0 0.0
        %4608 = vmatprep.subr.mxu0 0.0
        %4609 = vmatpush1.msra.mxu0 0.0
        %4610 = vmatprep.subr.mxu0 0.0
        %4611 = vmatpush1.msra.mxu0 0.0
        %4612 = vmatprep.subr.mxu0 0.0
        %4613 = vmatpush1.msra.mxu0 0.0
        %4614 = vmatprep.subr.mxu0 0.0
        %4615 = vmatpush1.msra.mxu0 0.0
        %4616 = vmatprep.subr.mxu0 0.0
        %4617 = vmatpush1.msra.mxu0 0.0
        %4618 = vmatprep.subr.mxu0 0.0
        %4619 = vmatpush1.msra.mxu0 0.0
        %4620 = vmatprep.subr.mxu0 0.0
        %4621 = vmatpush1.msra.mxu0 0.0
        %4622 = vmatprep.subr.mxu0 0.0
        %4623 = vmatpush1.msra.mxu0 0.0
        %4624 = vmatprep.subr.mxu0 0.0
        %4625 = vmatpush1.msra.mxu0 0.0
        %4626 = vmatprep.subr.mxu0 0.0
        %4627 = vmatpush1.msra.mxu0 0.0
        %4628 = vmatprep.subr.mxu0 0.0
        %4629 = vmatpush1.msra.mxu0 0.0
        %4630 = vmatprep.subr.mxu0 0.0
        %4631 = vmatpush1.msra.mxu0 0.0
        %4632 = vmatprep.subr.mxu0 0.0
        %4633 = vmatpush1.msra.mxu0 0.0
        %4634 = vmatprep.subr.mxu0 0.0
        %4635 = vmatpush1.msra.mxu0 0.0
        %4636 = vmatprep.subr.mxu0 0.0
        %4637 = vmatpush1.msra.mxu0 0.0
        %4638 = vmatprep.subr.mxu0 0.0
        %4639 = vmatpush1.msra.mxu0 0.0
        %4640 = vmatprep.mubr.f32.mxu0 0.0
        %v4641 = vand.u32 %v4454, 4294901760
        %4642 = vmatmul.mubr.f32.gmra.mrb[0].mxu0 %v4641
        %v4643 = vpop.f32.mrb[0].mxu0
        %v4644 = vadd.f32 %v4538, %v4643
        %v4645 = vpop.f32.mrb[0].mxu0
        %4646 = vmatprep.mubr.f32.mxu0 0.0
        %v4647 = vand.u32 %v4457, 4294901760
        %4648 = vmatmul.mubr.f32.gmra.mrb[0].mxu0 %v4647
        %v4649 = vpop.f32.mrb[0].mxu0
        %v4650 = vadd.f32 %v4548, %v4649
        %v4651 = vpop.f32.mrb[0].mxu0
        %4652 = vmatprep.mubr.f32.mxu0 0.0
        %v4653 = vand.u32 %v4460, 4294901760
        %4654 = vmatmul.mubr.f32.gmra.mrb[0].mxu0 %v4653
        %v4655 = vpop.f32.mrb[0].mxu0
        %v4656 = vadd.f32 %v4558, %v4655
        %v4657 = vpop.f32.mrb[0].mxu0
        %4658 = vmatprep.mubr.f32.mxu0 0.0
        %v4659 = vand.u32 %v4463, 4294901760
        %4660 = vmatmul.mubr.f32.gmra.mrb[0].mxu0 %v4659
        %v4661 = vpop.f32.mrb[0].mxu0
        %v4662 = vadd.f32 %v4568, %v4661
        %v4663 = vpop.f32.mrb[0].mxu0
        %4664 = vdwg.mxu0
        %4665 = vmatprep.subr.mxu0 0.0
        %v4666 = vand.u32 %v241, 4294901760
        %v4667 = vsub.f32 %v241, %v4666
        %4668 = vmatpush1.msra.mxu0 %v4667
        %4669 = vmatprep.subr.mxu0 0.0
        %4670 = vmatpush1.msra.mxu0 0.0
        %4671 = vmatprep.subr.mxu0 0.0
        %4672 = vmatpush1.msra.mxu0 0.0
        %4673 = vmatprep.subr.mxu0 0.0
        %4674 = vmatpush1.msra.mxu0 0.0
        %4675 = vmatprep.subr.mxu0 0.0
        %4676 = vmatpush1.msra.mxu0 0.0
        %4677 = vmatprep.subr.mxu0 0.0
        %4678 = vmatpush1.msra.mxu0 0.0
        %4679 = vmatprep.subr.mxu0 0.0
        %4680 = vmatpush1.msra.mxu0 0.0
        %4681 = vmatprep.subr.mxu0 0.0
        %4682 = vmatpush1.msra.mxu0 0.0
        %4683 = vmatprep.subr.mxu0 0.0
        %4684 = vmatpush1.msra.mxu0 0.0
        %4685 = vmatprep.subr.mxu0 0.0
        %4686 = vmatpush1.msra.mxu0 0.0
        %4687 = vmatprep.subr.mxu0 0.0
        %4688 = vmatpush1.msra.mxu0 0.0
        %4689 = vmatprep.subr.mxu0 0.0
        %4690 = vmatpush1.msra.mxu0 0.0
        %4691 = vmatprep.subr.mxu0 0.0
        %4692 = vmatpush1.msra.mxu0 0.0
        %4693 = vmatprep.subr.mxu0 0.0
        %4694 = vmatpush1.msra.mxu0 0.0
        %4695 = vmatprep.subr.mxu0 0.0
        %4696 = vmatpush1.msra.mxu0 0.0
        %4697 = vmatprep.subr.mxu0 0.0
        %4698 = vmatpush1.msra.mxu0 0.0
        %4699 = vmatprep.subr.mxu0 0.0
        %4700 = vmatpush1.msra.mxu0 0.0
        %4701 = vmatprep.subr.mxu0 0.0
        %4702 = vmatpush1.msra.mxu0 0.0
        %4703 = vmatprep.subr.mxu0 0.0
        %4704 = vmatpush1.msra.mxu0 0.0
        %4705 = vmatprep.subr.mxu0 0.0
        %4706 = vmatpush1.msra.mxu0 0.0
        %4707 = vmatprep.subr.mxu0 0.0
        %4708 = vmatpush1.msra.mxu0 0.0
        %4709 = vmatprep.subr.mxu0 0.0
        %4710 = vmatpush1.msra.mxu0 0.0
        %4711 = vmatprep.subr.mxu0 0.0
        %4712 = vmatpush1.msra.mxu0 0.0
        %4713 = vmatprep.subr.mxu0 0.0
        %4714 = vmatpush1.msra.mxu0 0.0
        %4715 = vmatprep.subr.mxu0 0.0
        %4716 = vmatpush1.msra.mxu0 0.0
        %4717 = vmatprep.subr.mxu0 0.0
        %4718 = vmatpush1.msra.mxu0 0.0
        %4719 = vmatprep.subr.mxu0 0.0
        %4720 = vmatpush1.msra.mxu0 0.0
        %4721 = vmatprep.subr.mxu0 0.0
        %4722 = vmatpush1.msra.mxu0 0.0
        %4723 = vmatprep.subr.mxu0 0.0
        %4724 = vmatpush1.msra.mxu0 0.0
        %4725 = vmatprep.subr.mxu0 0.0
        %4726 = vmatpush1.msra.mxu0 0.0
        %4727 = vmatprep.subr.mxu0 0.0
        %4728 = vmatpush1.msra.mxu0 0.0
        %4729 = vmatprep.subr.mxu0 0.0
        %4730 = vmatpush1.msra.mxu0 0.0
        %4731 = vmatprep.mubr.f32.mxu0 0.0
        %v4732 = vand.u32 %v4454, 4294901760
        %v4733 = vsub.f32 %v4454, %v4732
        %4734 = vmatmul.mubr.f32.gmra.mrb[0].mxu0 %v4733
        %v4735 = vpop.f32.mrb[0].mxu0
        %v4736 = vadd.f32 %v4644, %v4735
        %v4737 = vpop.f32.mrb[0].mxu0
        %4738 = vmatprep.mubr.f32.mxu0 0.0
        %v4739 = vand.u32 %v4457, 4294901760
        %v4740 = vsub.f32 %v4457, %v4739
        %4741 = vmatmul.mubr.f32.gmra.mrb[0].mxu0 %v4740
        %v4742 = vpop.f32.mrb[0].mxu0
        %v4743 = vadd.f32 %v4650, %v4742
        %v4744 = vpop.f32.mrb[0].mxu0
        %4745 = vmatprep.mubr.f32.mxu0 0.0
        %v4746 = vand.u32 %v4460, 4294901760
        %v4747 = vsub.f32 %v4460, %v4746
        %4748 = vmatmul.mubr.f32.gmra.mrb[0].mxu0 %v4747
        %v4749 = vpop.f32.mrb[0].mxu0
        %v4750 = vadd.f32 %v4656, %v4749
        %v4751 = vpop.f32.mrb[0].mxu0
        %4752 = vmatprep.mubr.f32.mxu0 0.0
        %v4753 = vand.u32 %v4463, 4294901760
        %v4754 = vsub.f32 %v4463, %v4753
        %4755 = vmatmul.mubr.f32.gmra.mrb[0].mxu0 %v4754
        %v4756 = vpop.f32.mrb[0].mxu0
        %v4757 = vadd.f32 %v4662, %v4756
        %v4758 = vpop.f32.mrb[0].mxu0
        %4759 = vdwg.mxu0
        %4760 = vmatprep.subr.mxu0 0.0
        %v4761 = vand.u32 %v241, 4294901760
        %4762 = vmatpush1.msra.mxu0 %v4761
        %4763 = vmatprep.subr.mxu0 0.0
        %4764 = vmatpush1.msra.mxu0 0.0
        %4765 = vmatprep.subr.mxu0 0.0
        %4766 = vmatpush1.msra.mxu0 0.0
        %4767 = vmatprep.subr.mxu0 0.0
        %4768 = vmatpush1.msra.mxu0 0.0
        %4769 = vmatprep.subr.mxu0 0.0
        %4770 = vmatpush1.msra.mxu0 0.0
        %4771 = vmatprep.subr.mxu0 0.0
        %4772 = vmatpush1.msra.mxu0 0.0
        %4773 = vmatprep.subr.mxu0 0.0
        %4774 = vmatpush1.msra.mxu0 0.0
        %4775 = vmatprep.subr.mxu0 0.0
        %4776 = vmatpush1.msra.mxu0 0.0
        %4777 = vmatprep.subr.mxu0 0.0
        %4778 = vmatpush1.msra.mxu0 0.0
        %4779 = vmatprep.subr.mxu0 0.0
        %4780 = vmatpush1.msra.mxu0 0.0
        %4781 = vmatprep.subr.mxu0 0.0
        %4782 = vmatpush1.msra.mxu0 0.0
        %4783 = vmatprep.subr.mxu0 0.0
        %4784 = vmatpush1.msra.mxu0 0.0
        %4785 = vmatprep.subr.mxu0 0.0
        %4786 = vmatpush1.msra.mxu0 0.0
        %4787 = vmatprep.subr.mxu0 0.0
        %4788 = vmatpush1.msra.mxu0 0.0
        %4789 = vmatprep.subr.mxu0 0.0
        %4790 = vmatpush1.msra.mxu0 0.0
        %4791 = vmatprep.subr.mxu0 0.0
        %4792 = vmatpush1.msra.mxu0 0.0
        %4793 = vmatprep.subr.mxu0 0.0
        %4794 = vmatpush1.msra.mxu0 0.0
        %4795 = vmatprep.subr.mxu0 0.0
        %4796 = vmatpush1.msra.mxu0 0.0
        %4797 = vmatprep.subr.mxu0 0.0
        %4798 = vmatpush1.msra.mxu0 0.0
        %4799 = vmatprep.subr.mxu0 0.0
        %4800 = vmatpush1.msra.mxu0 0.0
        %4801 = vmatprep.subr.mxu0 0.0
        %4802 = vmatpush1.msra.mxu0 0.0
        %4803 = vmatprep.subr.mxu0 0.0
        %4804 = vmatpush1.msra.mxu0 0.0
        %4805 = vmatprep.subr.mxu0 0.0
        %4806 = vmatpush1.msra.mxu0 0.0
        %4807 = vmatprep.subr.mxu0 0.0
        %4808 = vmatpush1.msra.mxu0 0.0
        %4809 = vmatprep.subr.mxu0 0.0
        %4810 = vmatpush1.msra.mxu0 0.0
        %4811 = vmatprep.subr.mxu0 0.0
        %4812 = vmatpush1.msra.mxu0 0.0
        %4813 = vmatprep.subr.mxu0 0.0
        %4814 = vmatpush1.msra.mxu0 0.0
        %4815 = vmatprep.subr.mxu0 0.0
        %4816 = vmatpush1.msra.mxu0 0.0
        %4817 = vmatprep.subr.mxu0 0.0
        %4818 = vmatpush1.msra.mxu0 0.0
        %4819 = vmatprep.subr.mxu0 0.0
        %4820 = vmatpush1.msra.mxu0 0.0
        %4821 = vmatprep.subr.mxu0 0.0
        %4822 = vmatpush1.msra.mxu0 0.0
        %4823 = vmatprep.subr.mxu0 0.0
        %4824 = vmatpush1.msra.mxu0 0.0
        %4825 = vmatprep.mubr.f32.mxu0 0.0
        %v4826 = vand.u32 %v4454, 4294901760
        %v4827 = vsub.f32 %v4454, %v4826
        %v4828 = vand.u32 %v4827, 4294901760
        %4829 = vmatmul.mubr.f32.gmra.mrb[0].mxu0 %v4828
        %v4830 = vpop.f32.mrb[0].mxu0
        %v4831 = vadd.f32 %v4736, %v4830
        %v4832 = vpop.f32.mrb[0].mxu0
        %4833 = vmatprep.mubr.f32.mxu0 0.0
        %v4834 = vand.u32 %v4457, 4294901760
        %v4835 = vsub.f32 %v4457, %v4834
        %v4836 = vand.u32 %v4835, 4294901760
        %4837 = vmatmul.mubr.f32.gmra.mrb[0].mxu0 %v4836
        %v4838 = vpop.f32.mrb[0].mxu0
        %v4839 = vadd.f32 %v4743, %v4838
        %v4840 = vpop.f32.mrb[0].mxu0
        %4841 = vmatprep.mubr.f32.mxu0 0.0
        %v4842 = vand.u32 %v4460, 4294901760
        %v4843 = vsub.f32 %v4460, %v4842
        %v4844 = vand.u32 %v4843, 4294901760
        %4845 = vmatmul.mubr.f32.gmra.mrb[0].mxu0 %v4844
        %v4846 = vpop.f32.mrb[0].mxu0
        %v4847 = vadd.f32 %v4750, %v4846
        %v4848 = vpop.f32.mrb[0].mxu0
        %4849 = vmatprep.mubr.f32.mxu0 0.0
        %v4850 = vand.u32 %v4463, 4294901760
        %v4851 = vsub.f32 %v4463, %v4850
        %v4852 = vand.u32 %v4851, 4294901760
        %4853 = vmatmul.mubr.f32.gmra.mrb[0].mxu0 %v4852
        %v4854 = vpop.f32.mrb[0].mxu0
        %v4855 = vadd.f32 %v4757, %v4854
        %v4856 = vpop.f32.mrb[0].mxu0
        %4857 = vdwg.mxu0
        %4858 = vmatprep.subr.mxu0 0.0
        %v4859 = vand.u32 %v241, 4294901760
        %v4860 = vsub.f32 %v241, %v4859
        %v4861 = vand.u32 %v4860, 4294901760
        %4862 = vmatpush1.msra.mxu0 %v4861
        %4863 = vmatprep.subr.mxu0 0.0
        %4864 = vmatpush1.msra.mxu0 0.0
        %4865 = vmatprep.subr.mxu0 0.0
        %4866 = vmatpush1.msra.mxu0 0.0
        %4867 = vmatprep.subr.mxu0 0.0
        %4868 = vmatpush1.msra.mxu0 0.0
        %4869 = vmatprep.subr.mxu0 0.0
        %4870 = vmatpush1.msra.mxu0 0.0
        %4871 = vmatprep.subr.mxu0 0.0
        %4872 = vmatpush1.msra.mxu0 0.0
        %4873 = vmatprep.subr.mxu0 0.0
        %4874 = vmatpush1.msra.mxu0 0.0
        %4875 = vmatprep.subr.mxu0 0.0
        %4876 = vmatpush1.msra.mxu0 0.0
        %4877 = vmatprep.subr.mxu0 0.0
        %4878 = vmatpush1.msra.mxu0 0.0
        %4879 = vmatprep.subr.mxu0 0.0
        %4880 = vmatpush1.msra.mxu0 0.0
        %4881 = vmatprep.subr.mxu0 0.0
        %4882 = vmatpush1.msra.mxu0 0.0
        %4883 = vmatprep.subr.mxu0 0.0
        %4884 = vmatpush1.msra.mxu0 0.0
        %4885 = vmatprep.subr.mxu0 0.0
        %4886 = vmatpush1.msra.mxu0 0.0
        %4887 = vmatprep.subr.mxu0 0.0
        %4888 = vmatpush1.msra.mxu0 0.0
        %4889 = vmatprep.subr.mxu0 0.0
        %4890 = vmatpush1.msra.mxu0 0.0
        %4891 = vmatprep.subr.mxu0 0.0
        %4892 = vmatpush1.msra.mxu0 0.0
        %4893 = vmatprep.subr.mxu0 0.0
        %4894 = vmatpush1.msra.mxu0 0.0
        %4895 = vmatprep.subr.mxu0 0.0
        %4896 = vmatpush1.msra.mxu0 0.0
        %4897 = vmatprep.subr.mxu0 0.0
        %4898 = vmatpush1.msra.mxu0 0.0
        %4899 = vmatprep.subr.mxu0 0.0
        %4900 = vmatpush1.msra.mxu0 0.0
        %4901 = vmatprep.subr.mxu0 0.0
        %4902 = vmatpush1.msra.mxu0 0.0
        %4903 = vmatprep.subr.mxu0 0.0
        %4904 = vmatpush1.msra.mxu0 0.0
        %4905 = vmatprep.subr.mxu0 0.0
        %4906 = vmatpush1.msra.mxu0 0.0
        %4907 = vmatprep.subr.mxu0 0.0
        %4908 = vmatpush1.msra.mxu0 0.0
        %4909 = vmatprep.subr.mxu0 0.0
        %4910 = vmatpush1.msra.mxu0 0.0
        %4911 = vmatprep.subr.mxu0 0.0
        %4912 = vmatpush1.msra.mxu0 0.0
        %4913 = vmatprep.subr.mxu0 0.0
        %4914 = vmatpush1.msra.mxu0 0.0
        %4915 = vmatprep.subr.mxu0 0.0
        %4916 = vmatpush1.msra.mxu0 0.0
        %4917 = vmatprep.subr.mxu0 0.0
        %4918 = vmatpush1.msra.mxu0 0.0
        %4919 = vmatprep.subr.mxu0 0.0
        %4920 = vmatpush1.msra.mxu0 0.0
        %4921 = vmatprep.subr.mxu0 0.0
        %4922 = vmatpush1.msra.mxu0 0.0
        %4923 = vmatprep.subr.mxu0 0.0
        %4924 = vmatpush1.msra.mxu0 0.0
        %4925 = vmatprep.mubr.f32.mxu0 0.0
        %v4926 = vand.u32 %v4454, 4294901760
        %4927 = vmatmul.mubr.f32.gmra.mrb[0].mxu0 %v4926
        %v4928 = vpop.f32.mrb[0].mxu0
        %v4929 = vadd.f32 %v4831, %v4928
        %v4930 = vpop.f32.mrb[0].mxu0
        %4931 = vmatprep.mubr.f32.mxu0 0.0
        %v4932 = vand.u32 %v4457, 4294901760
        %4933 = vmatmul.mubr.f32.gmra.mrb[0].mxu0 %v4932
        %v4934 = vpop.f32.mrb[0].mxu0
        %v4935 = vadd.f32 %v4839, %v4934
        %v4936 = vpop.f32.mrb[0].mxu0
        %4937 = vmatprep.mubr.f32.mxu0 0.0
        %v4938 = vand.u32 %v4460, 4294901760
        %4939 = vmatmul.mubr.f32.gmra.mrb[0].mxu0 %v4938
        %v4940 = vpop.f32.mrb[0].mxu0
        %v4941 = vadd.f32 %v4847, %v4940
        %v4942 = vpop.f32.mrb[0].mxu0
        %4943 = vmatprep.mubr.f32.mxu0 0.0
        %v4944 = vand.u32 %v4463, 4294901760
        %4945 = vmatmul.mubr.f32.gmra.mrb[0].mxu0 %v4944
        %v4946 = vpop.f32.mrb[0].mxu0
        %v4947 = vadd.f32 %v4855, %v4946
        %v4948 = vpop.f32.mrb[0].mxu0
        %4949 = vdwg.mxu0
        %4950 = vmatprep.subr.mxu0 0.0
        %v4951 = vand.u32 %v241, 4294901760
        %4952 = vmatpush1.msra.mxu0 %v4951
        %4953 = vmatprep.subr.mxu0 0.0
        %4954 = vmatpush1.msra.mxu0 0.0
        %4955 = vmatprep.subr.mxu0 0.0
        %4956 = vmatpush1.msra.mxu0 0.0
        %4957 = vmatprep.subr.mxu0 0.0
        %4958 = vmatpush1.msra.mxu0 0.0
        %4959 = vmatprep.subr.mxu0 0.0
        %4960 = vmatpush1.msra.mxu0 0.0
        %4961 = vmatprep.subr.mxu0 0.0
        %4962 = vmatpush1.msra.mxu0 0.0
        %4963 = vmatprep.subr.mxu0 0.0
        %4964 = vmatpush1.msra.mxu0 0.0
        %4965 = vmatprep.subr.mxu0 0.0
        %4966 = vmatpush1.msra.mxu0 0.0
        %4967 = vmatprep.subr.mxu0 0.0
        %4968 = vmatpush1.msra.mxu0 0.0
        %4969 = vmatprep.subr.mxu0 0.0
        %4970 = vmatpush1.msra.mxu0 0.0
        %4971 = vmatprep.subr.mxu0 0.0
        %4972 = vmatpush1.msra.mxu0 0.0
        %4973 = vmatprep.subr.mxu0 0.0
        %4974 = vmatpush1.msra.mxu0 0.0
        %4975 = vmatprep.subr.mxu0 0.0
        %4976 = vmatpush1.msra.mxu0 0.0
        %4977 = vmatprep.subr.mxu0 0.0
        %4978 = vmatpush1.msra.mxu0 0.0
        %4979 = vmatprep.subr.mxu0 0.0
        %4980 = vmatpush1.msra.mxu0 0.0
        %4981 = vmatprep.subr.mxu0 0.0
        %4982 = vmatpush1.msra.mxu0 0.0
        %4983 = vmatprep.subr.mxu0 0.0
        %4984 = vmatpush1.msra.mxu0 0.0
        %4985 = vmatprep.subr.mxu0 0.0
        %4986 = vmatpush1.msra.mxu0 0.0
        %4987 = vmatprep.subr.mxu0 0.0
        %4988 = vmatpush1.msra.mxu0 0.0
        %4989 = vmatprep.subr.mxu0 0.0
        %4990 = vmatpush1.msra.mxu0 0.0
        %4991 = vmatprep.subr.mxu0 0.0
        %4992 = vmatpush1.msra.mxu0 0.0
        %4993 = vmatprep.subr.mxu0 0.0
        %4994 = vmatpush1.msra.mxu0 0.0
        %4995 = vmatprep.subr.mxu0 0.0
        %4996 = vmatpush1.msra.mxu0 0.0
        %4997 = vmatprep.subr.mxu0 0.0
        %4998 = vmatpush1.msra.mxu0 0.0
        %4999 = vmatprep.subr.mxu0 0.0
        %5000 = vmatpush1.msra.mxu0 0.0
        %5001 = vmatprep.subr.mxu0 0.0
        %5002 = vmatpush1.msra.mxu0 0.0
        %5003 = vmatprep.subr.mxu0 0.0
        %5004 = vmatpush1.msra.mxu0 0.0
        %5005 = vmatprep.subr.mxu0 0.0
        %5006 = vmatpush1.msra.mxu0 0.0
        %5007 = vmatprep.subr.mxu0 0.0
        %5008 = vmatpush1.msra.mxu0 0.0
        %5009 = vmatprep.subr.mxu0 0.0
        %5010 = vmatpush1.msra.mxu0 0.0
        %5011 = vmatprep.subr.mxu0 0.0
        %5012 = vmatpush1.msra.mxu0 0.0
        %5013 = vmatprep.subr.mxu0 0.0
        %5014 = vmatpush1.msra.mxu0 0.0
        %5015 = vmatprep.mubr.f32.mxu0 0.0
        %v5016 = vand.u32 %v4454, 4294901760
        %5017 = vmatmul.mubr.f32.gmra.mrb[0].mxu0 %v5016
        %v5018 = vpop.f32.mrb[0].mxu0
        %v5019 = vadd.f32 %v4929, %v5018
        %v5020 = vpop.f32.mrb[0].mxu0
        %5021 = vmatprep.mubr.f32.mxu0 0.0
        %v5022 = vand.u32 %v4457, 4294901760
        %5023 = vmatmul.mubr.f32.gmra.mrb[0].mxu0 %v5022
        %v5024 = vpop.f32.mrb[0].mxu0
        %v5025 = vadd.f32 %v4935, %v5024
        %v5026 = vpop.f32.mrb[0].mxu0
        %5027 = vmatprep.mubr.f32.mxu0 0.0
        %v5028 = vand.u32 %v4460, 4294901760
        %5029 = vmatmul.mubr.f32.gmra.mrb[0].mxu0 %v5028
        %v5030 = vpop.f32.mrb[0].mxu0
        %v5031 = vadd.f32 %v4941, %v5030
        %v5032 = vpop.f32.mrb[0].mxu0
        %5033 = vmatprep.mubr.f32.mxu0 0.0
        %v5034 = vand.u32 %v4463, 4294901760
        %5035 = vmatmul.mubr.f32.gmra.mrb[0].mxu0 %v5034
        %v5036 = vpop.f32.mrb[0].mxu0
        %v5037 = vadd.f32 %v4947, %v5036
        %v5038 = vpop.f32.mrb[0].mxu0
        %5039 = vdwg.mxu0
        %v5040 = vadd.f32 %v4444, %v5019
        %v5041 = vadd.f32 %v4445, %v5025
        %v5042 = vadd.f32 %v4446, %v5031
        %v5043 = vadd.f32 %v4447, %v5037
        %5044 = vrot.lane.b32.xlu0 %v241, 127
        %v5045 = vpop.permute.xlu0 %5044
        %v5047 = vsel %vm1453, %v5045, 0.0
        %s5048 = scalar_lea.vmem %s2, 256
        %v5049 = vld [vmem:[%s5048] sm:$0xff]
        %v5050 = vld [vmem:[%s5048 + $0x8] sm:$0xff]
        %v5051 = vld [vmem:[%s5048 + $0x10] sm:$0xff]
        %v5052 = vld [vmem:[%s5048 + $0x18] sm:$0xff]
        %v5054 = vsel %vm274, %v5049, 0
        %v5057 = vsel %vm274, %v5050, 0
        %v5060 = vsel %vm274, %v5051, 0
        %v5063 = vsel %vm274, %v5052, 0
        %5065 = vmatprep.subr.mxu0 0.0
        %v5066 = vand.u32 %v5047, 4294901760
        %5067 = vmatpush1.msra.mxu0 %v5066
        %5068 = vmatprep.subr.mxu0 0.0
        %5069 = vmatpush1.msra.mxu0 0.0
        %5070 = vmatprep.subr.mxu0 0.0
        %5071 = vmatpush1.msra.mxu0 0.0
        %5072 = vmatprep.subr.mxu0 0.0
        %5073 = vmatpush1.msra.mxu0 0.0
        %5074 = vmatprep.subr.mxu0 0.0
        %5075 = vmatpush1.msra.mxu0 0.0
        %5076 = vmatprep.subr.mxu0 0.0
        %5077 = vmatpush1.msra.mxu0 0.0
        %5078 = vmatprep.subr.mxu0 0.0
        %5079 = vmatpush1.msra.mxu0 0.0
        %5080 = vmatprep.subr.mxu0 0.0
        %5081 = vmatpush1.msra.mxu0 0.0
        %5082 = vmatprep.subr.mxu0 0.0
        %5083 = vmatpush1.msra.mxu0 0.0
        %5084 = vmatprep.subr.mxu0 0.0
        %5085 = vmatpush1.msra.mxu0 0.0
        %5086 = vmatprep.subr.mxu0 0.0
        %5087 = vmatpush1.msra.mxu0 0.0
        %5088 = vmatprep.subr.mxu0 0.0
        %5089 = vmatpush1.msra.mxu0 0.0
        %5090 = vmatprep.subr.mxu0 0.0
        %5091 = vmatpush1.msra.mxu0 0.0
        %5092 = vmatprep.subr.mxu0 0.0
        %5093 = vmatpush1.msra.mxu0 0.0
        %5094 = vmatprep.subr.mxu0 0.0
        %5095 = vmatpush1.msra.mxu0 0.0
        %5096 = vmatprep.subr.mxu0 0.0
        %5097 = vmatpush1.msra.mxu0 0.0
        %5098 = vmatprep.subr.mxu0 0.0
        %5099 = vmatpush1.msra.mxu0 0.0
        %5100 = vmatprep.subr.mxu0 0.0
        %5101 = vmatpush1.msra.mxu0 0.0
        %5102 = vmatprep.subr.mxu0 0.0
        %5103 = vmatpush1.msra.mxu0 0.0
        %5104 = vmatprep.subr.mxu0 0.0
        %5105 = vmatpush1.msra.mxu0 0.0
        %5106 = vmatprep.subr.mxu0 0.0
        %5107 = vmatpush1.msra.mxu0 0.0
        %5108 = vmatprep.subr.mxu0 0.0
        %5109 = vmatpush1.msra.mxu0 0.0
        %5110 = vmatprep.subr.mxu0 0.0
        %5111 = vmatpush1.msra.mxu0 0.0
        %5112 = vmatprep.subr.mxu0 0.0
        %5113 = vmatpush1.msra.mxu0 0.0
        %5114 = vmatprep.subr.mxu0 0.0
        %5115 = vmatpush1.msra.mxu0 0.0
        %5116 = vmatprep.subr.mxu0 0.0
        %5117 = vmatpush1.msra.mxu0 0.0
        %5118 = vmatprep.subr.mxu0 0.0
        %5119 = vmatpush1.msra.mxu0 0.0
        %5120 = vmatprep.subr.mxu0 0.0
        %5121 = vmatpush1.msra.mxu0 0.0
        %5122 = vmatprep.subr.mxu0 0.0
        %5123 = vmatpush1.msra.mxu0 0.0
        %5124 = vmatprep.subr.mxu0 0.0
        %5125 = vmatpush1.msra.mxu0 0.0
        %5126 = vmatprep.subr.mxu0 0.0
        %5127 = vmatpush1.msra.mxu0 0.0
        %5128 = vmatprep.subr.mxu0 0.0
        %5129 = vmatpush1.msra.mxu0 0.0
        %5130 = vmatprep.mubr.f32.mxu0 0.0
        %v5131 = vand.u32 %v5054, 4294901760
        %v5132 = vsub.f32 %v5054, %v5131
        %v5133 = vand.u32 %v5132, 4294901760
        %v5134 = vsub.f32 %v5132, %v5133
        %v5135 = vand.u32 %v5134, 4294901760
        %5136 = vmatmul.mubr.f32.gmra.mrb[0].mxu0 %v5135
        %v5137 = vpop.f32.mrb[0].mxu0
        %v5138 = vadd.f32 0.0, %v5137
        %v5139 = vpop.f32.mrb[0].mxu0
        %5140 = vmatprep.mubr.f32.mxu0 0.0
        %v5141 = vand.u32 %v5057, 4294901760
        %v5142 = vsub.f32 %v5057, %v5141
        %v5143 = vand.u32 %v5142, 4294901760
        %v5144 = vsub.f32 %v5142, %v5143
        %v5145 = vand.u32 %v5144, 4294901760
        %5146 = vmatmul.mubr.f32.gmra.mrb[0].mxu0 %v5145
        %v5147 = vpop.f32.mrb[0].mxu0
        %v5148 = vadd.f32 0.0, %v5147
        %v5149 = vpop.f32.mrb[0].mxu0
        %5150 = vmatprep.mubr.f32.mxu0 0.0
        %v5151 = vand.u32 %v5060, 4294901760
        %v5152 = vsub.f32 %v5060, %v5151
        %v5153 = vand.u32 %v5152, 4294901760
        %v5154 = vsub.f32 %v5152, %v5153
        %v5155 = vand.u32 %v5154, 4294901760
        %5156 = vmatmul.mubr.f32.gmra.mrb[0].mxu0 %v5155
        %v5157 = vpop.f32.mrb[0].mxu0
        %v5158 = vadd.f32 0.0, %v5157
        %v5159 = vpop.f32.mrb[0].mxu0
        %5160 = vmatprep.mubr.f32.mxu0 0.0
        %v5161 = vand.u32 %v5063, 4294901760
        %v5162 = vsub.f32 %v5063, %v5161
        %v5163 = vand.u32 %v5162, 4294901760
        %v5164 = vsub.f32 %v5162, %v5163
        %v5165 = vand.u32 %v5164, 4294901760
        %5166 = vmatmul.mubr.f32.gmra.mrb[0].mxu0 %v5165
        %v5167 = vpop.f32.mrb[0].mxu0
        %v5168 = vadd.f32 0.0, %v5167
        %v5169 = vpop.f32.mrb[0].mxu0
        %5170 = vdwg.mxu0
        %5171 = vmatprep.subr.mxu0 0.0
        %v5172 = vand.u32 %v5047, 4294901760
        %v5173 = vsub.f32 %v5047, %v5172
        %v5174 = vand.u32 %v5173, 4294901760
        %v5175 = vsub.f32 %v5173, %v5174
        %v5176 = vand.u32 %v5175, 4294901760
        %5177 = vmatpush1.msra.mxu0 %v5176
        %5178 = vmatprep.subr.mxu0 0.0
        %5179 = vmatpush1.msra.mxu0 0.0
        %5180 = vmatprep.subr.mxu0 0.0
        %5181 = vmatpush1.msra.mxu0 0.0
        %5182 = vmatprep.subr.mxu0 0.0
        %5183 = vmatpush1.msra.mxu0 0.0
        %5184 = vmatprep.subr.mxu0 0.0
        %5185 = vmatpush1.msra.mxu0 0.0
        %5186 = vmatprep.subr.mxu0 0.0
        %5187 = vmatpush1.msra.mxu0 0.0
        %5188 = vmatprep.subr.mxu0 0.0
        %5189 = vmatpush1.msra.mxu0 0.0
        %5190 = vmatprep.subr.mxu0 0.0
        %5191 = vmatpush1.msra.mxu0 0.0
        %5192 = vmatprep.subr.mxu0 0.0
        %5193 = vmatpush1.msra.mxu0 0.0
        %5194 = vmatprep.subr.mxu0 0.0
        %5195 = vmatpush1.msra.mxu0 0.0
        %5196 = vmatprep.subr.mxu0 0.0
        %5197 = vmatpush1.msra.mxu0 0.0
        %5198 = vmatprep.subr.mxu0 0.0
        %5199 = vmatpush1.msra.mxu0 0.0
        %5200 = vmatprep.subr.mxu0 0.0
        %5201 = vmatpush1.msra.mxu0 0.0
        %5202 = vmatprep.subr.mxu0 0.0
        %5203 = vmatpush1.msra.mxu0 0.0
        %5204 = vmatprep.subr.mxu0 0.0
        %5205 = vmatpush1.msra.mxu0 0.0
        %5206 = vmatprep.subr.mxu0 0.0
        %5207 = vmatpush1.msra.mxu0 0.0
        %5208 = vmatprep.subr.mxu0 0.0
        %5209 = vmatpush1.msra.mxu0 0.0
        %5210 = vmatprep.subr.mxu0 0.0
        %5211 = vmatpush1.msra.mxu0 0.0
        %5212 = vmatprep.subr.mxu0 0.0
        %5213 = vmatpush1.msra.mxu0 0.0
        %5214 = vmatprep.subr.mxu0 0.0
        %5215 = vmatpush1.msra.mxu0 0.0
        %5216 = vmatprep.subr.mxu0 0.0
        %5217 = vmatpush1.msra.mxu0 0.0
        %5218 = vmatprep.subr.mxu0 0.0
        %5219 = vmatpush1.msra.mxu0 0.0
        %5220 = vmatprep.subr.mxu0 0.0
        %5221 = vmatpush1.msra.mxu0 0.0
        %5222 = vmatprep.subr.mxu0 0.0
        %5223 = vmatpush1.msra.mxu0 0.0
        %5224 = vmatprep.subr.mxu0 0.0
        %5225 = vmatpush1.msra.mxu0 0.0
        %5226 = vmatprep.subr.mxu0 0.0
        %5227 = vmatpush1.msra.mxu0 0.0
        %5228 = vmatprep.subr.mxu0 0.0
        %5229 = vmatpush1.msra.mxu0 0.0
        %5230 = vmatprep.subr.mxu0 0.0
        %5231 = vmatpush1.msra.mxu0 0.0
        %5232 = vmatprep.subr.mxu0 0.0
        %5233 = vmatpush1.msra.mxu0 0.0
        %5234 = vmatprep.subr.mxu0 0.0
        %5235 = vmatpush1.msra.mxu0 0.0
        %5236 = vmatprep.subr.mxu0 0.0
        %5237 = vmatpush1.msra.mxu0 0.0
        %5238 = vmatprep.subr.mxu0 0.0
        %5239 = vmatpush1.msra.mxu0 0.0
        %5240 = vmatprep.mubr.f32.mxu0 0.0
        %v5241 = vand.u32 %v5054, 4294901760
        %5242 = vmatmul.mubr.f32.gmra.mrb[0].mxu0 %v5241
        %v5243 = vpop.f32.mrb[0].mxu0
        %v5244 = vadd.f32 %v5138, %v5243
        %v5245 = vpop.f32.mrb[0].mxu0
        %5246 = vmatprep.mubr.f32.mxu0 0.0
        %v5247 = vand.u32 %v5057, 4294901760
        %5248 = vmatmul.mubr.f32.gmra.mrb[0].mxu0 %v5247
        %v5249 = vpop.f32.mrb[0].mxu0
        %v5250 = vadd.f32 %v5148, %v5249
        %v5251 = vpop.f32.mrb[0].mxu0
        %5252 = vmatprep.mubr.f32.mxu0 0.0
        %v5253 = vand.u32 %v5060, 4294901760
        %5254 = vmatmul.mubr.f32.gmra.mrb[0].mxu0 %v5253
        %v5255 = vpop.f32.mrb[0].mxu0
        %v5256 = vadd.f32 %v5158, %v5255
        %v5257 = vpop.f32.mrb[0].mxu0
        %5258 = vmatprep.mubr.f32.mxu0 0.0
        %v5259 = vand.u32 %v5063, 4294901760
        %5260 = vmatmul.mubr.f32.gmra.mrb[0].mxu0 %v5259
        %v5261 = vpop.f32.mrb[0].mxu0
        %v5262 = vadd.f32 %v5168, %v5261
        %v5263 = vpop.f32.mrb[0].mxu0
        %5264 = vdwg.mxu0
        %5265 = vmatprep.subr.mxu0 0.0
        %v5266 = vand.u32 %v5047, 4294901760
        %v5267 = vsub.f32 %v5047, %v5266
        %5268 = vmatpush1.msra.mxu0 %v5267
        %5269 = vmatprep.subr.mxu0 0.0
        %5270 = vmatpush1.msra.mxu0 0.0
        %5271 = vmatprep.subr.mxu0 0.0
        %5272 = vmatpush1.msra.mxu0 0.0
        %5273 = vmatprep.subr.mxu0 0.0
        %5274 = vmatpush1.msra.mxu0 0.0
        %5275 = vmatprep.subr.mxu0 0.0
        %5276 = vmatpush1.msra.mxu0 0.0
        %5277 = vmatprep.subr.mxu0 0.0
        %5278 = vmatpush1.msra.mxu0 0.0
        %5279 = vmatprep.subr.mxu0 0.0
        %5280 = vmatpush1.msra.mxu0 0.0
        %5281 = vmatprep.subr.mxu0 0.0
        %5282 = vmatpush1.msra.mxu0 0.0
        %5283 = vmatprep.subr.mxu0 0.0
        %5284 = vmatpush1.msra.mxu0 0.0
        %5285 = vmatprep.subr.mxu0 0.0
        %5286 = vmatpush1.msra.mxu0 0.0
        %5287 = vmatprep.subr.mxu0 0.0
        %5288 = vmatpush1.msra.mxu0 0.0
        %5289 = vmatprep.subr.mxu0 0.0
        %5290 = vmatpush1.msra.mxu0 0.0
        %5291 = vmatprep.subr.mxu0 0.0
        %5292 = vmatpush1.msra.mxu0 0.0
        %5293 = vmatprep.subr.mxu0 0.0
        %5294 = vmatpush1.msra.mxu0 0.0
        %5295 = vmatprep.subr.mxu0 0.0
        %5296 = vmatpush1.msra.mxu0 0.0
        %5297 = vmatprep.subr.mxu0 0.0
        %5298 = vmatpush1.msra.mxu0 0.0
        %5299 = vmatprep.subr.mxu0 0.0
        %5300 = vmatpush1.msra.mxu0 0.0
        %5301 = vmatprep.subr.mxu0 0.0
        %5302 = vmatpush1.msra.mxu0 0.0
        %5303 = vmatprep.subr.mxu0 0.0
        %5304 = vmatpush1.msra.mxu0 0.0
        %5305 = vmatprep.subr.mxu0 0.0
        %5306 = vmatpush1.msra.mxu0 0.0
        %5307 = vmatprep.subr.mxu0 0.0
        %5308 = vmatpush1.msra.mxu0 0.0
        %5309 = vmatprep.subr.mxu0 0.0
        %5310 = vmatpush1.msra.mxu0 0.0
        %5311 = vmatprep.subr.mxu0 0.0
        %5312 = vmatpush1.msra.mxu0 0.0
        %5313 = vmatprep.subr.mxu0 0.0
        %5314 = vmatpush1.msra.mxu0 0.0
        %5315 = vmatprep.subr.mxu0 0.0
        %5316 = vmatpush1.msra.mxu0 0.0
        %5317 = vmatprep.subr.mxu0 0.0
        %5318 = vmatpush1.msra.mxu0 0.0
        %5319 = vmatprep.subr.mxu0 0.0
        %5320 = vmatpush1.msra.mxu0 0.0
        %5321 = vmatprep.subr.mxu0 0.0
        %5322 = vmatpush1.msra.mxu0 0.0
        %5323 = vmatprep.subr.mxu0 0.0
        %5324 = vmatpush1.msra.mxu0 0.0
        %5325 = vmatprep.subr.mxu0 0.0
        %5326 = vmatpush1.msra.mxu0 0.0
        %5327 = vmatprep.subr.mxu0 0.0
        %5328 = vmatpush1.msra.mxu0 0.0
        %5329 = vmatprep.subr.mxu0 0.0
        %5330 = vmatpush1.msra.mxu0 0.0
        %5331 = vmatprep.mubr.f32.mxu0 0.0
        %v5332 = vand.u32 %v5054, 4294901760
        %v5333 = vsub.f32 %v5054, %v5332
        %5334 = vmatmul.mubr.f32.gmra.mrb[0].mxu0 %v5333
        %v5335 = vpop.f32.mrb[0].mxu0
        %v5336 = vadd.f32 %v5244, %v5335
        %v5337 = vpop.f32.mrb[0].mxu0
        %5338 = vmatprep.mubr.f32.mxu0 0.0
        %v5339 = vand.u32 %v5057, 4294901760
        %v5340 = vsub.f32 %v5057, %v5339
        %5341 = vmatmul.mubr.f32.gmra.mrb[0].mxu0 %v5340
        %v5342 = vpop.f32.mrb[0].mxu0
        %v5343 = vadd.f32 %v5250, %v5342
        %v5344 = vpop.f32.mrb[0].mxu0
        %5345 = vmatprep.mubr.f32.mxu0 0.0
        %v5346 = vand.u32 %v5060, 4294901760
        %v5347 = vsub.f32 %v5060, %v5346
        %5348 = vmatmul.mubr.f32.gmra.mrb[0].mxu0 %v5347
        %v5349 = vpop.f32.mrb[0].mxu0
        %v5350 = vadd.f32 %v5256, %v5349
        %v5351 = vpop.f32.mrb[0].mxu0
        %5352 = vmatprep.mubr.f32.mxu0 0.0
        %v5353 = vand.u32 %v5063, 4294901760
        %v5354 = vsub.f32 %v5063, %v5353
        %5355 = vmatmul.mubr.f32.gmra.mrb[0].mxu0 %v5354
        %v5356 = vpop.f32.mrb[0].mxu0
        %v5357 = vadd.f32 %v5262, %v5356
        %v5358 = vpop.f32.mrb[0].mxu0
        %5359 = vdwg.mxu0
        %5360 = vmatprep.subr.mxu0 0.0
        %v5361 = vand.u32 %v5047, 4294901760
        %5362 = vmatpush1.msra.mxu0 %v5361
        %5363 = vmatprep.subr.mxu0 0.0
        %5364 = vmatpush1.msra.mxu0 0.0
        %5365 = vmatprep.subr.mxu0 0.0
        %5366 = vmatpush1.msra.mxu0 0.0
        %5367 = vmatprep.subr.mxu0 0.0
        %5368 = vmatpush1.msra.mxu0 0.0
        %5369 = vmatprep.subr.mxu0 0.0
        %5370 = vmatpush1.msra.mxu0 0.0
        %5371 = vmatprep.subr.mxu0 0.0
        %5372 = vmatpush1.msra.mxu0 0.0
        %5373 = vmatprep.subr.mxu0 0.0
        %5374 = vmatpush1.msra.mxu0 0.0
        %5375 = vmatprep.subr.mxu0 0.0
        %5376 = vmatpush1.msra.mxu0 0.0
        %5377 = vmatprep.subr.mxu0 0.0
        %5378 = vmatpush1.msra.mxu0 0.0
        %5379 = vmatprep.subr.mxu0 0.0
        %5380 = vmatpush1.msra.mxu0 0.0
        %5381 = vmatprep.subr.mxu0 0.0
        %5382 = vmatpush1.msra.mxu0 0.0
        %5383 = vmatprep.subr.mxu0 0.0
        %5384 = vmatpush1.msra.mxu0 0.0
        %5385 = vmatprep.subr.mxu0 0.0
        %5386 = vmatpush1.msra.mxu0 0.0
        %5387 = vmatprep.subr.mxu0 0.0
        %5388 = vmatpush1.msra.mxu0 0.0
        %5389 = vmatprep.subr.mxu0 0.0
        %5390 = vmatpush1.msra.mxu0 0.0
        %5391 = vmatprep.subr.mxu0 0.0
        %5392 = vmatpush1.msra.mxu0 0.0
        %5393 = vmatprep.subr.mxu0 0.0
        %5394 = vmatpush1.msra.mxu0 0.0
        %5395 = vmatprep.subr.mxu0 0.0
        %5396 = vmatpush1.msra.mxu0 0.0
        %5397 = vmatprep.subr.mxu0 0.0
        %5398 = vmatpush1.msra.mxu0 0.0
        %5399 = vmatprep.subr.mxu0 0.0
        %5400 = vmatpush1.msra.mxu0 0.0
        %5401 = vmatprep.subr.mxu0 0.0
        %5402 = vmatpush1.msra.mxu0 0.0
        %5403 = vmatprep.subr.mxu0 0.0
        %5404 = vmatpush1.msra.mxu0 0.0
        %5405 = vmatprep.subr.mxu0 0.0
        %5406 = vmatpush1.msra.mxu0 0.0
        %5407 = vmatprep.subr.mxu0 0.0
        %5408 = vmatpush1.msra.mxu0 0.0
        %5409 = vmatprep.subr.mxu0 0.0
        %5410 = vmatpush1.msra.mxu0 0.0
        %5411 = vmatprep.subr.mxu0 0.0
        %5412 = vmatpush1.msra.mxu0 0.0
        %5413 = vmatprep.subr.mxu0 0.0
        %5414 = vmatpush1.msra.mxu0 0.0
        %5415 = vmatprep.subr.mxu0 0.0
        %5416 = vmatpush1.msra.mxu0 0.0
        %5417 = vmatprep.subr.mxu0 0.0
        %5418 = vmatpush1.msra.mxu0 0.0
        %5419 = vmatprep.subr.mxu0 0.0
        %5420 = vmatpush1.msra.mxu0 0.0
        %5421 = vmatprep.subr.mxu0 0.0
        %5422 = vmatpush1.msra.mxu0 0.0
        %5423 = vmatprep.subr.mxu0 0.0
        %5424 = vmatpush1.msra.mxu0 0.0
        %5425 = vmatprep.mubr.f32.mxu0 0.0
        %v5426 = vand.u32 %v5054, 4294901760
        %v5427 = vsub.f32 %v5054, %v5426
        %v5428 = vand.u32 %v5427, 4294901760
        %5429 = vmatmul.mubr.f32.gmra.mrb[0].mxu0 %v5428
        %v5430 = vpop.f32.mrb[0].mxu0
        %v5431 = vadd.f32 %v5336, %v5430
        %v5432 = vpop.f32.mrb[0].mxu0
        %5433 = vmatprep.mubr.f32.mxu0 0.0
        %v5434 = vand.u32 %v5057, 4294901760
        %v5435 = vsub.f32 %v5057, %v5434
        %v5436 = vand.u32 %v5435, 4294901760
        %5437 = vmatmul.mubr.f32.gmra.mrb[0].mxu0 %v5436
        %v5438 = vpop.f32.mrb[0].mxu0
        %v5439 = vadd.f32 %v5343, %v5438
        %v5440 = vpop.f32.mrb[0].mxu0
        %5441 = vmatprep.mubr.f32.mxu0 0.0
        %v5442 = vand.u32 %v5060, 4294901760
        %v5443 = vsub.f32 %v5060, %v5442
        %v5444 = vand.u32 %v5443, 4294901760
        %5445 = vmatmul.mubr.f32.gmra.mrb[0].mxu0 %v5444
        %v5446 = vpop.f32.mrb[0].mxu0
        %v5447 = vadd.f32 %v5350, %v5446
        %v5448 = vpop.f32.mrb[0].mxu0
        %5449 = vmatprep.mubr.f32.mxu0 0.0
        %v5450 = vand.u32 %v5063, 4294901760
        %v5451 = vsub.f32 %v5063, %v5450
        %v5452 = vand.u32 %v5451, 4294901760
        %5453 = vmatmul.mubr.f32.gmra.mrb[0].mxu0 %v5452
        %v5454 = vpop.f32.mrb[0].mxu0
        %v5455 = vadd.f32 %v5357, %v5454
        %v5456 = vpop.f32.mrb[0].mxu0
        %5457 = vdwg.mxu0
        %5458 = vmatprep.subr.mxu0 0.0
        %v5459 = vand.u32 %v5047, 4294901760
        %v5460 = vsub.f32 %v5047, %v5459
        %v5461 = vand.u32 %v5460, 4294901760
        %5462 = vmatpush1.msra.mxu0 %v5461
        %5463 = vmatprep.subr.mxu0 0.0
        %5464 = vmatpush1.msra.mxu0 0.0
        %5465 = vmatprep.subr.mxu0 0.0
        %5466 = vmatpush1.msra.mxu0 0.0
        %5467 = vmatprep.subr.mxu0 0.0
        %5468 = vmatpush1.msra.mxu0 0.0
        %5469 = vmatprep.subr.mxu0 0.0
        %5470 = vmatpush1.msra.mxu0 0.0
        %5471 = vmatprep.subr.mxu0 0.0
        %5472 = vmatpush1.msra.mxu0 0.0
        %5473 = vmatprep.subr.mxu0 0.0
        %5474 = vmatpush1.msra.mxu0 0.0
        %5475 = vmatprep.subr.mxu0 0.0
        %5476 = vmatpush1.msra.mxu0 0.0
        %5477 = vmatprep.subr.mxu0 0.0
        %5478 = vmatpush1.msra.mxu0 0.0
        %5479 = vmatprep.subr.mxu0 0.0
        %5480 = vmatpush1.msra.mxu0 0.0
        %5481 = vmatprep.subr.mxu0 0.0
        %5482 = vmatpush1.msra.mxu0 0.0
        %5483 = vmatprep.subr.mxu0 0.0
        %5484 = vmatpush1.msra.mxu0 0.0
        %5485 = vmatprep.subr.mxu0 0.0
        %5486 = vmatpush1.msra.mxu0 0.0
        %5487 = vmatprep.subr.mxu0 0.0
        %5488 = vmatpush1.msra.mxu0 0.0
        %5489 = vmatprep.subr.mxu0 0.0
        %5490 = vmatpush1.msra.mxu0 0.0
        %5491 = vmatprep.subr.mxu0 0.0
        %5492 = vmatpush1.msra.mxu0 0.0
        %5493 = vmatprep.subr.mxu0 0.0
        %5494 = vmatpush1.msra.mxu0 0.0
        %5495 = vmatprep.subr.mxu0 0.0
        %5496 = vmatpush1.msra.mxu0 0.0
        %5497 = vmatprep.subr.mxu0 0.0
        %5498 = vmatpush1.msra.mxu0 0.0
        %5499 = vmatprep.subr.mxu0 0.0
        %5500 = vmatpush1.msra.mxu0 0.0
        %5501 = vmatprep.subr.mxu0 0.0
        %5502 = vmatpush1.msra.mxu0 0.0
        %5503 = vmatprep.subr.mxu0 0.0
        %5504 = vmatpush1.msra.mxu0 0.0
        %5505 = vmatprep.subr.mxu0 0.0
        %5506 = vmatpush1.msra.mxu0 0.0
        %5507 = vmatprep.subr.mxu0 0.0
        %5508 = vmatpush1.msra.mxu0 0.0
        %5509 = vmatprep.subr.mxu0 0.0
        %5510 = vmatpush1.msra.mxu0 0.0
        %5511 = vmatprep.subr.mxu0 0.0
        %5512 = vmatpush1.msra.mxu0 0.0
        %5513 = vmatprep.subr.mxu0 0.0
        %5514 = vmatpush1.msra.mxu0 0.0
        %5515 = vmatprep.subr.mxu0 0.0
        %5516 = vmatpush1.msra.mxu0 0.0
        %5517 = vmatprep.subr.mxu0 0.0
        %5518 = vmatpush1.msra.mxu0 0.0
        %5519 = vmatprep.subr.mxu0 0.0
        %5520 = vmatpush1.msra.mxu0 0.0
        %5521 = vmatprep.subr.mxu0 0.0
        %5522 = vmatpush1.msra.mxu0 0.0
        %5523 = vmatprep.subr.mxu0 0.0
        %5524 = vmatpush1.msra.mxu0 0.0
        %5525 = vmatprep.mubr.f32.mxu0 0.0
        %v5526 = vand.u32 %v5054, 4294901760
        %5527 = vmatmul.mubr.f32.gmra.mrb[0].mxu0 %v5526
        %v5528 = vpop.f32.mrb[0].mxu0
        %v5529 = vadd.f32 %v5431, %v5528
        %v5530 = vpop.f32.mrb[0].mxu0
        %5531 = vmatprep.mubr.f32.mxu0 0.0
        %v5532 = vand.u32 %v5057, 4294901760
        %5533 = vmatmul.mubr.f32.gmra.mrb[0].mxu0 %v5532
        %v5534 = vpop.f32.mrb[0].mxu0
        %v5535 = vadd.f32 %v5439, %v5534
        %v5536 = vpop.f32.mrb[0].mxu0
        %5537 = vmatprep.mubr.f32.mxu0 0.0
        %v5538 = vand.u32 %v5060, 4294901760
        %5539 = vmatmul.mubr.f32.gmra.mrb[0].mxu0 %v5538
        %v5540 = vpop.f32.mrb[0].mxu0
        %v5541 = vadd.f32 %v5447, %v5540
        %v5542 = vpop.f32.mrb[0].mxu0
        %5543 = vmatprep.mubr.f32.mxu0 0.0
        %v5544 = vand.u32 %v5063, 4294901760
        %5545 = vmatmul.mubr.f32.gmra.mrb[0].mxu0 %v5544
        %v5546 = vpop.f32.mrb[0].mxu0
        %v5547 = vadd.f32 %v5455, %v5546
        %v5548 = vpop.f32.mrb[0].mxu0
        %5549 = vdwg.mxu0
        %5550 = vmatprep.subr.mxu0 0.0
        %v5551 = vand.u32 %v5047, 4294901760
        %5552 = vmatpush1.msra.mxu0 %v5551
        %5553 = vmatprep.subr.mxu0 0.0
        %5554 = vmatpush1.msra.mxu0 0.0
        %5555 = vmatprep.subr.mxu0 0.0
        %5556 = vmatpush1.msra.mxu0 0.0
        %5557 = vmatprep.subr.mxu0 0.0
        %5558 = vmatpush1.msra.mxu0 0.0
        %5559 = vmatprep.subr.mxu0 0.0
        %5560 = vmatpush1.msra.mxu0 0.0
        %5561 = vmatprep.subr.mxu0 0.0
        %5562 = vmatpush1.msra.mxu0 0.0
        %5563 = vmatprep.subr.mxu0 0.0
        %5564 = vmatpush1.msra.mxu0 0.0
        %5565 = vmatprep.subr.mxu0 0.0
        %5566 = vmatpush1.msra.mxu0 0.0
        %5567 = vmatprep.subr.mxu0 0.0
        %5568 = vmatpush1.msra.mxu0 0.0
        %5569 = vmatprep.subr.mxu0 0.0
        %5570 = vmatpush1.msra.mxu0 0.0
        %5571 = vmatprep.subr.mxu0 0.0
        %5572 = vmatpush1.msra.mxu0 0.0
        %5573 = vmatprep.subr.mxu0 0.0
        %5574 = vmatpush1.msra.mxu0 0.0
        %5575 = vmatprep.subr.mxu0 0.0
        %5576 = vmatpush1.msra.mxu0 0.0
        %5577 = vmatprep.subr.mxu0 0.0
        %5578 = vmatpush1.msra.mxu0 0.0
        %5579 = vmatprep.subr.mxu0 0.0
        %5580 = vmatpush1.msra.mxu0 0.0
        %5581 = vmatprep.subr.mxu0 0.0
        %5582 = vmatpush1.msra.mxu0 0.0
        %5583 = vmatprep.subr.mxu0 0.0
        %5584 = vmatpush1.msra.mxu0 0.0
        %5585 = vmatprep.subr.mxu0 0.0
        %5586 = vmatpush1.msra.mxu0 0.0
        %5587 = vmatprep.subr.mxu0 0.0
        %5588 = vmatpush1.msra.mxu0 0.0
        %5589 = vmatprep.subr.mxu0 0.0
        %5590 = vmatpush1.msra.mxu0 0.0
        %5591 = vmatprep.subr.mxu0 0.0
        %5592 = vmatpush1.msra.mxu0 0.0
        %5593 = vmatprep.subr.mxu0 0.0
        %5594 = vmatpush1.msra.mxu0 0.0
        %5595 = vmatprep.subr.mxu0 0.0
        %5596 = vmatpush1.msra.mxu0 0.0
        %5597 = vmatprep.subr.mxu0 0.0
        %5598 = vmatpush1.msra.mxu0 0.0
        %5599 = vmatprep.subr.mxu0 0.0
        %5600 = vmatpush1.msra.mxu0 0.0
        %5601 = vmatprep.subr.mxu0 0.0
        %5602 = vmatpush1.msra.mxu0 0.0
        %5603 = vmatprep.subr.mxu0 0.0
        %5604 = vmatpush1.msra.mxu0 0.0
        %5605 = vmatprep.subr.mxu0 0.0
        %5606 = vmatpush1.msra.mxu0 0.0
        %5607 = vmatprep.subr.mxu0 0.0
        %5608 = vmatpush1.msra.mxu0 0.0
        %5609 = vmatprep.subr.mxu0 0.0
        %5610 = vmatpush1.msra.mxu0 0.0
        %5611 = vmatprep.subr.mxu0 0.0
        %5612 = vmatpush1.msra.mxu0 0.0
        %5613 = vmatprep.subr.mxu0 0.0
        %5614 = vmatpush1.msra.mxu0 0.0
        %5615 = vmatprep.mubr.f32.mxu0 0.0
        %v5616 = vand.u32 %v5054, 4294901760
        %5617 = vmatmul.mubr.f32.gmra.mrb[0].mxu0 %v5616
        %v5618 = vpop.f32.mrb[0].mxu0
        %v5619 = vadd.f32 %v5529, %v5618
        %v5620 = vpop.f32.mrb[0].mxu0
        %5621 = vmatprep.mubr.f32.mxu0 0.0
        %v5622 = vand.u32 %v5057, 4294901760
        %5623 = vmatmul.mubr.f32.gmra.mrb[0].mxu0 %v5622
        %v5624 = vpop.f32.mrb[0].mxu0
        %v5625 = vadd.f32 %v5535, %v5624
        %v5626 = vpop.f32.mrb[0].mxu0
        %5627 = vmatprep.mubr.f32.mxu0 0.0
        %v5628 = vand.u32 %v5060, 4294901760
        %5629 = vmatmul.mubr.f32.gmra.mrb[0].mxu0 %v5628
        %v5630 = vpop.f32.mrb[0].mxu0
        %v5631 = vadd.f32 %v5541, %v5630
        %v5632 = vpop.f32.mrb[0].mxu0
        %5633 = vmatprep.mubr.f32.mxu0 0.0
        %v5634 = vand.u32 %v5063, 4294901760
        %5635 = vmatmul.mubr.f32.gmra.mrb[0].mxu0 %v5634
        %v5636 = vpop.f32.mrb[0].mxu0
        %v5637 = vadd.f32 %v5547, %v5636
        %v5638 = vpop.f32.mrb[0].mxu0
        %5639 = vdwg.mxu0
        %v5640 = vadd.f32 %v5040, %v5619
        %v5641 = vadd.f32 %v5041, %v5625
        %v5642 = vadd.f32 %v5042, %v5631
        %v5643 = vadd.f32 %v5043, %v5637
        %vm5644 = vcmp.ge.f32.partialorder %v5640, 0.0
        %vm5645 = vcmp.ge.f32.partialorder %v5641, 0.0
        %vm5646 = vcmp.ge.f32.partialorder %v5642, 0.0
        %vm5647 = vcmp.ge.f32.partialorder %v5643, 0.0
        %v5648 = vmul.f32 %v5640, 0.2
        %v5649 = vmul.f32 %v5641, 0.2
        %v5650 = vmul.f32 %v5642, 0.2
        %v5651 = vmul.f32 %v5643, 0.2
        %v5652 = vsel %vm5644, %v5640, %v5648
        %v5653 = vsel %vm5645, %v5641, %v5649
        %v5654 = vsel %vm5646, %v5642, %v5650
        %v5655 = vsel %vm5647, %v5643, %v5651
        %5656 = vst [vmem:[%s206] sm:$0xff] %v5652
        %5657 = vst [vmem:[%s206 + $0x8] sm:$0xff] %v5653
        %5658 = vst [vmem:[%s206 + $0x10] sm:$0xff] %v5654
        %5659 = vst [vmem:[%s206 + $0x18] sm:$0xff] %v5655
        %s5660 = sand.u32 %s113, 1
        %s5661 = sand.u32 %s113, 1
        %s5662 = smul.addr %s5661, 32
        %s5663 = scalar_lea.vmem [#allocation2], %s5662
        // Predicated region
        $region33: #{upscale_block.1} parent=31 // pred_check
          %p5664 = pneg %p123
        $region34: #{upscale_block.1} parent=31 // pred_check_branch
          %5666 = sbr.rel (%p5664) target = $region36
        $region35: #{upscale_block.1} parent=31 // pred_region
          %s5667 = smul.addr %s18, 8
          %s5668 = sadd.s32 %s19, %s5667
          %s5669 = smul.addr %s5668, 8
          %s5670 = scalar_lea.vmem %s3, %s5669
          // Predicated region
          $region37: #{upscale_block.1} parent=35 // pred_check
            _
          $region38: #{upscale_block.1} parent=35 // pred_check_branch
            %5672 = sbr.rel (0) target = $region40
          $region39: #{upscale_block.1} parent=35 // pred_region
            // Predicated region
            $region41: #{upscale_block.1} parent=39 // pred_check
              _
            $region42: #{upscale_block.1} parent=39 // pred_check_branch
              %5674 = sbr.rel (0) target = $region44
            $region43: #{upscale_block.1} parent=39 // pred_region
              // Predicated region
              $region56: #{upscale_block.1} parent=43 // pred_check
                _
              $region57: #{upscale_block.1} parent=43 // pred_check_branch
                %5695 = sbr.rel (0) target = $region59
              $region58: #{upscale_block.1} parent=43 // pred_region
                loop: start=0, step=1, limit=1
                $region60: #{upscale_block.1} parent=58 // loop_pre_header
                  _
                $region61: #{upscale_block.1} parent=58 // loop_header
                  %s5697 = sphi 0, %s5701
                  %p5698 = scmp.ge.s32.totalorder %s5697, 1
                  %s5702 = sphi %s5663, %s5663
                  %s5703 = sphi %s5670, %s5670
                $region62: #{upscale_block.1} parent=58 // loop_header_branch
                  %5700 = sbr.rel (%p5698) target = $region66
                $region63: #{upscale_block.1} parent=58 // loop_body
                  %v5704 = vld [vmem:[%s5702] sm:$0xff]
                  %5705 = vst [vmem:[%s5703] sm:$0xff] %v5704
                  %v5706 = vld [vmem:[%s5702 + $0x8] sm:$0xff]
                  %5707 = vst [vmem:[%s5703 + $0x10] sm:$0xff] %v5706
                  %v5708 = vld [vmem:[%s5702 + $0x10] sm:$0xff]
                  %5709 = vst [vmem:[%s5703 + $0x20] sm:$0xff] %v5708
                  %v5710 = vld [vmem:[%s5702 + $0x18] sm:$0xff]
                  %5711 = vst [vmem:[%s5703 + $0x30] sm:$0xff] %v5710
                $region64: #{upscale_block.1} parent=58 // loop_footer
                  %s5701 = sadd.s32 1, %s5697
                $region65: #{upscale_block.1} parent=58 // loop_footer_branch
                  %5696 = sbr.rel target = $region61
                $region66: #{upscale_block.1} parent=58 // loop_exit
                  _
              $region59: #{upscale_block.1} parent=43 // pred_fallthru
                _
              // Predicated region
              $region67: #{upscale_block.1} parent=43 // pred_check
                _
              $region68: #{upscale_block.1} parent=43 // pred_check_branch
                %5713 = sbr.rel target = $region70
              $region69: #{upscale_block.1} parent=43 // pred_region
                _
              $region70: #{upscale_block.1} parent=43 // pred_fallthru
                _
            $region44: #{upscale_block.1} parent=39 // pred_fallthru
              _
            // Predicated region
            $region45: #{upscale_block.1} parent=39 // pred_check
              _
            $region46: #{upscale_block.1} parent=39 // pred_check_branch
              %5676 = sbr.rel target = $region48
            $region47: #{upscale_block.1} parent=39 // pred_region
              loop: start=0, step=1, limit=1
              $region49: #{upscale_block.1} parent=47 // loop_pre_header
                _
              $region50: #{upscale_block.1} parent=47 // loop_header
                %s5679 = sphi 0, %s5683
                %p5680 = scmp.ge.s32.totalorder %s5679, 1
                %s5684 = sphi %s5663, %s5663
                %s5685 = sphi %s5670, %s5670
              $region51: #{upscale_block.1} parent=47 // loop_header_branch
                %5682 = sbr.rel (%p5680) target = $region55
              $region52: #{upscale_block.1} parent=47 // loop_body
                %v5686 = vld [vmem:[%s5684] sm:$0xff]
                %5687 = vst [vmem:[%s5685] sm:$0xff] %v5686
                %v5688 = vld [vmem:[%s5684 + $0x8] sm:$0xff]
                %5689 = vst [vmem:[%s5685 + $0x10] sm:$0xff] %v5688
                %v5690 = vld [vmem:[%s5684 + $0x10] sm:$0xff]
                %5691 = vst [vmem:[%s5685 + $0x20] sm:$0xff] %v5690
                %v5692 = vld [vmem:[%s5684 + $0x18] sm:$0xff]
                %5693 = vst [vmem:[%s5685 + $0x30] sm:$0xff] %v5692
              $region53: #{upscale_block.1} parent=47 // loop_footer
                %s5683 = sadd.s32 1, %s5679
              $region54: #{upscale_block.1} parent=47 // loop_footer_branch
                %5678 = sbr.rel target = $region50
              $region55: #{upscale_block.1} parent=47 // loop_exit
                _
            $region48: #{upscale_block.1} parent=39 // pred_fallthru
              _
          $region40: #{upscale_block.1} parent=35 // pred_fallthru
            _
          %5714 = vnop
        $region36: #{upscale_block.1} parent=31 // pred_fallthru
          _
      $region32: #{upscale_block.1} parent=5 // pred_fallthru
        _
      %p5715 = scmp.le.s32.totalorder 2, %s9
      // Predicated region
      $region71: #{upscale_block.1} parent=5 // pred_check
        %p5716 = pneg %p5715
      $region72: #{upscale_block.1} parent=5 // pred_check_branch
        %5718 = sbr.rel (%p5716) target = $region74
      $region73: #{upscale_block.1} parent=5 // pred_region
        %s5719 = ssub.s32 %s9, 2
        // Predicated region
        $region75: #{upscale_block.1} parent=73 // pred_check
          %p5720 = pneg %p129
        $region76: #{upscale_block.1} parent=73 // pred_check_branch
          %5722 = sbr.rel (%p5720) target = $region78
        $region77: #{upscale_block.1} parent=73 // pred_region
          %s5723 = sand.u32 %s114, 1
          %s5724 = sand.u32 %s114, 1
          %s5725 = smul.addr %s5724, 32
          %s5726 = scalar_lea.vmem [#allocation2], %s5725
        $region78: #{upscale_block.1} parent=73 // pred_fallthru
          _
      $region74: #{upscale_block.1} parent=5 // pred_fallthru
        _
    $region6: #{upscale_block.1} parent=1 // loop_footer
      %s13 = sadd.s32 1, %s9
    $region7: #{upscale_block.1} parent=1 // loop_footer_branch
      %8 = sbr.rel target = $region3
    $region8: #{upscale_block.1} parent=1 // loop_exit
      _

</llo_original>
